<compile_context>
chip_gen: v7x
topology: tpu7x:2x2x1
jax: 0.10.0
libtpu: 0.0.40
codegen_flags: <defaults>
</compile_context>

<pallas_src>
import functools

import jax
import jax.numpy as jnp
import numpy as np
from jax import lax
from jax.experimental import pallas as pl
from jax.experimental.pallas import tpu as pltpu

_LANE = 128


# --------------------------------------------------------------------------
# MLP tail: the first Linear's pre-bias output is already formed (possibly as
# a sum of split-weight matmuls); apply bias, hidden ReLU+Linear layers, the
# final Linear, and optional LayerNorm.  Matches Custom_mlp semantics.
# --------------------------------------------------------------------------
def _mlp_tail(z0, w_ref, w_off, vecs, num_linear, layernorm):
    h = z0 + vecs[0:1, :]                               # first Linear output
    for i in range(1, num_linear):
        h = jnp.maximum(h, 0.0)                         # ReLU after previous layer
        h = jnp.dot(h, w_ref[w_off + i - 1],
                    preferred_element_type=jnp.float32) + vecs[i:i + 1, :]
    if layernorm:
        gamma = vecs[num_linear:num_linear + 1, :]
        beta = vecs[num_linear + 1:num_linear + 2, :]
        mu = jnp.mean(h, axis=-1, keepdims=True)
        var = jnp.mean(h * h, axis=-1, keepdims=True) - mu * mu   # one-pass variance
        h = (h - mu) * lax.rsqrt(var + 1e-5) * gamma + beta
    return h


# --------------------------------------------------------------------------
# Fused EncodeProcessDecode kernel -- one grid iteration == one GNN_block step.
# --------------------------------------------------------------------------
def _epd_kernel(x_ref, e_ref, idx_ref, tgt_row_ref,
                encN_w0, encN_wh, encN_v,
                encE_w0, encE_wh, encE_v,
                msg_w, msg_v, upd_w, upd_v,
                dec_w0, dec_wh, dec_v,
                x_out_ref, e_out_ref,
                hx_s, he_s, oh_src, oh_tgt, oh_sct,
                *, num_linear):
    f32, bf16 = jnp.float32, jnp.bfloat16
    N = x_ref.shape[0]
    E = e_ref.shape[0]
    s = pl.program_id(0)

    # ---- first step: encoders + one-hot gather/scatter matrices (reused later) --
    @pl.when(s == 0)
    def _encode():
        hx_s[...] = _mlp_tail(
            jnp.dot(x_ref[...], encN_w0[...], preferred_element_type=f32),
            encN_wh, 0, encN_v[...], num_linear, True)
        he_s[...] = _mlp_tail(
            jnp.dot(e_ref[...], encE_w0[...], preferred_element_type=f32),
            encE_wh, 0, encE_v[...], num_linear, True)
        idx = idx_ref[...]                                    # (E, 2) int32
        col = lax.broadcasted_iota(jnp.int32, (E, N), 1)
        oh_src[...] = (col == idx[:, 0:1]).astype(bf16)       # row e -> src node (x_j)
        oh_tgt[...] = (col == idx[:, 1:2]).astype(bf16)       # row e -> tgt node (x_i)
        row = lax.broadcasted_iota(jnp.int32, (N, E), 0)
        oh_sct[...] = (row == tgt_row_ref[...]).astype(bf16)  # scatter-add onto targets

    # ---- message-passing step s (GNN_block) -------------------------------------
    hx = hx_s[...]
    he = he_s[...]

    # Fold the message MLP's first-layer weights into the gather: project node
    # features once per step ((N,L)@(L,L)), then gather the projections in bf16.
    hx_wi = jnp.dot(hx, msg_w[0], preferred_element_type=f32).astype(bf16)  # x_i path
    hx_wj = jnp.dot(hx, msg_w[1], preferred_element_type=f32).astype(bf16)  # x_j path
    z_e = (jnp.dot(oh_tgt[...], hx_wi, preferred_element_type=f32)
           + jnp.dot(oh_src[...], hx_wj, preferred_element_type=f32)
           + jnp.dot(he, msg_w[2], preferred_element_type=f32))
    new_e = _mlp_tail(z_e, msg_w, 3, msg_v[...], num_linear, True)          # (E, L)

    # Aggregation: scatter-add new edge features onto their target nodes (bf16 MXU).
    agg = jnp.dot(oh_sct[...], new_e.astype(bf16), preferred_element_type=f32)  # (N, L)

    # update_func(cat([x, aggr_features])) via split first-layer weights.
    z_n = (jnp.dot(hx, upd_w[0], preferred_element_type=f32)
           + jnp.dot(agg, upd_w[1], preferred_element_type=f32))
    new_x = _mlp_tail(z_n, upd_w, 2, upd_v[...], num_linear, True)          # (N, L)

    # Residual connections (GNN_block).
    hx_s[...] = new_x + hx
    he_s[...] = new_e + he

    # ---- last step: decoder (node features only, no LayerNorm) ------------------
    @pl.when(s == pl.num_programs(0) - 1)
    def _decode():
        out = _mlp_tail(
            jnp.dot(hx_s[...], dec_w0[...], preferred_element_type=f32),
            dec_wh, 0, dec_v[...], num_linear, False)
        x_out_ref[...] = out          # lane-dense (width padded to multiple of 128)
        e_out_ref[...] = he_s[...]


# --------------------------------------------------------------------------
# Parameter packing helpers
# --------------------------------------------------------------------------
def _pack_vecs(lin, ln):
    """Stack biases (and optional LayerNorm gamma/beta) into one (k, width) array."""
    vecs = [b for (_, b) in lin]
    if ln is not None:
        vecs += [ln[0], ln[1]]
    return jnp.stack(vecs, axis=0)


def _pack_tail_weights(lin):
    """Stack hidden + final weights (all the same square shape) into (k, w, w)."""
    return jnp.stack([w for (w, _) in lin[1:]], axis=0)


def _pack_split_first(lin, num_splits):
    """Split the first weight (num_splits*L, L) into L-blocks, stack with the rest."""
    w0 = lin[0][0]
    width = w0.shape[1]
    blocks = [w0[i * width:(i + 1) * width] for i in range(num_splits)]
    return jnp.stack(blocks + [w for (w, _) in lin[1:]], axis=0)


def _pad_mlp(lin, width):
    """Zero-pad an MLP's widths up to `width`.  Exact for a ReLU MLP w/o LayerNorm."""
    padded = []
    for i, (w, b) in enumerate(lin):
        rows = w.shape[0] if i == 0 else width
        w_p = jnp.zeros((rows, width), jnp.float32).at[:w.shape[0], :w.shape[1]].set(w)
        b_p = jnp.zeros((width,), jnp.float32).at[:b.shape[0]].set(b)
        padded.append((w_p, b_p))
    return padded


def _vmem_limit_bytes():
    # Default scoped VMEM (16 MiB v5e / 32 MiB v6e, v7x) is far below physical.
    # Raise it while staying under per-core physical VMEM (64 MiB v7x, 128 MiB v5e/v6e).
    try:
        cap = int(pltpu.get_tpu_info().vmem_capacity_bytes)
    except Exception:
        cap = 64 * 1024 * 1024
    return max(32 * 1024 * 1024, min(int(cap * 0.85), 110 * 1024 * 1024))


# --------------------------------------------------------------------------
# Full forward (single pallas_call, grid = message-passing steps)
# --------------------------------------------------------------------------
def epd_forward(params, x, edge_attr, edge_index):
    N = x.shape[0]
    E = edge_attr.shape[0]
    L = params["enc_node"][0][-1][0].shape[1]
    O = params["dec"][0][-1][0].shape[1]
    num_linear = len(params["enc_node"][0])      # = mlp_num_hidden_layers + 1 (>= 2)
    num_steps = len(params["steps"])
    assert num_steps >= 1, "kernel assumes >= 1 message-passing step"

    o_pad = ((O + _LANE - 1) // _LANE) * _LANE   # lane-dense decoder / x_out store

    src = edge_index[0].astype(jnp.int32)
    tgt = edge_index[1].astype(jnp.int32)
    idx = jnp.stack([src, tgt], axis=1)          # (E, 2): one lane-padded ref, not two
    tgt_row = tgt.reshape(1, E)

    encN_lin, encN_ln = params["enc_node"]
    encE_lin, encE_ln = params["enc_edge"]
    dec_lin_p = _pad_mlp(params["dec"][0], o_pad)

    # Stack per-step weights so the grid axis can stream them (double-buffered).
    msg_w = jnp.stack([_pack_split_first(m[0], 3) for m, _ in params["steps"]], axis=0)
    msg_v = jnp.stack([_pack_vecs(m[0], m[1]) for m, _ in params["steps"]], axis=0)
    upd_w = jnp.stack([_pack_split_first(u[0], 2) for _, u in params["steps"]], axis=0)
    upd_v = jnp.stack([_pack_vecs(u[0], u[1]) for _, u in params["steps"]], axis=0)

    const_inputs = [
        x, edge_attr, idx, tgt_row,
        encN_lin[0][0], _pack_tail_weights(encN_lin), _pack_vecs(encN_lin, encN_ln),
        encE_lin[0][0], _pack_tail_weights(encE_lin), _pack_vecs(encE_lin, encE_ln),
    ]
    step_inputs = [msg_w, msg_v, upd_w, upd_v]
    dec_inputs = [dec_lin_p[0][0], _pack_tail_weights(dec_lin_p),
                  _pack_vecs(dec_lin_p, None)]
    inputs = const_inputs + step_inputs + dec_inputs

    def const_spec(a):
        nd = a.ndim
        return pl.BlockSpec(a.shape, lambda s, _nd=nd: (0,) * _nd)

    def step_spec(a):
        tail = a.shape[1:]
        nd = len(tail)
        return pl.BlockSpec((None,) + tail, lambda s, _nd=nd: (s,) + (0,) * _nd)

    in_specs = ([const_spec(a) for a in const_inputs]
                + [step_spec(a) for a in step_inputs]
                + [const_spec(a) for a in dec_inputs])

    grid_spec = pltpu.PrefetchScalarGridSpec(
        num_scalar_prefetch=0,
        grid=(num_steps,),
        in_specs=in_specs,
        out_specs=(pl.BlockSpec((N, o_pad), lambda s: (0, 0)),
                   pl.BlockSpec((E, L), lambda s: (0, 0))),
        scratch_shapes=[
            pltpu.VMEM((N, L), jnp.float32),    # hx (latent node features)
            pltpu.VMEM((E, L), jnp.float32),    # he (latent edge features)
            pltpu.VMEM((E, N), jnp.bfloat16),   # one-hot gather: source (x_j)
            pltpu.VMEM((E, N), jnp.bfloat16),   # one-hot gather: target (x_i)
            pltpu.VMEM((N, E), jnp.bfloat16),   # one-hot scatter-add onto targets
        ],
    )

    out_x_pad, out_e = pl.pallas_call(
        functools.partial(_epd_kernel, num_linear=num_linear),
        out_shape=(jax.ShapeDtypeStruct((N, o_pad), jnp.float32),
                   jax.ShapeDtypeStruct((E, L), jnp.float32)),
        grid_spec=grid_spec,
        compiler_params=pltpu.CompilerParams(
            dimension_semantics=("arbitrary",),
            vmem_limit_bytes=_vmem_limit_bytes(),
        ),
    )(*inputs)
    return out_x_pad[:, :O], out_e


# --------------------------------------------------------------------------
# Parameter init (Custom_mlp semantics: nn.Linear default init)
# --------------------------------------------------------------------------
def init_mlp(key, in_size, hidden_size, num_hidden_layers, layernorm):
    dims = [in_size] + [hidden_size] * (num_hidden_layers + 1)
    lin = []
    for i in range(num_hidden_layers + 1):
        key, kw, kb = jax.random.split(key, 3)
        bound = 1.0 / np.sqrt(dims[i])
        w = jax.random.uniform(kw, (dims[i], dims[i + 1]), jnp.float32, -bound, bound)
        b = jax.random.uniform(kb, (dims[i + 1],), jnp.float32, -bound, bound)
        lin.append((w, b))
    ln = None
    if layernorm:
        ln = (jnp.ones((hidden_size,), jnp.float32),
              jnp.zeros((hidden_size,), jnp.float32))
    return (lin, ln), key


def init_params(key, input_size, latent_size, H, num_steps, output_size):
    assert H >= 1
    params = {}
    params["enc_node"], key = init_mlp(key, input_size, latent_size, H, True)
    params["enc_edge"], key = init_mlp(key, input_size, latent_size, H, True)
    steps = []
    for _ in range(num_steps):
        msg, key = init_mlp(key, 3 * latent_size, latent_size, H, True)
        upd, key = init_mlp(key, 2 * latent_size, latent_size, H, True)
        steps.append((msg, upd))
    params["steps"] = steps
    params["dec"], key = init_mlp(key, latent_size, output_size, H, False)
    return params, key


# --------------------------------------------------------------------------
# Pure-JAX reference (same math, no Pallas) for verification
# --------------------------------------------------------------------------
def _ref_mlp(h, lin, ln):
    n = len(lin)
    for i, (w, b) in enumerate(lin):
        h = h @ w + b
        if i < n - 1:
            h = jnp.maximum(h, 0.0)
    if ln is not None:
        gamma, beta = ln
        mu = jnp.mean(h, axis=-1, keepdims=True)
        var = jnp.mean((h - mu) ** 2, axis=-1, keepdims=True)
        h = (h - mu) * lax.rsqrt(var + 1e-5) * gamma + beta
    return h


def ref_forward(params, x, edge_attr, edge_index):
    src, tgt = edge_index[0], edge_index[1]
    N = x.shape[0]
    hx = _ref_mlp(x, *params["enc_node"])
    he = _ref_mlp(edge_attr, *params["enc_edge"])
    for (msg_lin, msg_ln), (upd_lin, upd_ln) in params["steps"]:
        x_i, x_j = hx[tgt], hx[src]
        new_e = _ref_mlp(jnp.concatenate([x_i, x_j, he], 1), msg_lin, msg_ln)
        agg = jnp.zeros((N, new_e.shape[1]), new_e.dtype).at[tgt].add(new_e)
        new_x = _ref_mlp(jnp.concatenate([hx, agg], 1), upd_lin, upd_ln)
        hx, he = new_x + hx, new_e + he
    out_x = _ref_mlp(hx, *params["dec"])
    return out_x, he


# --------------------------------------------------------------------------
if __name__ == "__main__":
    input_size = 16
    latent_size = 32     # NOTE: for production use a lane-dense latent (multiple of 128)
    mlp_num_hidden_layers = 2
    num_message_passing_steps = 2
    output_size = 8
    N, E = 16, 32        # nodes, edges

    key = jax.random.PRNGKey(0)
    params, key = init_params(
        key, input_size, latent_size, mlp_num_hidden_layers,
        num_message_passing_steps, output_size,
    )
    key, kx, ke, ks, kt = jax.random.split(key, 5)
    x = jax.random.normal(kx, (N, input_size), jnp.float32)
    edge_attr = jax.random.normal(ke, (E, input_size), jnp.float32)
    edge_index = jnp.stack(
        [
            jax.random.randint(ks, (E,), 0, N, jnp.int32),  # source (x_j)
            jax.random.randint(kt, (E,), 0, N, jnp.int32),  # target (x_i)
        ],
        axis=0,
    )

    fwd = jax.jit(epd_forward)
    out_x, out_e = fwd(params, x, edge_attr, edge_index)
    jax.block_until_ready(out_x)
    jax.block_until_ready(out_e)

    ref_x, ref_e = ref_forward(params, x, edge_attr, edge_index)
    assert out_x.shape == (N, output_size) and out_e.shape == (E, latent_size)

    # bf16 gather/scatter introduces ~0.2-0.5% per-step rounding; check element-wise
    # with a loose bound plus a tighter relative-Frobenius-norm bound.
    def _close(a, b):
        a = np.asarray(a)
        b = np.asarray(b)
        return (np.allclose(a, b, atol=3e-2, rtol=3e-2)
                and np.linalg.norm(a - b) <= 2e-2 * np.linalg.norm(b) + 1e-6)

    assert _close(out_x, ref_x)
    assert _close(out_e, ref_e)
    print("KERNEL_OK")
</pallas_src>

<mosaic_0001>
module attributes {stable_mosaic.version = 11 : i64} {
  func.func @_epd_kernel(%arg0: i32, %arg1: memref<16x16xf32, #tpu.memory_space<vmem>>, %arg2: memref<32x16xf32, #tpu.memory_space<vmem>>, %arg3: memref<32x2xi32, #tpu.memory_space<vmem>>, %arg4: memref<1x32xi32, #tpu.memory_space<vmem>>, %arg5: memref<16x32xf32, #tpu.memory_space<vmem>>, %arg6: memref<2x32x32xf32, #tpu.memory_space<vmem>>, %arg7: memref<5x32xf32, #tpu.memory_space<vmem>>, %arg8: memref<16x32xf32, #tpu.memory_space<vmem>>, %arg9: memref<2x32x32xf32, #tpu.memory_space<vmem>>, %arg10: memref<5x32xf32, #tpu.memory_space<vmem>>, %arg11: memref<1x5x32x32xf32, #tpu.memory_space<vmem>>, %arg12: memref<1x5x32xf32, #tpu.memory_space<vmem>>, %arg13: memref<1x4x32x32xf32, #tpu.memory_space<vmem>>, %arg14: memref<1x5x32xf32, #tpu.memory_space<vmem>>, %arg15: memref<32x128xf32, #tpu.memory_space<vmem>>, %arg16: memref<2x128x128xf32, #tpu.memory_space<vmem>>, %arg17: memref<3x128xf32, #tpu.memory_space<vmem>>, %arg18: memref<16x128xf32, #tpu.memory_space<vmem>>, %arg19: memref<32x32xf32, #tpu.memory_space<vmem>>, %arg20: memref<16x32xf32, #tpu.memory_space<vmem>>, %arg21: memref<32x32xf32, #tpu.memory_space<vmem>>, %arg22: memref<32x16xbf16, #tpu.memory_space<vmem>>, %arg23: memref<32x16xbf16, #tpu.memory_space<vmem>>, %arg24: memref<16x32xbf16, #tpu.memory_space<vmem>>) attributes {dimension_semantics = [#tpu.dimension_semantics<arbitrary>], iteration_bounds = array<i64: 2>, scalar_prefetch = 0 : i64, scratch_operands = 5 : i64, tpu.core_type = #tpu.core_type<tc>, window_params = [{pipeline_mode = #tpu.pipeline_mode<synchronous>, transform_indices = @transform_0, window_bounds = array<i64: 16, 16>}, {pipeline_mode = #tpu.pipeline_mode<synchronous>, transform_indices = @transform_1, window_bounds = array<i64: 32, 16>}, {pipeline_mode = #tpu.pipeline_mode<synchronous>, transform_indices = @transform_2, window_bounds = array<i64: 32, 2>}, {pipeline_mode = #tpu.pipeline_mode<synchronous>, transform_indices = @transform_3, window_bounds = array<i64: 1, 32>}, {pipeline_mode = #tpu.pipeline_mode<synchronous>, transform_indices = @transform_4, window_bounds = array<i64: 16, 32>}, {pipeline_mode = #tpu.pipeline_mode<synchronous>, transform_indices = @transform_5, window_bounds = array<i64: 2, 32, 32>}, {pipeline_mode = #tpu.pipeline_mode<synchronous>, transform_indices = @transform_6, window_bounds = array<i64: 5, 32>}, {pipeline_mode = #tpu.pipeline_mode<synchronous>, transform_indices = @transform_7, window_bounds = array<i64: 16, 32>}, {pipeline_mode = #tpu.pipeline_mode<synchronous>, transform_indices = @transform_8, window_bounds = array<i64: 2, 32, 32>}, {pipeline_mode = #tpu.pipeline_mode<synchronous>, transform_indices = @transform_9, window_bounds = array<i64: 5, 32>}, {transform_indices = @transform_10, window_bounds = array<i64: 1, 5, 32, 32>}, {transform_indices = @transform_11, window_bounds = array<i64: 1, 5, 32>}, {transform_indices = @transform_12, window_bounds = array<i64: 1, 4, 32, 32>}, {transform_indices = @transform_13, window_bounds = array<i64: 1, 5, 32>}, {pipeline_mode = #tpu.pipeline_mode<synchronous>, transform_indices = @transform_14, window_bounds = array<i64: 32, 128>}, {pipeline_mode = #tpu.pipeline_mode<synchronous>, transform_indices = @transform_15, window_bounds = array<i64: 2, 128, 128>}, {pipeline_mode = #tpu.pipeline_mode<synchronous>, transform_indices = @transform_16, window_bounds = array<i64: 3, 128>}, {pipeline_mode = #tpu.pipeline_mode<synchronous>, transform_indices = @transform_17, window_bounds = array<i64: 16, 128>}, {pipeline_mode = #tpu.pipeline_mode<synchronous>, transform_indices = @transform_18, window_bounds = array<i64: 32, 32>}]} {
    %c0_i32 = arith.constant 0 : i32
    %0 = arith.cmpi eq, %arg0, %c0_i32 : i32
    %1 = arith.extui %0 : i1 to i32
    %c0_i32_0 = arith.constant 0 : i32
    %2 = arith.cmpi ne, %1, %c0_i32_0 : i32
    scf.if %2 {
      %c0_78 = arith.constant 0 : index
      %c0_79 = arith.constant 0 : index
      %129 = vector.load %arg1[%c0_78, %c0_79] : memref<16x16xf32, #tpu.memory_space<vmem>>, vector<16x16xf32>
      %c0_80 = arith.constant 0 : index
      %c0_81 = arith.constant 0 : index
      %130 = vector.load %arg5[%c0_80, %c0_81] : memref<16x32xf32, #tpu.memory_space<vmem>>, vector<16x32xf32>
      %cst_82 = arith.constant dense<0.000000e+00> : vector<16x32xf32>
      %131 = tpu.matmul %129, %130, %cst_82 {dimension_numbers = #tpu.dot_dimension_numbers<[1], [0], [0], [1], [0, 0, 1, 1], [], []>} : vector<16x16xf32>, vector<16x32xf32>, vector<16x32xf32> -> vector<16x32xf32>
      %c0_83 = arith.constant 0 : index
      %c0_84 = arith.constant 0 : index
      %132 = vector.load %arg7[%c0_83, %c0_84] : memref<5x32xf32, #tpu.memory_space<vmem>>, vector<5x32xf32>
      %133 = vector.extract_strided_slice %132 {offsets = [0, 0], sizes = [1, 32], strides = [1, 1]} : vector<5x32xf32> to vector<1x32xf32>
      %134 = vector.broadcast %133 : vector<1x32xf32> to vector<16x32xf32>
      %135 = arith.addf %131, %134 : vector<16x32xf32>
      %cst_85 = arith.constant 0.000000e+00 : f32
      %136 = vector.broadcast %cst_85 : f32 to vector<16x32xf32>
      %137 = arith.maximumf %135, %136 : vector<16x32xf32>
      %c0_86 = arith.constant 0 : index
      %c0_87 = arith.constant 0 : index
      %c0_88 = arith.constant 0 : index
      %138 = vector.load %arg6[%c0_86, %c0_87, %c0_88] : memref<2x32x32xf32, #tpu.memory_space<vmem>>, vector<1x32x32xf32>
      %139 = vector.shape_cast %138 : vector<1x32x32xf32> to vector<32x32xf32>
      %cst_89 = arith.constant dense<0.000000e+00> : vector<16x32xf32>
      %140 = tpu.matmul %137, %139, %cst_89 {dimension_numbers = #tpu.dot_dimension_numbers<[1], [0], [0], [1], [0, 0, 1, 1], [], []>} : vector<16x32xf32>, vector<32x32xf32>, vector<16x32xf32> -> vector<16x32xf32>
      %141 = vector.extract_strided_slice %132 {offsets = [1, 0], sizes = [1, 32], strides = [1, 1]} : vector<5x32xf32> to vector<1x32xf32>
      %142 = vector.broadcast %141 : vector<1x32xf32> to vector<16x32xf32>
      %143 = arith.addf %140, %142 : vector<16x32xf32>
      %cst_90 = arith.constant 0.000000e+00 : f32
      %144 = vector.broadcast %cst_90 : f32 to vector<16x32xf32>
      %145 = arith.maximumf %143, %144 : vector<16x32xf32>
      %c1_91 = arith.constant 1 : index
      %c0_92 = arith.constant 0 : index
      %c0_93 = arith.constant 0 : index
      %146 = vector.load %arg6[%c1_91, %c0_92, %c0_93] : memref<2x32x32xf32, #tpu.memory_space<vmem>>, vector<1x32x32xf32>
      %147 = vector.shape_cast %146 : vector<1x32x32xf32> to vector<32x32xf32>
      %cst_94 = arith.constant dense<0.000000e+00> : vector<16x32xf32>
      %148 = tpu.matmul %145, %147, %cst_94 {dimension_numbers = #tpu.dot_dimension_numbers<[1], [0], [0], [1], [0, 0, 1, 1], [], []>} : vector<16x32xf32>, vector<32x32xf32>, vector<16x32xf32> -> vector<16x32xf32>
      %149 = vector.extract_strided_slice %132 {offsets = [2, 0], sizes = [1, 32], strides = [1, 1]} : vector<5x32xf32> to vector<1x32xf32>
      %150 = vector.broadcast %149 : vector<1x32xf32> to vector<16x32xf32>
      %151 = arith.addf %148, %150 : vector<16x32xf32>
      %152 = vector.extract_strided_slice %132 {offsets = [3, 0], sizes = [1, 32], strides = [1, 1]} : vector<5x32xf32> to vector<1x32xf32>
      %153 = vector.extract_strided_slice %132 {offsets = [4, 0], sizes = [1, 32], strides = [1, 1]} : vector<5x32xf32> to vector<1x32xf32>
      %cst_95 = arith.constant dense<0.000000e+00> : vector<16xf32>
      %154 = vector.multi_reduction <add>, %151, %cst_95 [1] : vector<16x32xf32> to vector<16xf32>
      %155 = vector.shape_cast %154 : vector<16xf32> to vector<16x1xf32>
      %cst_96 = arith.constant 3.200000e+01 : f32
      %156 = vector.broadcast %cst_96 : f32 to vector<16x1xf32>
      %157 = arith.divf %155, %156 : vector<16x1xf32>
      %158 = arith.mulf %151, %151 : vector<16x32xf32>
      %cst_97 = arith.constant dense<0.000000e+00> : vector<16xf32>
      %159 = vector.multi_reduction <add>, %158, %cst_97 [1] : vector<16x32xf32> to vector<16xf32>
      %160 = vector.shape_cast %159 : vector<16xf32> to vector<16x1xf32>
      %cst_98 = arith.constant 3.200000e+01 : f32
      %161 = vector.broadcast %cst_98 : f32 to vector<16x1xf32>
      %162 = arith.divf %160, %161 : vector<16x1xf32>
      %163 = arith.mulf %157, %157 : vector<16x1xf32>
      %164 = arith.subf %162, %163 : vector<16x1xf32>
      %165 = vector.broadcast %157 : vector<16x1xf32> to vector<16x32xf32>
      %166 = arith.subf %151, %165 : vector<16x32xf32>
      %cst_99 = arith.constant 9.99999974E-6 : f32
      %167 = vector.broadcast %cst_99 : f32 to vector<16x1xf32>
      %168 = arith.addf %164, %167 : vector<16x1xf32>
      %169 = math.rsqrt %168 : vector<16x1xf32>
      %170 = vector.broadcast %169 : vector<16x1xf32> to vector<16x32xf32>
      %171 = arith.mulf %166, %170 : vector<16x32xf32>
      %172 = vector.broadcast %152 : vector<1x32xf32> to vector<16x32xf32>
      %173 = arith.mulf %171, %172 : vector<16x32xf32>
      %174 = vector.broadcast %153 : vector<1x32xf32> to vector<16x32xf32>
      %175 = arith.addf %173, %174 : vector<16x32xf32>
      %c0_100 = arith.constant 0 : index
      %c0_101 = arith.constant 0 : index
      %176 = vector.load %arg20[%c0_100, %c0_101] : memref<16x32xf32, #tpu.memory_space<vmem>>, vector<16x32xf32>
      tpu.vector_store %arg20[%c0_100, %c0_101], %175 {strides = array<i32>} : memref<16x32xf32, #tpu.memory_space<vmem>>, vector<16x32xf32>,
      %c0_102 = arith.constant 0 : index
      %c0_103 = arith.constant 0 : index
      %177 = vector.load %arg2[%c0_102, %c0_103] : memref<32x16xf32, #tpu.memory_space<vmem>>, vector<32x16xf32>
      %c0_104 = arith.constant 0 : index
      %c0_105 = arith.constant 0 : index
      %178 = vector.load %arg8[%c0_104, %c0_105] : memref<16x32xf32, #tpu.memory_space<vmem>>, vector<16x32xf32>
      %cst_106 = arith.constant dense<0.000000e+00> : vector<32x32xf32>
      %179 = tpu.matmul %177, %178, %cst_106 {dimension_numbers = #tpu.dot_dimension_numbers<[1], [0], [0], [1], [0, 0, 1, 1], [], []>} : vector<32x16xf32>, vector<16x32xf32>, vector<32x32xf32> -> vector<32x32xf32>
      %c0_107 = arith.constant 0 : index
      %c0_108 = arith.constant 0 : index
      %180 = vector.load %arg10[%c0_107, %c0_108] : memref<5x32xf32, #tpu.memory_space<vmem>>, vector<5x32xf32>
      %181 = vector.extract_strided_slice %180 {offsets = [0, 0], sizes = [1, 32], strides = [1, 1]} : vector<5x32xf32> to vector<1x32xf32>
      %182 = vector.broadcast %181 : vector<1x32xf32> to vector<32x32xf32>
      %183 = arith.addf %179, %182 : vector<32x32xf32>
      %cst_109 = arith.constant 0.000000e+00 : f32
      %184 = vector.broadcast %cst_109 : f32 to vector<32x32xf32>
      %185 = arith.maximumf %183, %184 : vector<32x32xf32>
      %c0_110 = arith.constant 0 : index
      %c0_111 = arith.constant 0 : index
      %c0_112 = arith.constant 0 : index
      %186 = vector.load %arg9[%c0_110, %c0_111, %c0_112] : memref<2x32x32xf32, #tpu.memory_space<vmem>>, vector<1x32x32xf32>
      %187 = vector.shape_cast %186 : vector<1x32x32xf32> to vector<32x32xf32>
      %cst_113 = arith.constant dense<0.000000e+00> : vector<32x32xf32>
      %188 = tpu.matmul %185, %187, %cst_113 {dimension_numbers = #tpu.dot_dimension_numbers<[1], [0], [0], [1], [0, 0, 1, 1], [], []>} : vector<32x32xf32>, vector<32x32xf32>, vector<32x32xf32> -> vector<32x32xf32>
      %189 = vector.extract_strided_slice %180 {offsets = [1, 0], sizes = [1, 32], strides = [1, 1]} : vector<5x32xf32> to vector<1x32xf32>
      %190 = vector.broadcast %189 : vector<1x32xf32> to vector<32x32xf32>
      %191 = arith.addf %188, %190 : vector<32x32xf32>
      %cst_114 = arith.constant 0.000000e+00 : f32
      %192 = vector.broadcast %cst_114 : f32 to vector<32x32xf32>
      %193 = arith.maximumf %191, %192 : vector<32x32xf32>
      %c1_115 = arith.constant 1 : index
      %c0_116 = arith.constant 0 : index
      %c0_117 = arith.constant 0 : index
      %194 = vector.load %arg9[%c1_115, %c0_116, %c0_117] : memref<2x32x32xf32, #tpu.memory_space<vmem>>, vector<1x32x32xf32>
      %195 = vector.shape_cast %194 : vector<1x32x32xf32> to vector<32x32xf32>
      %cst_118 = arith.constant dense<0.000000e+00> : vector<32x32xf32>
      %196 = tpu.matmul %193, %195, %cst_118 {dimension_numbers = #tpu.dot_dimension_numbers<[1], [0], [0], [1], [0, 0, 1, 1], [], []>} : vector<32x32xf32>, vector<32x32xf32>, vector<32x32xf32> -> vector<32x32xf32>
      %197 = vector.extract_strided_slice %180 {offsets = [2, 0], sizes = [1, 32], strides = [1, 1]} : vector<5x32xf32> to vector<1x32xf32>
      %198 = vector.broadcast %197 : vector<1x32xf32> to vector<32x32xf32>
      %199 = arith.addf %196, %198 : vector<32x32xf32>
      %200 = vector.extract_strided_slice %180 {offsets = [3, 0], sizes = [1, 32], strides = [1, 1]} : vector<5x32xf32> to vector<1x32xf32>
      %201 = vector.extract_strided_slice %180 {offsets = [4, 0], sizes = [1, 32], strides = [1, 1]} : vector<5x32xf32> to vector<1x32xf32>
      %cst_119 = arith.constant dense<0.000000e+00> : vector<32xf32>
      %202 = vector.multi_reduction <add>, %199, %cst_119 [1] : vector<32x32xf32> to vector<32xf32>
      %203 = vector.shape_cast %202 : vector<32xf32> to vector<32x1xf32>
      %cst_120 = arith.constant 3.200000e+01 : f32
      %204 = vector.broadcast %cst_120 : f32 to vector<32x1xf32>
      %205 = arith.divf %203, %204 : vector<32x1xf32>
      %206 = arith.mulf %199, %199 : vector<32x32xf32>
      %cst_121 = arith.constant dense<0.000000e+00> : vector<32xf32>
      %207 = vector.multi_reduction <add>, %206, %cst_121 [1] : vector<32x32xf32> to vector<32xf32>
      %208 = vector.shape_cast %207 : vector<32xf32> to vector<32x1xf32>
      %cst_122 = arith.constant 3.200000e+01 : f32
      %209 = vector.broadcast %cst_122 : f32 to vector<32x1xf32>
      %210 = arith.divf %208, %209 : vector<32x1xf32>
      %211 = arith.mulf %205, %205 : vector<32x1xf32>
      %212 = arith.subf %210, %211 : vector<32x1xf32>
      %213 = vector.broadcast %205 : vector<32x1xf32> to vector<32x32xf32>
      %214 = arith.subf %199, %213 : vector<32x32xf32>
      %cst_123 = arith.constant 9.99999974E-6 : f32
      %215 = vector.broadcast %cst_123 : f32 to vector<32x1xf32>
      %216 = arith.addf %212, %215 : vector<32x1xf32>
      %217 = math.rsqrt %216 : vector<32x1xf32>
      %218 = vector.broadcast %217 : vector<32x1xf32> to vector<32x32xf32>
      %219 = arith.mulf %214, %218 : vector<32x32xf32>
      %220 = vector.broadcast %200 : vector<1x32xf32> to vector<32x32xf32>
      %221 = arith.mulf %219, %220 : vector<32x32xf32>
      %222 = vector.broadcast %201 : vector<1x32xf32> to vector<32x32xf32>
      %223 = arith.addf %221, %222 : vector<32x32xf32>
      %c0_124 = arith.constant 0 : index
      %c0_125 = arith.constant 0 : index
      %224 = vector.load %arg21[%c0_124, %c0_125] : memref<32x32xf32, #tpu.memory_space<vmem>>, vector<32x32xf32>
      tpu.vector_store %arg21[%c0_124, %c0_125], %223 {strides = array<i32>} : memref<32x32xf32, #tpu.memory_space<vmem>>, vector<32x32xf32>,
      %c0_126 = arith.constant 0 : index
      %c0_127 = arith.constant 0 : index
      %225 = vector.load %arg3[%c0_126, %c0_127] : memref<32x2xi32, #tpu.memory_space<vmem>>, vector<32x2xi32>
      %226 = tpu.iota {dimensions = array<i32: 1>} : vector<32x16xi32>
      %227 = vector.extract_strided_slice %225 {offsets = [0, 0], sizes = [32, 1], strides = [1, 1]} : vector<32x2xi32> to vector<32x1xi32>
      %228 = vector.broadcast %227 : vector<32x1xi32> to vector<32x16xi32>
      %229 = arith.cmpi eq, %226, %228 : vector<32x16xi32>
      %230 = arith.extui %229 : vector<32x16xi1> to vector<32x16xi32>
      %231 = arith.sitofp %230 : vector<32x16xi32> to vector<32x16xf32>
      %232 = arith.truncf %231 : vector<32x16xf32> to vector<32x16xbf16>
      %c0_128 = arith.constant 0 : index
      %c0_129 = arith.constant 0 : index
      %233 = vector.load %arg22[%c0_128, %c0_129] : memref<32x16xbf16, #tpu.memory_space<vmem>>, vector<32x16xbf16>
      tpu.vector_store %arg22[%c0_128, %c0_129], %232 {strides = array<i32>} : memref<32x16xbf16, #tpu.memory_space<vmem>>, vector<32x16xbf16>,
      %234 = vector.extract_strided_slice %225 {offsets = [0, 1], sizes = [32, 1], strides = [1, 1]} : vector<32x2xi32> to vector<32x1xi32>
      %235 = vector.broadcast %234 : vector<32x1xi32> to vector<32x16xi32>
      %236 = arith.cmpi eq, %226, %235 : vector<32x16xi32>
      %237 = arith.extui %236 : vector<32x16xi1> to vector<32x16xi32>
      %238 = arith.sitofp %237 : vector<32x16xi32> to vector<32x16xf32>
      %239 = arith.truncf %238 : vector<32x16xf32> to vector<32x16xbf16>
      %c0_130 = arith.constant 0 : index
      %c0_131 = arith.constant 0 : index
      %240 = vector.load %arg23[%c0_130, %c0_131] : memref<32x16xbf16, #tpu.memory_space<vmem>>, vector<32x16xbf16>
      tpu.vector_store %arg23[%c0_130, %c0_131], %239 {strides = array<i32>} : memref<32x16xbf16, #tpu.memory_space<vmem>>, vector<32x16xbf16>,
      %241 = tpu.iota {dimensions = array<i32: 0>} : vector<16x32xi32>
      %c0_132 = arith.constant 0 : index
      %c0_133 = arith.constant 0 : index
      %242 = vector.load %arg4[%c0_132, %c0_133] : memref<1x32xi32, #tpu.memory_space<vmem>>, vector<1x32xi32>
      %243 = vector.broadcast %242 : vector<1x32xi32> to vector<16x32xi32>
      %244 = arith.cmpi eq, %241, %243 : vector<16x32xi32>
      %245 = arith.extui %244 : vector<16x32xi1> to vector<16x32xi32>
      %246 = arith.sitofp %245 : vector<16x32xi32> to vector<16x32xf32>
      %247 = arith.truncf %246 : vector<16x32xf32> to vector<16x32xbf16>
      %c0_134 = arith.constant 0 : index
      %c0_135 = arith.constant 0 : index
      %248 = vector.load %arg24[%c0_134, %c0_135] : memref<16x32xbf16, #tpu.memory_space<vmem>>, vector<16x32xbf16>
      tpu.vector_store %arg24[%c0_134, %c0_135], %247 {strides = array<i32>} : memref<16x32xbf16, #tpu.memory_space<vmem>>, vector<16x32xbf16>,
    } else {
    }
    %c0 = arith.constant 0 : index
    %c0_1 = arith.constant 0 : index
    %3 = vector.load %arg20[%c0, %c0_1] : memref<16x32xf32, #tpu.memory_space<vmem>>, vector<16x32xf32>
    %c0_2 = arith.constant 0 : index
    %c0_3 = arith.constant 0 : index
    %4 = vector.load %arg21[%c0_2, %c0_3] : memref<32x32xf32, #tpu.memory_space<vmem>>, vector<32x32xf32>
    %c0_4 = arith.constant 0 : index
    %c0_5 = arith.constant 0 : index
    %c0_6 = arith.constant 0 : index
    %c0_7 = arith.constant 0 : index
    %5 = vector.load %arg11[%c0_4, %c0_5, %c0_6, %c0_7] : memref<1x5x32x32xf32, #tpu.memory_space<vmem>>, vector<1x1x32x32xf32>
    %6 = vector.shape_cast %5 : vector<1x1x32x32xf32> to vector<32x32xf32>
    %cst = arith.constant dense<0.000000e+00> : vector<16x32xf32>
    %7 = tpu.matmul %3, %6, %cst {dimension_numbers = #tpu.dot_dimension_numbers<[1], [0], [0], [1], [0, 0, 1, 1], [], []>} : vector<16x32xf32>, vector<32x32xf32>, vector<16x32xf32> -> vector<16x32xf32>
    %8 = arith.truncf %7 : vector<16x32xf32> to vector<16x32xbf16>
    %c0_8 = arith.constant 0 : index
    %c1 = arith.constant 1 : index
    %c0_9 = arith.constant 0 : index
    %c0_10 = arith.constant 0 : index
    %9 = vector.load %arg11[%c0_8, %c1, %c0_9, %c0_10] : memref<1x5x32x32xf32, #tpu.memory_space<vmem>>, vector<1x1x32x32xf32>
    %10 = vector.shape_cast %9 : vector<1x1x32x32xf32> to vector<32x32xf32>
    %cst_11 = arith.constant dense<0.000000e+00> : vector<16x32xf32>
    %11 = tpu.matmul %3, %10, %cst_11 {dimension_numbers = #tpu.dot_dimension_numbers<[1], [0], [0], [1], [0, 0, 1, 1], [], []>} : vector<16x32xf32>, vector<32x32xf32>, vector<16x32xf32> -> vector<16x32xf32>
    %12 = arith.truncf %11 : vector<16x32xf32> to vector<16x32xbf16>
    %c0_12 = arith.constant 0 : index
    %c0_13 = arith.constant 0 : index
    %13 = vector.load %arg23[%c0_12, %c0_13] : memref<32x16xbf16, #tpu.memory_space<vmem>>, vector<32x16xbf16>
    %cst_14 = arith.constant dense<0.000000e+00> : vector<32x32xf32>
    %14 = tpu.matmul %13, %8, %cst_14 {dimension_numbers = #tpu.dot_dimension_numbers<[1], [0], [0], [1], [0, 0, 1, 1], [], []>} : vector<32x16xbf16>, vector<16x32xbf16>, vector<32x32xf32> -> vector<32x32xf32>
    %c0_15 = arith.constant 0 : index
    %c0_16 = arith.constant 0 : index
    %15 = vector.load %arg22[%c0_15, %c0_16] : memref<32x16xbf16, #tpu.memory_space<vmem>>, vector<32x16xbf16>
    %cst_17 = arith.constant dense<0.000000e+00> : vector<32x32xf32>
    %16 = tpu.matmul %15, %12, %cst_17 {dimension_numbers = #tpu.dot_dimension_numbers<[1], [0], [0], [1], [0, 0, 1, 1], [], []>} : vector<32x16xbf16>, vector<16x32xbf16>, vector<32x32xf32> -> vector<32x32xf32>
    %17 = arith.addf %14, %16 : vector<32x32xf32>
    %c0_18 = arith.constant 0 : index
    %c2 = arith.constant 2 : index
    %c0_19 = arith.constant 0 : index
    %c0_20 = arith.constant 0 : index
    %18 = vector.load %arg11[%c0_18, %c2, %c0_19, %c0_20] : memref<1x5x32x32xf32, #tpu.memory_space<vmem>>, vector<1x1x32x32xf32>
    %19 = vector.shape_cast %18 : vector<1x1x32x32xf32> to vector<32x32xf32>
    %cst_21 = arith.constant dense<0.000000e+00> : vector<32x32xf32>
    %20 = tpu.matmul %4, %19, %cst_21 {dimension_numbers = #tpu.dot_dimension_numbers<[1], [0], [0], [1], [0, 0, 1, 1], [], []>} : vector<32x32xf32>, vector<32x32xf32>, vector<32x32xf32> -> vector<32x32xf32>
    %21 = arith.addf %17, %20 : vector<32x32xf32>
    %c0_22 = arith.constant 0 : index
    %c0_23 = arith.constant 0 : index
    %c0_24 = arith.constant 0 : index
    %22 = vector.load %arg12[%c0_22, %c0_23, %c0_24] : memref<1x5x32xf32, #tpu.memory_space<vmem>>, vector<1x5x32xf32>
    %23 = vector.shape_cast %22 : vector<1x5x32xf32> to vector<5x32xf32>
    %24 = vector.extract_strided_slice %23 {offsets = [0, 0], sizes = [1, 32], strides = [1, 1]} : vector<5x32xf32> to vector<1x32xf32>
    %25 = vector.broadcast %24 : vector<1x32xf32> to vector<32x32xf32>
    %26 = arith.addf %21, %25 : vector<32x32xf32>
    %cst_25 = arith.constant 0.000000e+00 : f32
    %27 = vector.broadcast %cst_25 : f32 to vector<32x32xf32>
    %28 = arith.maximumf %26, %27 : vector<32x32xf32>
    %c0_26 = arith.constant 0 : index
    %c3 = arith.constant 3 : index
    %c0_27 = arith.constant 0 : index
    %c0_28 = arith.constant 0 : index
    %29 = vector.load %arg11[%c0_26, %c3, %c0_27, %c0_28] : memref<1x5x32x32xf32, #tpu.memory_space<vmem>>, vector<1x1x32x32xf32>
    %30 = vector.shape_cast %29 : vector<1x1x32x32xf32> to vector<32x32xf32>
    %cst_29 = arith.constant dense<0.000000e+00> : vector<32x32xf32>
    %31 = tpu.matmul %28, %30, %cst_29 {dimension_numbers = #tpu.dot_dimension_numbers<[1], [0], [0], [1], [0, 0, 1, 1], [], []>} : vector<32x32xf32>, vector<32x32xf32>, vector<32x32xf32> -> vector<32x32xf32>
    %32 = vector.extract_strided_slice %23 {offsets = [1, 0], sizes = [1, 32], strides = [1, 1]} : vector<5x32xf32> to vector<1x32xf32>
    %33 = vector.broadcast %32 : vector<1x32xf32> to vector<32x32xf32>
    %34 = arith.addf %31, %33 : vector<32x32xf32>
    %cst_30 = arith.constant 0.000000e+00 : f32
    %35 = vector.broadcast %cst_30 : f32 to vector<32x32xf32>
    %36 = arith.maximumf %34, %35 : vector<32x32xf32>
    %c0_31 = arith.constant 0 : index
    %c4 = arith.constant 4 : index
    %c0_32 = arith.constant 0 : index
    %c0_33 = arith.constant 0 : index
    %37 = vector.load %arg11[%c0_31, %c4, %c0_32, %c0_33] : memref<1x5x32x32xf32, #tpu.memory_space<vmem>>, vector<1x1x32x32xf32>
    %38 = vector.shape_cast %37 : vector<1x1x32x32xf32> to vector<32x32xf32>
    %cst_34 = arith.constant dense<0.000000e+00> : vector<32x32xf32>
    %39 = tpu.matmul %36, %38, %cst_34 {dimension_numbers = #tpu.dot_dimension_numbers<[1], [0], [0], [1], [0, 0, 1, 1], [], []>} : vector<32x32xf32>, vector<32x32xf32>, vector<32x32xf32> -> vector<32x32xf32>
    %40 = vector.extract_strided_slice %23 {offsets = [2, 0], sizes = [1, 32], strides = [1, 1]} : vector<5x32xf32> to vector<1x32xf32>
    %41 = vector.broadcast %40 : vector<1x32xf32> to vector<32x32xf32>
    %42 = arith.addf %39, %41 : vector<32x32xf32>
    %43 = vector.extract_strided_slice %23 {offsets = [3, 0], sizes = [1, 32], strides = [1, 1]} : vector<5x32xf32> to vector<1x32xf32>
    %44 = vector.extract_strided_slice %23 {offsets = [4, 0], sizes = [1, 32], strides = [1, 1]} : vector<5x32xf32> to vector<1x32xf32>
    %cst_35 = arith.constant dense<0.000000e+00> : vector<32xf32>
    %45 = vector.multi_reduction <add>, %42, %cst_35 [1] : vector<32x32xf32> to vector<32xf32>
    %46 = vector.shape_cast %45 : vector<32xf32> to vector<32x1xf32>
    %cst_36 = arith.constant 3.200000e+01 : f32
    %47 = vector.broadcast %cst_36 : f32 to vector<32x1xf32>
    %48 = arith.divf %46, %47 : vector<32x1xf32>
    %49 = arith.mulf %42, %42 : vector<32x32xf32>
    %cst_37 = arith.constant dense<0.000000e+00> : vector<32xf32>
    %50 = vector.multi_reduction <add>, %49, %cst_37 [1] : vector<32x32xf32> to vector<32xf32>
    %51 = vector.shape_cast %50 : vector<32xf32> to vector<32x1xf32>
    %cst_38 = arith.constant 3.200000e+01 : f32
    %52 = vector.broadcast %cst_38 : f32 to vector<32x1xf32>
    %53 = arith.divf %51, %52 : vector<32x1xf32>
    %54 = arith.mulf %48, %48 : vector<32x1xf32>
    %55 = arith.subf %53, %54 : vector<32x1xf32>
    %56 = vector.broadcast %48 : vector<32x1xf32> to vector<32x32xf32>
    %57 = arith.subf %42, %56 : vector<32x32xf32>
    %cst_39 = arith.constant 9.99999974E-6 : f32
    %58 = vector.broadcast %cst_39 : f32 to vector<32x1xf32>
    %59 = arith.addf %55, %58 : vector<32x1xf32>
    %60 = math.rsqrt %59 : vector<32x1xf32>
    %61 = vector.broadcast %60 : vector<32x1xf32> to vector<32x32xf32>
    %62 = arith.mulf %57, %61 : vector<32x32xf32>
    %63 = vector.broadcast %43 : vector<1x32xf32> to vector<32x32xf32>
    %64 = arith.mulf %62, %63 : vector<32x32xf32>
    %65 = vector.broadcast %44 : vector<1x32xf32> to vector<32x32xf32>
    %66 = arith.addf %64, %65 : vector<32x32xf32>
    %c0_40 = arith.constant 0 : index
    %c0_41 = arith.constant 0 : index
    %67 = vector.load %arg24[%c0_40, %c0_41] : memref<16x32xbf16, #tpu.memory_space<vmem>>, vector<16x32xbf16>
    %68 = arith.truncf %66 : vector<32x32xf32> to vector<32x32xbf16>
    %cst_42 = arith.constant dense<0.000000e+00> : vector<16x32xf32>
    %69 = tpu.matmul %67, %68, %cst_42 {dimension_numbers = #tpu.dot_dimension_numbers<[1], [0], [0], [1], [0, 0, 1, 1], [], []>} : vector<16x32xbf16>, vector<32x32xbf16>, vector<16x32xf32> -> vector<16x32xf32>
    %c0_43 = arith.constant 0 : index
    %c0_44 = arith.constant 0 : index
    %c0_45 = arith.constant 0 : index
    %c0_46 = arith.constant 0 : index
    %70 = vector.load %arg13[%c0_43, %c0_44, %c0_45, %c0_46] : memref<1x4x32x32xf32, #tpu.memory_space<vmem>>, vector<1x1x32x32xf32>
    %71 = vector.shape_cast %70 : vector<1x1x32x32xf32> to vector<32x32xf32>
    %cst_47 = arith.constant dense<0.000000e+00> : vector<16x32xf32>
    %72 = tpu.matmul %3, %71, %cst_47 {dimension_numbers = #tpu.dot_dimension_numbers<[1], [0], [0], [1], [0, 0, 1, 1], [], []>} : vector<16x32xf32>, vector<32x32xf32>, vector<16x32xf32> -> vector<16x32xf32>
    %c0_48 = arith.constant 0 : index
    %c1_49 = arith.constant 1 : index
    %c0_50 = arith.constant 0 : index
    %c0_51 = arith.constant 0 : index
    %73 = vector.load %arg13[%c0_48, %c1_49, %c0_50, %c0_51] : memref<1x4x32x32xf32, #tpu.memory_space<vmem>>, vector<1x1x32x32xf32>
    %74 = vector.shape_cast %73 : vector<1x1x32x32xf32> to vector<32x32xf32>
    %cst_52 = arith.constant dense<0.000000e+00> : vector<16x32xf32>
    %75 = tpu.matmul %69, %74, %cst_52 {dimension_numbers = #tpu.dot_dimension_numbers<[1], [0], [0], [1], [0, 0, 1, 1], [], []>} : vector<16x32xf32>, vector<32x32xf32>, vector<16x32xf32> -> vector<16x32xf32>
    %76 = arith.addf %72, %75 : vector<16x32xf32>
    %c0_53 = arith.constant 0 : index
    %c0_54 = arith.constant 0 : index
    %c0_55 = arith.constant 0 : index
    %77 = vector.load %arg14[%c0_53, %c0_54, %c0_55] : memref<1x5x32xf32, #tpu.memory_space<vmem>>, vector<1x5x32xf32>
    %78 = vector.shape_cast %77 : vector<1x5x32xf32> to vector<5x32xf32>
    %79 = vector.extract_strided_slice %78 {offsets = [0, 0], sizes = [1, 32], strides = [1, 1]} : vector<5x32xf32> to vector<1x32xf32>
    %80 = vector.broadcast %79 : vector<1x32xf32> to vector<16x32xf32>
    %81 = arith.addf %76, %80 : vector<16x32xf32>
    %cst_56 = arith.constant 0.000000e+00 : f32
    %82 = vector.broadcast %cst_56 : f32 to vector<16x32xf32>
    %83 = arith.maximumf %81, %82 : vector<16x32xf32>
    %c0_57 = arith.constant 0 : index
    %c2_58 = arith.constant 2 : index
    %c0_59 = arith.constant 0 : index
    %c0_60 = arith.constant 0 : index
    %84 = vector.load %arg13[%c0_57, %c2_58, %c0_59, %c0_60] : memref<1x4x32x32xf32, #tpu.memory_space<vmem>>, vector<1x1x32x32xf32>
    %85 = vector.shape_cast %84 : vector<1x1x32x32xf32> to vector<32x32xf32>
    %cst_61 = arith.constant dense<0.000000e+00> : vector<16x32xf32>
    %86 = tpu.matmul %83, %85, %cst_61 {dimension_numbers = #tpu.dot_dimension_numbers<[1], [0], [0], [1], [0, 0, 1, 1], [], []>} : vector<16x32xf32>, vector<32x32xf32>, vector<16x32xf32> -> vector<16x32xf32>
    %87 = vector.extract_strided_slice %78 {offsets = [1, 0], sizes = [1, 32], strides = [1, 1]} : vector<5x32xf32> to vector<1x32xf32>
    %88 = vector.broadcast %87 : vector<1x32xf32> to vector<16x32xf32>
    %89 = arith.addf %86, %88 : vector<16x32xf32>
    %cst_62 = arith.constant 0.000000e+00 : f32
    %90 = vector.broadcast %cst_62 : f32 to vector<16x32xf32>
    %91 = arith.maximumf %89, %90 : vector<16x32xf32>
    %c0_63 = arith.constant 0 : index
    %c3_64 = arith.constant 3 : index
    %c0_65 = arith.constant 0 : index
    %c0_66 = arith.constant 0 : index
    %92 = vector.load %arg13[%c0_63, %c3_64, %c0_65, %c0_66] : memref<1x4x32x32xf32, #tpu.memory_space<vmem>>, vector<1x1x32x32xf32>
    %93 = vector.shape_cast %92 : vector<1x1x32x32xf32> to vector<32x32xf32>
    %cst_67 = arith.constant dense<0.000000e+00> : vector<16x32xf32>
    %94 = tpu.matmul %91, %93, %cst_67 {dimension_numbers = #tpu.dot_dimension_numbers<[1], [0], [0], [1], [0, 0, 1, 1], [], []>} : vector<16x32xf32>, vector<32x32xf32>, vector<16x32xf32> -> vector<16x32xf32>
    %95 = vector.extract_strided_slice %78 {offsets = [2, 0], sizes = [1, 32], strides = [1, 1]} : vector<5x32xf32> to vector<1x32xf32>
    %96 = vector.broadcast %95 : vector<1x32xf32> to vector<16x32xf32>
    %97 = arith.addf %94, %96 : vector<16x32xf32>
    %98 = vector.extract_strided_slice %78 {offsets = [3, 0], sizes = [1, 32], strides = [1, 1]} : vector<5x32xf32> to vector<1x32xf32>
    %99 = vector.extract_strided_slice %78 {offsets = [4, 0], sizes = [1, 32], strides = [1, 1]} : vector<5x32xf32> to vector<1x32xf32>
    %cst_68 = arith.constant dense<0.000000e+00> : vector<16xf32>
    %100 = vector.multi_reduction <add>, %97, %cst_68 [1] : vector<16x32xf32> to vector<16xf32>
    %101 = vector.shape_cast %100 : vector<16xf32> to vector<16x1xf32>
    %cst_69 = arith.constant 3.200000e+01 : f32
    %102 = vector.broadcast %cst_69 : f32 to vector<16x1xf32>
    %103 = arith.divf %101, %102 : vector<16x1xf32>
    %104 = arith.mulf %97, %97 : vector<16x32xf32>
    %cst_70 = arith.constant dense<0.000000e+00> : vector<16xf32>
    %105 = vector.multi_reduction <add>, %104, %cst_70 [1] : vector<16x32xf32> to vector<16xf32>
    %106 = vector.shape_cast %105 : vector<16xf32> to vector<16x1xf32>
    %cst_71 = arith.constant 3.200000e+01 : f32
    %107 = vector.broadcast %cst_71 : f32 to vector<16x1xf32>
    %108 = arith.divf %106, %107 : vector<16x1xf32>
    %109 = arith.mulf %103, %103 : vector<16x1xf32>
    %110 = arith.subf %108, %109 : vector<16x1xf32>
    %111 = vector.broadcast %103 : vector<16x1xf32> to vector<16x32xf32>
    %112 = arith.subf %97, %111 : vector<16x32xf32>
    %cst_72 = arith.constant 9.99999974E-6 : f32
    %113 = vector.broadcast %cst_72 : f32 to vector<16x1xf32>
    %114 = arith.addf %110, %113 : vector<16x1xf32>
    %115 = math.rsqrt %114 : vector<16x1xf32>
    %116 = vector.broadcast %115 : vector<16x1xf32> to vector<16x32xf32>
    %117 = arith.mulf %112, %116 : vector<16x32xf32>
    %118 = vector.broadcast %98 : vector<1x32xf32> to vector<16x32xf32>
    %119 = arith.mulf %117, %118 : vector<16x32xf32>
    %120 = vector.broadcast %99 : vector<1x32xf32> to vector<16x32xf32>
    %121 = arith.addf %119, %120 : vector<16x32xf32>
    %122 = arith.addf %121, %3 : vector<16x32xf32>
    %c0_73 = arith.constant 0 : index
    %c0_74 = arith.constant 0 : index
    %123 = vector.load %arg20[%c0_73, %c0_74] : memref<16x32xf32, #tpu.memory_space<vmem>>, vector<16x32xf32>
    tpu.vector_store %arg20[%c0_73, %c0_74], %122 {strides = array<i32>} : memref<16x32xf32, #tpu.memory_space<vmem>>, vector<16x32xf32>,
    %124 = arith.addf %66, %4 : vector<32x32xf32>
    %c0_75 = arith.constant 0 : index
    %c0_76 = arith.constant 0 : index
    %125 = vector.load %arg21[%c0_75, %c0_76] : memref<32x32xf32, #tpu.memory_space<vmem>>, vector<32x32xf32>
    tpu.vector_store %arg21[%c0_75, %c0_76], %124 {strides = array<i32>} : memref<32x32xf32, #tpu.memory_space<vmem>>, vector<32x32xf32>,
    %c1_i32 = arith.constant 1 : i32
    %126 = arith.cmpi eq, %arg0, %c1_i32 : i32
    %127 = arith.extui %126 : i1 to i32
    %c0_i32_77 = arith.constant 0 : i32
    %128 = arith.cmpi ne, %127, %c0_i32_77 : i32
    scf.if %128 {
      %c0_78 = arith.constant 0 : index
      %c0_79 = arith.constant 0 : index
      %129 = vector.load %arg20[%c0_78, %c0_79] : memref<16x32xf32, #tpu.memory_space<vmem>>, vector<16x32xf32>
      %c0_80 = arith.constant 0 : index
      %c0_81 = arith.constant 0 : index
      %130 = vector.load %arg15[%c0_80, %c0_81] : memref<32x128xf32, #tpu.memory_space<vmem>>, vector<32x128xf32>
      %cst_82 = arith.constant dense<0.000000e+00> : vector<16x128xf32>
      %131 = tpu.matmul %129, %130, %cst_82 {dimension_numbers = #tpu.dot_dimension_numbers<[1], [0], [0], [1], [0, 0, 1, 1], [], []>} : vector<16x32xf32>, vector<32x128xf32>, vector<16x128xf32> -> vector<16x128xf32>
      %c0_83 = arith.constant 0 : index
      %c0_84 = arith.constant 0 : index
      %132 = vector.load %arg17[%c0_83, %c0_84] : memref<3x128xf32, #tpu.memory_space<vmem>>, vector<3x128xf32>
      %133 = vector.extract_strided_slice %132 {offsets = [0, 0], sizes = [1, 128], strides = [1, 1]} : vector<3x128xf32> to vector<1x128xf32>
      %134 = vector.broadcast %133 : vector<1x128xf32> to vector<16x128xf32>
      %135 = arith.addf %131, %134 : vector<16x128xf32>
      %cst_85 = arith.constant 0.000000e+00 : f32
      %136 = vector.broadcast %cst_85 : f32 to vector<16x128xf32>
      %137 = arith.maximumf %135, %136 : vector<16x128xf32>
      %c0_86 = arith.constant 0 : index
      %c0_87 = arith.constant 0 : index
      %c0_88 = arith.constant 0 : index
      %138 = vector.load %arg16[%c0_86, %c0_87, %c0_88] : memref<2x128x128xf32, #tpu.memory_space<vmem>>, vector<1x128x128xf32>
      %139 = vector.shape_cast %138 : vector<1x128x128xf32> to vector<128x128xf32>
      %cst_89 = arith.constant dense<0.000000e+00> : vector<16x128xf32>
      %140 = tpu.matmul %137, %139, %cst_89 {dimension_numbers = #tpu.dot_dimension_numbers<[1], [0], [0], [1], [0, 0, 1, 1], [], []>} : vector<16x128xf32>, vector<128x128xf32>, vector<16x128xf32> -> vector<16x128xf32>
      %141 = vector.extract_strided_slice %132 {offsets = [1, 0], sizes = [1, 128], strides = [1, 1]} : vector<3x128xf32> to vector<1x128xf32>
      %142 = vector.broadcast %141 : vector<1x128xf32> to vector<16x128xf32>
      %143 = arith.addf %140, %142 : vector<16x128xf32>
      %cst_90 = arith.constant 0.000000e+00 : f32
      %144 = vector.broadcast %cst_90 : f32 to vector<16x128xf32>
      %145 = arith.maximumf %143, %144 : vector<16x128xf32>
      %c1_91 = arith.constant 1 : index
      %c0_92 = arith.constant 0 : index
      %c0_93 = arith.constant 0 : index
      %146 = vector.load %arg16[%c1_91, %c0_92, %c0_93] : memref<2x128x128xf32, #tpu.memory_space<vmem>>, vector<1x128x128xf32>
      %147 = vector.shape_cast %146 : vector<1x128x128xf32> to vector<128x128xf32>
      %cst_94 = arith.constant dense<0.000000e+00> : vector<16x128xf32>
      %148 = tpu.matmul %145, %147, %cst_94 {dimension_numbers = #tpu.dot_dimension_numbers<[1], [0], [0], [1], [0, 0, 1, 1], [], []>} : vector<16x128xf32>, vector<128x128xf32>, vector<16x128xf32> -> vector<16x128xf32>
      %149 = vector.extract_strided_slice %132 {offsets = [2, 0], sizes = [1, 128], strides = [1, 1]} : vector<3x128xf32> to vector<1x128xf32>
      %150 = vector.broadcast %149 : vector<1x128xf32> to vector<16x128xf32>
      %151 = arith.addf %148, %150 : vector<16x128xf32>
      %c0_95 = arith.constant 0 : index
      %c0_96 = arith.constant 0 : index
      %152 = vector.load %arg18[%c0_95, %c0_96] : memref<16x128xf32, #tpu.memory_space<vmem>>, vector<16x128xf32>
      tpu.vector_store %arg18[%c0_95, %c0_96], %151 {strides = array<i32>} : memref<16x128xf32, #tpu.memory_space<vmem>>, vector<16x128xf32>,
      %c0_97 = arith.constant 0 : index
      %c0_98 = arith.constant 0 : index
      %153 = vector.load %arg21[%c0_97, %c0_98] : memref<32x32xf32, #tpu.memory_space<vmem>>, vector<32x32xf32>
      %c0_99 = arith.constant 0 : index
      %c0_100 = arith.constant 0 : index
      %154 = vector.load %arg19[%c0_99, %c0_100] : memref<32x32xf32, #tpu.memory_space<vmem>>, vector<32x32xf32>
      tpu.vector_store %arg19[%c0_99, %c0_100], %153 {strides = array<i32>} : memref<32x32xf32, #tpu.memory_space<vmem>>, vector<32x32xf32>,
    } else {
    }
    return
  }
  func.func @transform_0(%arg0: i32) -> (i32, i32) {
    %c0_i32 = arith.constant 0 : i32
    %c0_i32_0 = arith.constant 0 : i32
    %c0_i32_1 = arith.constant 0 : i32
    return %c0_i32, %c0_i32_0 : i32, i32
  }
  func.func @transform_1(%arg0: i32) -> (i32, i32) {
    %c0_i32 = arith.constant 0 : i32
    %c0_i32_0 = arith.constant 0 : i32
    %c0_i32_1 = arith.constant 0 : i32
    return %c0_i32, %c0_i32_0 : i32, i32
  }
  func.func @transform_2(%arg0: i32) -> (i32, i32) {
    %c0_i32 = arith.constant 0 : i32
    %c0_i32_0 = arith.constant 0 : i32
    %c0_i32_1 = arith.constant 0 : i32
    return %c0_i32, %c0_i32_0 : i32, i32
  }
  func.func @transform_3(%arg0: i32) -> (i32, i32) {
    %c0_i32 = arith.constant 0 : i32
    %c0_i32_0 = arith.constant 0 : i32
    %c0_i32_1 = arith.constant 0 : i32
    return %c0_i32, %c0_i32_0 : i32, i32
  }
  func.func @transform_4(%arg0: i32) -> (i32, i32) {
    %c0_i32 = arith.constant 0 : i32
    %c0_i32_0 = arith.constant 0 : i32
    %c0_i32_1 = arith.constant 0 : i32
    return %c0_i32, %c0_i32_0 : i32, i32
  }
  func.func @transform_5(%arg0: i32) -> (i32, i32, i32) {
    %c0_i32 = arith.constant 0 : i32
    %c0_i32_0 = arith.constant 0 : i32
    %c0_i32_1 = arith.constant 0 : i32
    %c0_i32_2 = arith.constant 0 : i32
    return %c0_i32, %c0_i32_0, %c0_i32_1 : i32, i32, i32
  }
  func.func @transform_6(%arg0: i32) -> (i32, i32) {
    %c0_i32 = arith.constant 0 : i32
    %c0_i32_0 = arith.constant 0 : i32
    %c0_i32_1 = arith.constant 0 : i32
    return %c0_i32, %c0_i32_0 : i32, i32
  }
  func.func @transform_7(%arg0: i32) -> (i32, i32) {
    %c0_i32 = arith.constant 0 : i32
    %c0_i32_0 = arith.constant 0 : i32
    %c0_i32_1 = arith.constant 0 : i32
    return %c0_i32, %c0_i32_0 : i32, i32
  }
  func.func @transform_8(%arg0: i32) -> (i32, i32, i32) {
    %c0_i32 = arith.constant 0 : i32
    %c0_i32_0 = arith.constant 0 : i32
    %c0_i32_1 = arith.constant 0 : i32
    %c0_i32_2 = arith.constant 0 : i32
    return %c0_i32, %c0_i32_0, %c0_i32_1 : i32, i32, i32
  }
  func.func @transform_9(%arg0: i32) -> (i32, i32) {
    %c0_i32 = arith.constant 0 : i32
    %c0_i32_0 = arith.constant 0 : i32
    %c0_i32_1 = arith.constant 0 : i32
    return %c0_i32, %c0_i32_0 : i32, i32
  }
  func.func @transform_10(%arg0: i32) -> (i32, i32, i32, i32) {
    %c0_i32 = arith.constant 0 : i32
    %c0_i32_0 = arith.constant 0 : i32
    %c0_i32_1 = arith.constant 0 : i32
    %c0_i32_2 = arith.constant 0 : i32
    return %arg0, %c0_i32, %c0_i32_0, %c0_i32_1 : i32, i32, i32, i32
  }
  func.func @transform_11(%arg0: i32) -> (i32, i32, i32) {
    %c0_i32 = arith.constant 0 : i32
    %c0_i32_0 = arith.constant 0 : i32
    %c0_i32_1 = arith.constant 0 : i32
    return %arg0, %c0_i32, %c0_i32_0 : i32, i32, i32
  }
  func.func @transform_12(%arg0: i32) -> (i32, i32, i32, i32) {
    %c0_i32 = arith.constant 0 : i32
    %c0_i32_0 = arith.constant 0 : i32
    %c0_i32_1 = arith.constant 0 : i32
    %c0_i32_2 = arith.constant 0 : i32
    return %arg0, %c0_i32, %c0_i32_0, %c0_i32_1 : i32, i32, i32, i32
  }
  func.func @transform_13(%arg0: i32) -> (i32, i32, i32) {
    %c0_i32 = arith.constant 0 : i32
    %c0_i32_0 = arith.constant 0 : i32
    %c0_i32_1 = arith.constant 0 : i32
    return %arg0, %c0_i32, %c0_i32_0 : i32, i32, i32
  }
  func.func @transform_14(%arg0: i32) -> (i32, i32) {
    %c0_i32 = arith.constant 0 : i32
    %c0_i32_0 = arith.constant 0 : i32
    %c0_i32_1 = arith.constant 0 : i32
    return %c0_i32, %c0_i32_0 : i32, i32
  }
  func.func @transform_15(%arg0: i32) -> (i32, i32, i32) {
    %c0_i32 = arith.constant 0 : i32
    %c0_i32_0 = arith.constant 0 : i32
    %c0_i32_1 = arith.constant 0 : i32
    %c0_i32_2 = arith.constant 0 : i32
    return %c0_i32, %c0_i32_0, %c0_i32_1 : i32, i32, i32
  }
  func.func @transform_16(%arg0: i32) -> (i32, i32) {
    %c0_i32 = arith.constant 0 : i32
    %c0_i32_0 = arith.constant 0 : i32
    %c0_i32_1 = arith.constant 0 : i32
    return %c0_i32, %c0_i32_0 : i32, i32
  }
  func.func @transform_17(%arg0: i32) -> (i32, i32) {
    %c0_i32 = arith.constant 0 : i32
    %c0_i32_0 = arith.constant 0 : i32
    %c0_i32_1 = arith.constant 0 : i32
    return %c0_i32, %c0_i32_0 : i32, i32
  }
  func.func @transform_18(%arg0: i32) -> (i32, i32) {
    %c0_i32 = arith.constant 0 : i32
    %c0_i32_0 = arith.constant 0 : i32
    %c0_i32_1 = arith.constant 0 : i32
    return %c0_i32, %c0_i32_0 : i32, i32
  }
}

</mosaic_0001>

<llo_original>
// kernel: epd_forward.1
$region0: #{epd_forward.1}
  #allocation0 [shape = 'u32[]', space=smem, size = 0x4, offset = 0x4, fixed_abs, tag = 'smem constant byte address 0x4 - core index']
  #allocation1 [shape = 'u32[144,128]{1,0:T(1,128)}', space=vmem, size = 0x12000, scoped, tag = 'internal scratch']
  #allocation2 [shape = 'f32[16,32]{1,0:T(8,128)}', space=vmem, size = 0x2000, scoped, tag = 'scratch operand']
  #allocation3 [shape = 'f32[32,32]{1,0:T(8,128)}', space=vmem, size = 0x4000, scoped, tag = 'scratch operand']
  #allocation4 [shape = 'bf16[32,16]{1,0:T(16,128)(2,1)}', space=vmem, size = 0x2000, scoped, tag = 'scratch operand']
  #allocation5 [shape = 'bf16[32,16]{1,0:T(16,128)(2,1)}', space=vmem, size = 0x2000, scoped, tag = 'scratch operand']
  #allocation6 [shape = 'bf16[16,32]{1,0:T(16,128)(2,1)}', space=vmem, size = 0x1000, scoped, tag = 'scratch operand']
  %s0 = inlined_call_operand.vmem [shape: f32[16,16], index: 0, kind: input, shape index: {}]
  %s1 = inlined_call_operand.vmem [shape: f32[32,16], index: 1, kind: input, shape index: {}]
  %s2 = inlined_call_operand.vmem [shape: s32[32,2], index: 2, kind: input, shape index: {}]
  %s3 = inlined_call_operand.vmem [shape: s32[1,32], index: 3, kind: input, shape index: {}]
  %s4 = inlined_call_operand.vmem [shape: f32[16,32], index: 4, kind: input, shape index: {}]
  %s5 = inlined_call_operand.vmem [shape: f32[2,32,32], index: 5, kind: input, shape index: {}]
  %s6 = inlined_call_operand.vmem [shape: f32[5,32], index: 6, kind: input, shape index: {}]
  %s7 = inlined_call_operand.vmem [shape: f32[16,32], index: 7, kind: input, shape index: {}]
  %s8 = inlined_call_operand.vmem [shape: f32[2,32,32], index: 8, kind: input, shape index: {}]
  %s9 = inlined_call_operand.vmem [shape: f32[5,32], index: 9, kind: input, shape index: {}]
  %s10 = inlined_call_operand.vmem [shape: f32[2,5,32,32], index: 10, kind: input, shape index: {}]
  %s11 = inlined_call_operand.vmem [shape: f32[2,5,32], index: 11, kind: input, shape index: {}]
  %s12 = inlined_call_operand.vmem [shape: f32[2,4,32,32], index: 12, kind: input, shape index: {}]
  %s13 = inlined_call_operand.vmem [shape: f32[2,5,32], index: 13, kind: input, shape index: {}]
  %s14 = inlined_call_operand.vmem [shape: f32[32,128], index: 14, kind: input, shape index: {}]
  %s15 = inlined_call_operand.vmem [shape: f32[2,128,128], index: 15, kind: input, shape index: {}]
  %s16 = inlined_call_operand.vmem [shape: f32[3,128], index: 16, kind: input, shape index: {}]
  %s17 = inlined_call_operand.vmem [shape: f32[16,128], index: 17, kind: output, shape index: {0}]
  %s18 = inlined_call_operand.hbm [shape: f32[32,32], index: 18, kind: output, shape index: {1}]
  %19 = xla_tuple %s17, %s18
  %s20 = sld [smem:[#allocation0]]
  $region117: #{epd_forward.1} parent=0
    _
  %s22 = ssub.s32 1, %s20
  %s23 = scalar_select 0, %s22, %s20
  $region1: #{epd_forward.1} parent=0
    #allocation7 [shape = 'u8[16384]{0}', space=vmem, size = 0x4000, scoped, tag = 'output window, operand 1, single buffered']
    #allocation8 [shape = 's32[2]{0}', space=sflag, size = 0x8, scoped, tag = 'scoped memory for epd_forward.1']
    %24 = vsyncpa [#allocation8], 0
    loop: start=0, step=1, limit=4
    $region2: #{epd_forward.1} parent=1 // loop_pre_header
      _
    $region3: #{epd_forward.1} parent=1 // loop_header
      %s26 = sphi 0, %s30
      %p27 = scmp.ge.s32.totalorder %s26, 4
      %s34 = sphi 0, %s34
      %s36 = sphi 0, %s34
      %s37 = sphi 0, %s36
      %s51 = sphi 0, %s37
      %s55 = sphi 0, %s55
      %s57 = sphi 0, %s55
      %s58 = sphi 0, %s57
      %s72 = sphi 0, %s58
      %s76 = sphi 0, %s76
      %s78 = sphi 0, %s76
      %s79 = sphi 0, %s78
      %s93 = sphi 0, %s79
      %s97 = sphi 0, %s97
      %s99 = sphi 0, %s97
      %s100 = sphi 0, %s99
      %s114 = sphi 0, %s100
      %s118 = sphi 0, %s118
      %s120 = sphi 0, %s118
      %s121 = sphi 0, %s120
      %s135 = sphi 0, %s121
      %s139 = sphi 0, %s139
      %s141 = sphi 0, %s139
      %s142 = sphi 0, %s141
      %s156 = sphi 0, %s142
      %s160 = sphi 0, %s160
      %s162 = sphi 0, %s160
      %s163 = sphi 0, %s162
      %s177 = sphi 0, %s163
      %s181 = sphi 0, %s181
      %s183 = sphi 0, %s181
      %s184 = sphi 0, %s183
      %s198 = sphi 0, %s184
      %s202 = sphi 0, %s202
      %s204 = sphi 0, %s202
      %s205 = sphi 0, %s204
      %s219 = sphi 0, %s205
      %s223 = sphi 0, %s223
      %s225 = sphi 0, %s223
      %s226 = sphi 0, %s225
      %s240 = sphi 0, %s226
      %s246 = sphi 0, %s248
      %s249 = sphi 0, %s246
      %s250 = sphi 0, %s249
      %s266 = sphi 0, %s250
      %s272 = sphi 0, %s274
      %s275 = sphi 0, %s272
      %s276 = sphi 0, %s275
      %s292 = sphi 0, %s276
      %s298 = sphi 0, %s300
      %s301 = sphi 0, %s298
      %s302 = sphi 0, %s301
      %s318 = sphi 0, %s302
      %s324 = sphi 0, %s326
      %s327 = sphi 0, %s324
      %s328 = sphi 0, %s327
      %s344 = sphi 0, %s328
      %s348 = sphi 0, %s348
      %s350 = sphi 0, %s348
      %s351 = sphi 0, %s350
      %s365 = sphi 0, %s351
      %s369 = sphi 0, %s369
      %s371 = sphi 0, %s369
      %s372 = sphi 0, %s371
      %s386 = sphi 0, %s372
      %s390 = sphi 0, %s390
      %s392 = sphi 0, %s390
      %s393 = sphi 0, %s392
      %s407 = sphi 0, %s393
      %s411 = sphi 0, %s411
      %s413 = sphi 0, %s411
      %s414 = sphi 0, %s413
      %s428 = sphi 0, %s414
      %s432 = sphi 0, %s432
      %s434 = sphi 0, %s432
      %s435 = sphi 0, %s434
      %s449 = sphi 0, %s435
    $region4: #{epd_forward.1} parent=1 // loop_header_branch
      %29 = sbr.rel (%p27) target = $region8
    $region5: #{epd_forward.1} parent=1 // loop_body
      %s31 = ssub.s32 %s26, 1
      %s32 = ssub.s32 %s26, 2
      %s33 = sadd.s32 %s26, 1
      %s35 = sadd.s32 %s34, 1
      %p38 = scmp.eq.s32.totalorder %s26, 1
      %p39 = scmp.ne.s32.totalorder %s34, %s36
      %p40 = scmp.eq.s32.totalorder %s26, 0
      %p41 = por %p39, %p40
      %p42 = scmp.ne.s32.totalorder %s34, %s36
      %p43 = scmp.eq.s32.totalorder %s31, 1
      %p44 = por %p42, %p43
      %p45 = scmp.ne.s32.totalorder %s36, %s37
      %p46 = scmp.eq.s32.totalorder %s31, 0
      %p47 = por %p45, %p46
      %p48 = scmp.ne.s32.totalorder %s36, %s37
      %p49 = scmp.eq.s32.totalorder %s32, 1
      %p50 = por %p48, %p49
      %p52 = scmp.ne.s32.totalorder %s37, %s51
      %p53 = scmp.eq.s32.totalorder %s32, 0
      %p54 = por %p52, %p53
      %s56 = sadd.s32 %s55, 1
      %p59 = scmp.eq.s32.totalorder %s26, 1
      %p60 = scmp.ne.s32.totalorder %s55, %s57
      %p61 = scmp.eq.s32.totalorder %s26, 0
      %p62 = por %p60, %p61
      %p63 = scmp.ne.s32.totalorder %s55, %s57
      %p64 = scmp.eq.s32.totalorder %s31, 1
      %p65 = por %p63, %p64
      %p66 = scmp.ne.s32.totalorder %s57, %s58
      %p67 = scmp.eq.s32.totalorder %s31, 0
      %p68 = por %p66, %p67
      %p69 = scmp.ne.s32.totalorder %s57, %s58
      %p70 = scmp.eq.s32.totalorder %s32, 1
      %p71 = por %p69, %p70
      %p73 = scmp.ne.s32.totalorder %s58, %s72
      %p74 = scmp.eq.s32.totalorder %s32, 0
      %p75 = por %p73, %p74
      %s77 = sadd.s32 %s76, 1
      %p80 = scmp.eq.s32.totalorder %s26, 1
      %p81 = scmp.ne.s32.totalorder %s76, %s78
      %p82 = scmp.eq.s32.totalorder %s26, 0
      %p83 = por %p81, %p82
      %p84 = scmp.ne.s32.totalorder %s76, %s78
      %p85 = scmp.eq.s32.totalorder %s31, 1
      %p86 = por %p84, %p85
      %p87 = scmp.ne.s32.totalorder %s78, %s79
      %p88 = scmp.eq.s32.totalorder %s31, 0
      %p89 = por %p87, %p88
      %p90 = scmp.ne.s32.totalorder %s78, %s79
      %p91 = scmp.eq.s32.totalorder %s32, 1
      %p92 = por %p90, %p91
      %p94 = scmp.ne.s32.totalorder %s79, %s93
      %p95 = scmp.eq.s32.totalorder %s32, 0
      %p96 = por %p94, %p95
      %s98 = sadd.s32 %s97, 1
      %p101 = scmp.eq.s32.totalorder %s26, 1
      %p102 = scmp.ne.s32.totalorder %s97, %s99
      %p103 = scmp.eq.s32.totalorder %s26, 0
      %p104 = por %p102, %p103
      %p105 = scmp.ne.s32.totalorder %s97, %s99
      %p106 = scmp.eq.s32.totalorder %s31, 1
      %p107 = por %p105, %p106
      %p108 = scmp.ne.s32.totalorder %s99, %s100
      %p109 = scmp.eq.s32.totalorder %s31, 0
      %p110 = por %p108, %p109
      %p111 = scmp.ne.s32.totalorder %s99, %s100
      %p112 = scmp.eq.s32.totalorder %s32, 1
      %p113 = por %p111, %p112
      %p115 = scmp.ne.s32.totalorder %s100, %s114
      %p116 = scmp.eq.s32.totalorder %s32, 0
      %p117 = por %p115, %p116
      %s119 = sadd.s32 %s118, 1
      %p122 = scmp.eq.s32.totalorder %s26, 1
      %p123 = scmp.ne.s32.totalorder %s118, %s120
      %p124 = scmp.eq.s32.totalorder %s26, 0
      %p125 = por %p123, %p124
      %p126 = scmp.ne.s32.totalorder %s118, %s120
      %p127 = scmp.eq.s32.totalorder %s31, 1
      %p128 = por %p126, %p127
      %p129 = scmp.ne.s32.totalorder %s120, %s121
      %p130 = scmp.eq.s32.totalorder %s31, 0
      %p131 = por %p129, %p130
      %p132 = scmp.ne.s32.totalorder %s120, %s121
      %p133 = scmp.eq.s32.totalorder %s32, 1
      %p134 = por %p132, %p133
      %p136 = scmp.ne.s32.totalorder %s121, %s135
      %p137 = scmp.eq.s32.totalorder %s32, 0
      %p138 = por %p136, %p137
      %s140 = sadd.s32 %s139, 1
      %p143 = scmp.eq.s32.totalorder %s26, 1
      %p144 = scmp.ne.s32.totalorder %s139, %s141
      %p145 = scmp.eq.s32.totalorder %s26, 0
      %p146 = por %p144, %p145
      %p147 = scmp.ne.s32.totalorder %s139, %s141
      %p148 = scmp.eq.s32.totalorder %s31, 1
      %p149 = por %p147, %p148
      %p150 = scmp.ne.s32.totalorder %s141, %s142
      %p151 = scmp.eq.s32.totalorder %s31, 0
      %p152 = por %p150, %p151
      %p153 = scmp.ne.s32.totalorder %s141, %s142
      %p154 = scmp.eq.s32.totalorder %s32, 1
      %p155 = por %p153, %p154
      %p157 = scmp.ne.s32.totalorder %s142, %s156
      %p158 = scmp.eq.s32.totalorder %s32, 0
      %p159 = por %p157, %p158
      %s161 = sadd.s32 %s160, 1
      %p164 = scmp.eq.s32.totalorder %s26, 1
      %p165 = scmp.ne.s32.totalorder %s160, %s162
      %p166 = scmp.eq.s32.totalorder %s26, 0
      %p167 = por %p165, %p166
      %p168 = scmp.ne.s32.totalorder %s160, %s162
      %p169 = scmp.eq.s32.totalorder %s31, 1
      %p170 = por %p168, %p169
      %p171 = scmp.ne.s32.totalorder %s162, %s163
      %p172 = scmp.eq.s32.totalorder %s31, 0
      %p173 = por %p171, %p172
      %p174 = scmp.ne.s32.totalorder %s162, %s163
      %p175 = scmp.eq.s32.totalorder %s32, 1
      %p176 = por %p174, %p175
      %p178 = scmp.ne.s32.totalorder %s163, %s177
      %p179 = scmp.eq.s32.totalorder %s32, 0
      %p180 = por %p178, %p179
      %s182 = sadd.s32 %s181, 1
      %p185 = scmp.eq.s32.totalorder %s26, 1
      %p186 = scmp.ne.s32.totalorder %s181, %s183
      %p187 = scmp.eq.s32.totalorder %s26, 0
      %p188 = por %p186, %p187
      %p189 = scmp.ne.s32.totalorder %s181, %s183
      %p190 = scmp.eq.s32.totalorder %s31, 1
      %p191 = por %p189, %p190
      %p192 = scmp.ne.s32.totalorder %s183, %s184
      %p193 = scmp.eq.s32.totalorder %s31, 0
      %p194 = por %p192, %p193
      %p195 = scmp.ne.s32.totalorder %s183, %s184
      %p196 = scmp.eq.s32.totalorder %s32, 1
      %p197 = por %p195, %p196
      %p199 = scmp.ne.s32.totalorder %s184, %s198
      %p200 = scmp.eq.s32.totalorder %s32, 0
      %p201 = por %p199, %p200
      %s203 = sadd.s32 %s202, 1
      %p206 = scmp.eq.s32.totalorder %s26, 1
      %p207 = scmp.ne.s32.totalorder %s202, %s204
      %p208 = scmp.eq.s32.totalorder %s26, 0
      %p209 = por %p207, %p208
      %p210 = scmp.ne.s32.totalorder %s202, %s204
      %p211 = scmp.eq.s32.totalorder %s31, 1
      %p212 = por %p210, %p211
      %p213 = scmp.ne.s32.totalorder %s204, %s205
      %p214 = scmp.eq.s32.totalorder %s31, 0
      %p215 = por %p213, %p214
      %p216 = scmp.ne.s32.totalorder %s204, %s205
      %p217 = scmp.eq.s32.totalorder %s32, 1
      %p218 = por %p216, %p217
      %p220 = scmp.ne.s32.totalorder %s205, %s219
      %p221 = scmp.eq.s32.totalorder %s32, 0
      %p222 = por %p220, %p221
      %s224 = sadd.s32 %s223, 1
      %p227 = scmp.eq.s32.totalorder %s26, 1
      %p228 = scmp.ne.s32.totalorder %s223, %s225
      %p229 = scmp.eq.s32.totalorder %s26, 0
      %p230 = por %p228, %p229
      %p231 = scmp.ne.s32.totalorder %s223, %s225
      %p232 = scmp.eq.s32.totalorder %s31, 1
      %p233 = por %p231, %p232
      %p234 = scmp.ne.s32.totalorder %s225, %s226
      %p235 = scmp.eq.s32.totalorder %s31, 0
      %p236 = por %p234, %p235
      %p237 = scmp.ne.s32.totalorder %s225, %s226
      %p238 = scmp.eq.s32.totalorder %s32, 1
      %p239 = por %p237, %p238
      %p241 = scmp.ne.s32.totalorder %s226, %s240
      %p242 = scmp.eq.s32.totalorder %s32, 0
      %p243 = por %p241, %p242
      %s244 = ssub.s32 %s26, %s33
      %p245 = scmp.eq.s32.totalorder %s244, 0
      %s247 = sadd.s32 %s246, 1
      %s248 = scalar_select %p245, %s246, %s247
      %p251 = pneg %p245
      %p252 = scmp.eq.s32.totalorder %s26, 1
      %p253 = por %p251, %p252
      %p254 = scmp.ne.s32.totalorder %s246, %s249
      %p255 = scmp.eq.s32.totalorder %s26, 0
      %p256 = por %p254, %p255
      %p257 = scmp.ne.s32.totalorder %s246, %s249
      %p258 = scmp.eq.s32.totalorder %s31, 1
      %p259 = por %p257, %p258
      %p260 = scmp.ne.s32.totalorder %s249, %s250
      %p261 = scmp.eq.s32.totalorder %s31, 0
      %p262 = por %p260, %p261
      %p263 = scmp.ne.s32.totalorder %s249, %s250
      %p264 = scmp.eq.s32.totalorder %s32, 1
      %p265 = por %p263, %p264
      %p267 = scmp.ne.s32.totalorder %s250, %s266
      %p268 = scmp.eq.s32.totalorder %s32, 0
      %p269 = por %p267, %p268
      %s270 = ssub.s32 %s26, %s33
      %p271 = scmp.eq.s32.totalorder %s270, 0
      %s273 = sadd.s32 %s272, 1
      %s274 = scalar_select %p271, %s272, %s273
      %p277 = pneg %p271
      %p278 = scmp.eq.s32.totalorder %s26, 1
      %p279 = por %p277, %p278
      %p280 = scmp.ne.s32.totalorder %s272, %s275
      %p281 = scmp.eq.s32.totalorder %s26, 0
      %p282 = por %p280, %p281
      %p283 = scmp.ne.s32.totalorder %s272, %s275
      %p284 = scmp.eq.s32.totalorder %s31, 1
      %p285 = por %p283, %p284
      %p286 = scmp.ne.s32.totalorder %s275, %s276
      %p287 = scmp.eq.s32.totalorder %s31, 0
      %p288 = por %p286, %p287
      %p289 = scmp.ne.s32.totalorder %s275, %s276
      %p290 = scmp.eq.s32.totalorder %s32, 1
      %p291 = por %p289, %p290
      %p293 = scmp.ne.s32.totalorder %s276, %s292
      %p294 = scmp.eq.s32.totalorder %s32, 0
      %p295 = por %p293, %p294
      %s296 = ssub.s32 %s26, %s33
      %p297 = scmp.eq.s32.totalorder %s296, 0
      %s299 = sadd.s32 %s298, 1
      %s300 = scalar_select %p297, %s298, %s299
      %p303 = pneg %p297
      %p304 = scmp.eq.s32.totalorder %s26, 1
      %p305 = por %p303, %p304
      %p306 = scmp.ne.s32.totalorder %s298, %s301
      %p307 = scmp.eq.s32.totalorder %s26, 0
      %p308 = por %p306, %p307
      %p309 = scmp.ne.s32.totalorder %s298, %s301
      %p310 = scmp.eq.s32.totalorder %s31, 1
      %p311 = por %p309, %p310
      %p312 = scmp.ne.s32.totalorder %s301, %s302
      %p313 = scmp.eq.s32.totalorder %s31, 0
      %p314 = por %p312, %p313
      %p315 = scmp.ne.s32.totalorder %s301, %s302
      %p316 = scmp.eq.s32.totalorder %s32, 1
      %p317 = por %p315, %p316
      %p319 = scmp.ne.s32.totalorder %s302, %s318
      %p320 = scmp.eq.s32.totalorder %s32, 0
      %p321 = por %p319, %p320
      %s322 = ssub.s32 %s26, %s33
      %p323 = scmp.eq.s32.totalorder %s322, 0
      %s325 = sadd.s32 %s324, 1
      %s326 = scalar_select %p323, %s324, %s325
      %p329 = pneg %p323
      %p330 = scmp.eq.s32.totalorder %s26, 1
      %p331 = por %p329, %p330
      %p332 = scmp.ne.s32.totalorder %s324, %s327
      %p333 = scmp.eq.s32.totalorder %s26, 0
      %p334 = por %p332, %p333
      %p335 = scmp.ne.s32.totalorder %s324, %s327
      %p336 = scmp.eq.s32.totalorder %s31, 1
      %p337 = por %p335, %p336
      %p338 = scmp.ne.s32.totalorder %s327, %s328
      %p339 = scmp.eq.s32.totalorder %s31, 0
      %p340 = por %p338, %p339
      %p341 = scmp.ne.s32.totalorder %s327, %s328
      %p342 = scmp.eq.s32.totalorder %s32, 1
      %p343 = por %p341, %p342
      %p345 = scmp.ne.s32.totalorder %s328, %s344
      %p346 = scmp.eq.s32.totalorder %s32, 0
      %p347 = por %p345, %p346
      %s349 = sadd.s32 %s348, 1
      %p352 = scmp.eq.s32.totalorder %s26, 1
      %p353 = scmp.ne.s32.totalorder %s348, %s350
      %p354 = scmp.eq.s32.totalorder %s26, 0
      %p355 = por %p353, %p354
      %p356 = scmp.ne.s32.totalorder %s348, %s350
      %p357 = scmp.eq.s32.totalorder %s31, 1
      %p358 = por %p356, %p357
      %p359 = scmp.ne.s32.totalorder %s350, %s351
      %p360 = scmp.eq.s32.totalorder %s31, 0
      %p361 = por %p359, %p360
      %p362 = scmp.ne.s32.totalorder %s350, %s351
      %p363 = scmp.eq.s32.totalorder %s32, 1
      %p364 = por %p362, %p363
      %p366 = scmp.ne.s32.totalorder %s351, %s365
      %p367 = scmp.eq.s32.totalorder %s32, 0
      %p368 = por %p366, %p367
      %s370 = sadd.s32 %s369, 1
      %p373 = scmp.eq.s32.totalorder %s26, 1
      %p374 = scmp.ne.s32.totalorder %s369, %s371
      %p375 = scmp.eq.s32.totalorder %s26, 0
      %p376 = por %p374, %p375
      %p377 = scmp.ne.s32.totalorder %s369, %s371
      %p378 = scmp.eq.s32.totalorder %s31, 1
      %p379 = por %p377, %p378
      %p380 = scmp.ne.s32.totalorder %s371, %s372
      %p381 = scmp.eq.s32.totalorder %s31, 0
      %p382 = por %p380, %p381
      %p383 = scmp.ne.s32.totalorder %s371, %s372
      %p384 = scmp.eq.s32.totalorder %s32, 1
      %p385 = por %p383, %p384
      %p387 = scmp.ne.s32.totalorder %s372, %s386
      %p388 = scmp.eq.s32.totalorder %s32, 0
      %p389 = por %p387, %p388
      %s391 = sadd.s32 %s390, 1
      %p394 = scmp.eq.s32.totalorder %s26, 1
      %p395 = scmp.ne.s32.totalorder %s390, %s392
      %p396 = scmp.eq.s32.totalorder %s26, 0
      %p397 = por %p395, %p396
      %p398 = scmp.ne.s32.totalorder %s390, %s392
      %p399 = scmp.eq.s32.totalorder %s31, 1
      %p400 = por %p398, %p399
      %p401 = scmp.ne.s32.totalorder %s392, %s393
      %p402 = scmp.eq.s32.totalorder %s31, 0
      %p403 = por %p401, %p402
      %p404 = scmp.ne.s32.totalorder %s392, %s393
      %p405 = scmp.eq.s32.totalorder %s32, 1
      %p406 = por %p404, %p405
      %p408 = scmp.ne.s32.totalorder %s393, %s407
      %p409 = scmp.eq.s32.totalorder %s32, 0
      %p410 = por %p408, %p409
      %s412 = sadd.s32 %s411, 1
      %p415 = scmp.eq.s32.totalorder %s26, 1
      %p416 = scmp.ne.s32.totalorder %s411, %s413
      %p417 = scmp.eq.s32.totalorder %s26, 0
      %p418 = por %p416, %p417
      %p419 = scmp.ne.s32.totalorder %s411, %s413
      %p420 = scmp.eq.s32.totalorder %s31, 1
      %p421 = por %p419, %p420
      %p422 = scmp.ne.s32.totalorder %s413, %s414
      %p423 = scmp.eq.s32.totalorder %s31, 0
      %p424 = por %p422, %p423
      %p425 = scmp.ne.s32.totalorder %s413, %s414
      %p426 = scmp.eq.s32.totalorder %s32, 1
      %p427 = por %p425, %p426
      %p429 = scmp.ne.s32.totalorder %s414, %s428
      %p430 = scmp.eq.s32.totalorder %s32, 0
      %p431 = por %p429, %p430
      %s433 = sadd.s32 %s432, 1
      %p436 = scmp.eq.s32.totalorder %s26, 1
      %p437 = scmp.ne.s32.totalorder %s432, %s434
      %p438 = scmp.eq.s32.totalorder %s26, 0
      %p439 = por %p437, %p438
      %p440 = scmp.ne.s32.totalorder %s432, %s434
      %p441 = scmp.eq.s32.totalorder %s31, 1
      %p442 = por %p440, %p441
      %p443 = scmp.ne.s32.totalorder %s434, %s435
      %p444 = scmp.eq.s32.totalorder %s31, 0
      %p445 = por %p443, %p444
      %p446 = scmp.ne.s32.totalorder %s434, %s435
      %p447 = scmp.eq.s32.totalorder %s32, 1
      %p448 = por %p446, %p447
      %p450 = scmp.ne.s32.totalorder %s435, %s449
      %p451 = scmp.eq.s32.totalorder %s32, 0
      %p452 = por %p450, %p451
      %p453 = scmp.le.s32.totalorder 1, %s26
      %p454 = scmp.lt.s32.totalorder %s26, 3
      %p455 = pnand %p453, %p454
      %p456 = pneg %p455
      // Predicated region
      $region9: #{epd_forward.1} parent=5 // pred_check
        _
      $region10: #{epd_forward.1} parent=5 // pred_check_branch
        %458 = sbr.rel (%p455) target = $region12
      $region11: #{epd_forward.1} parent=5 // pred_region
        %s459 = ssub.s32 %s26, 1
        // Predicated region
        $region13: #{epd_forward.1} parent=11 // pred_check
          %p460 = pneg %p47
        $region14: #{epd_forward.1} parent=11 // pred_check_branch
          %462 = sbr.rel (%p460) target = $region16
        $region15: #{epd_forward.1} parent=11 // pred_region
          _
        $region16: #{epd_forward.1} parent=11 // pred_fallthru
          _
        // Predicated region
        $region17: #{epd_forward.1} parent=11 // pred_check
          %p463 = pneg %p68
        $region18: #{epd_forward.1} parent=11 // pred_check_branch
          %465 = sbr.rel (%p463) target = $region20
        $region19: #{epd_forward.1} parent=11 // pred_region
          _
        $region20: #{epd_forward.1} parent=11 // pred_fallthru
          _
        // Predicated region
        $region21: #{epd_forward.1} parent=11 // pred_check
          %p466 = pneg %p89
        $region22: #{epd_forward.1} parent=11 // pred_check_branch
          %468 = sbr.rel (%p466) target = $region24
        $region23: #{epd_forward.1} parent=11 // pred_region
          _
        $region24: #{epd_forward.1} parent=11 // pred_fallthru
          _
        // Predicated region
        $region25: #{epd_forward.1} parent=11 // pred_check
          %p469 = pneg %p110
        $region26: #{epd_forward.1} parent=11 // pred_check_branch
          %471 = sbr.rel (%p469) target = $region28
        $region27: #{epd_forward.1} parent=11 // pred_region
          _
        $region28: #{epd_forward.1} parent=11 // pred_fallthru
          _
        // Predicated region
        $region29: #{epd_forward.1} parent=11 // pred_check
          %p472 = pneg %p131
        $region30: #{epd_forward.1} parent=11 // pred_check_branch
          %474 = sbr.rel (%p472) target = $region32
        $region31: #{epd_forward.1} parent=11 // pred_region
          _
        $region32: #{epd_forward.1} parent=11 // pred_fallthru
          _
        // Predicated region
        $region33: #{epd_forward.1} parent=11 // pred_check
          %p475 = pneg %p152
        $region34: #{epd_forward.1} parent=11 // pred_check_branch
          %477 = sbr.rel (%p475) target = $region36
        $region35: #{epd_forward.1} parent=11 // pred_region
          _
        $region36: #{epd_forward.1} parent=11 // pred_fallthru
          _
        // Predicated region
        $region37: #{epd_forward.1} parent=11 // pred_check
          %p478 = pneg %p173
        $region38: #{epd_forward.1} parent=11 // pred_check_branch
          %480 = sbr.rel (%p478) target = $region40
        $region39: #{epd_forward.1} parent=11 // pred_region
          _
        $region40: #{epd_forward.1} parent=11 // pred_fallthru
          _
        // Predicated region
        $region41: #{epd_forward.1} parent=11 // pred_check
          %p481 = pneg %p194
        $region42: #{epd_forward.1} parent=11 // pred_check_branch
          %483 = sbr.rel (%p481) target = $region44
        $region43: #{epd_forward.1} parent=11 // pred_region
          _
        $region44: #{epd_forward.1} parent=11 // pred_fallthru
          _
        // Predicated region
        $region45: #{epd_forward.1} parent=11 // pred_check
          %p484 = pneg %p215
        $region46: #{epd_forward.1} parent=11 // pred_check_branch
          %486 = sbr.rel (%p484) target = $region48
        $region47: #{epd_forward.1} parent=11 // pred_region
          _
        $region48: #{epd_forward.1} parent=11 // pred_fallthru
          _
        // Predicated region
        $region49: #{epd_forward.1} parent=11 // pred_check
          %p487 = pneg %p236
        $region50: #{epd_forward.1} parent=11 // pred_check_branch
          %489 = sbr.rel (%p487) target = $region52
        $region51: #{epd_forward.1} parent=11 // pred_region
          _
        $region52: #{epd_forward.1} parent=11 // pred_fallthru
          _
        // Predicated region
        $region53: #{epd_forward.1} parent=11 // pred_check
          %p490 = pneg %p361
        $region54: #{epd_forward.1} parent=11 // pred_check_branch
          %492 = sbr.rel (%p490) target = $region56
        $region55: #{epd_forward.1} parent=11 // pred_region
          _
        $region56: #{epd_forward.1} parent=11 // pred_fallthru
          _
        // Predicated region
        $region57: #{epd_forward.1} parent=11 // pred_check
          %p493 = pneg %p382
        $region58: #{epd_forward.1} parent=11 // pred_check_branch
          %495 = sbr.rel (%p493) target = $region60
        $region59: #{epd_forward.1} parent=11 // pred_region
          _
        $region60: #{epd_forward.1} parent=11 // pred_fallthru
          _
        // Predicated region
        $region61: #{epd_forward.1} parent=11 // pred_check
          %p496 = pneg %p403
        $region62: #{epd_forward.1} parent=11 // pred_check_branch
          %498 = sbr.rel (%p496) target = $region64
        $region63: #{epd_forward.1} parent=11 // pred_region
          _
        $region64: #{epd_forward.1} parent=11 // pred_fallthru
          _
      $region12: #{epd_forward.1} parent=5 // pred_fallthru
        _
      %p499 = scmp.lt.s32.totalorder %s26, 2
      // Predicated region
      $region65: #{epd_forward.1} parent=5 // pred_check
        %p500 = pneg %p499
      $region66: #{epd_forward.1} parent=5 // pred_check_branch
        %502 = sbr.rel (%p500) target = $region68
      $region67: #{epd_forward.1} parent=5 // pred_region
        // Predicated region
        $region69: #{epd_forward.1} parent=67 // pred_check
          %p503 = pneg %p256
        $region70: #{epd_forward.1} parent=67 // pred_check_branch
          %505 = sbr.rel (%p503) target = $region72
        $region71: #{epd_forward.1} parent=67 // pred_region
          %p506 = scmp.lt.s32.totalorder %s26, 1
          %s507 = scalar_select %p506, %s26, 1
          %s508 = smul.addr %s507, 20
          %s509 = smul.addr %s508, 8
          %s510 = scalar_lea.vmem %s10, %s509
        $region72: #{epd_forward.1} parent=67 // pred_fallthru
          _
        // Predicated region
        $region73: #{epd_forward.1} parent=67 // pred_check
          %p511 = pneg %p282
        $region74: #{epd_forward.1} parent=67 // pred_check_branch
          %513 = sbr.rel (%p511) target = $region76
        $region75: #{epd_forward.1} parent=67 // pred_region
          %p514 = scmp.lt.s32.totalorder %s26, 1
          %s515 = scalar_select %p514, %s26, 1
          %s516 = smul.addr %s515, 8
          %s517 = scalar_lea.vmem %s11, %s516
        $region76: #{epd_forward.1} parent=67 // pred_fallthru
          _
        // Predicated region
        $region77: #{epd_forward.1} parent=67 // pred_check
          %p518 = pneg %p308
        $region78: #{epd_forward.1} parent=67 // pred_check_branch
          %520 = sbr.rel (%p518) target = $region80
        $region79: #{epd_forward.1} parent=67 // pred_region
          %p521 = scmp.lt.s32.totalorder %s26, 1
          %s522 = scalar_select %p521, %s26, 1
          %s523 = smul.addr %s522, 16
          %s524 = smul.addr %s523, 8
          %s525 = scalar_lea.vmem %s12, %s524
        $region80: #{epd_forward.1} parent=67 // pred_fallthru
          _
        // Predicated region
        $region81: #{epd_forward.1} parent=67 // pred_check
          %p526 = pneg %p334
        $region82: #{epd_forward.1} parent=67 // pred_check_branch
          %528 = sbr.rel (%p526) target = $region84
        $region83: #{epd_forward.1} parent=67 // pred_region
          %p529 = scmp.lt.s32.totalorder %s26, 1
          %s530 = scalar_select %p529, %s26, 1
          %s531 = smul.addr %s530, 8
          %s532 = scalar_lea.vmem %s13, %s531
        $region84: #{epd_forward.1} parent=67 // pred_fallthru
          _
      $region68: #{epd_forward.1} parent=5 // pred_fallthru
        _
      %p533 = scmp.le.s32.totalorder 1, %s26
      %p534 = scmp.lt.s32.totalorder %s26, 3
      %p535 = pnand %p533, %p534
      %p536 = pneg %p535
      // Predicated region
      $region85: #{epd_forward.1} parent=5 // pred_check
        _
      $region86: #{epd_forward.1} parent=5 // pred_check_branch
        %538 = sbr.rel (%p535) target = $region88
      $region87: #{epd_forward.1} parent=5 // pred_region
        %s539 = ssub.s32 %s26, 1
        %p540 = pneg %p47
        %p541 = pneg %p44
        %p542 = pneg %p68
        %p543 = pneg %p65
        %p544 = pneg %p89
        %p545 = pneg %p86
        %p546 = pneg %p110
        %p547 = pneg %p107
        %p548 = pneg %p131
        %p549 = pneg %p128
        %p550 = pneg %p152
        %p551 = pneg %p149
        %p552 = pneg %p173
        %p553 = pneg %p170
        %p554 = pneg %p194
        %p555 = pneg %p191
        %p556 = pneg %p215
        %p557 = pneg %p212
        %p558 = pneg %p236
        %p559 = pneg %p233
        %p560 = scmp.lt.s32.totalorder %s31, 1
        %s561 = scalar_select %p560, %s31, 1
        %s562 = smul.addr %s561, 20
        %s563 = smul.addr %s562, 8
        %s564 = scalar_lea.vmem %s10, %s563
        %p565 = pneg %p262
        %p566 = pneg %p259
        %p567 = scmp.lt.s32.totalorder %s31, 1
        %s568 = scalar_select %p567, %s31, 1
        %s569 = smul.addr %s568, 8
        %s570 = scalar_lea.vmem %s11, %s569
        %p571 = pneg %p288
        %p572 = pneg %p285
        %p573 = scmp.lt.s32.totalorder %s31, 1
        %s574 = scalar_select %p573, %s31, 1
        %s575 = smul.addr %s574, 16
        %s576 = smul.addr %s575, 8
        %s577 = scalar_lea.vmem %s12, %s576
        %p578 = pneg %p314
        %p579 = pneg %p311
        %p580 = scmp.lt.s32.totalorder %s31, 1
        %s581 = scalar_select %p580, %s31, 1
        %s582 = smul.addr %s581, 8
        %s583 = scalar_lea.vmem %s13, %s582
        %p584 = pneg %p340
        %p585 = pneg %p337
        %p586 = pneg %p361
        %p587 = pneg %p358
        %p588 = pneg %p382
        %p589 = pneg %p379
        %p590 = pneg %p403
        %p591 = pneg %p400
        %p592 = pneg %p424
        %p593 = pneg %p421
        %p594 = pneg %p445
        %p595 = pneg %p442
        %p596 = scmp.lt.s32.totalorder %s31, 1
        %s597 = scalar_select %p596, %s31, 1
        %s598 = smul.addr %s597, 20
        %s599 = smul.addr %s598, 8
        %s600 = scalar_lea.vmem %s10, %s599
        %p601 = scmp.lt.s32.totalorder %s31, 1
        %s602 = scalar_select %p601, %s31, 1
        %s603 = smul.addr %s602, 8
        %s604 = scalar_lea.vmem %s11, %s603
        %p605 = scmp.lt.s32.totalorder %s31, 1
        %s606 = scalar_select %p605, %s31, 1
        %s607 = smul.addr %s606, 16
        %s608 = smul.addr %s607, 8
        %s609 = scalar_lea.vmem %s12, %s608
        %p610 = scmp.lt.s32.totalorder %s31, 1
        %s611 = scalar_select %p610, %s31, 1
        %s612 = smul.addr %s611, 8
        %s613 = scalar_lea.vmem %s13, %s612
        %p615 = scmp.eq.s32.totalorder %s31, 0
        // Predicated region
        $region89: #{epd_forward.1} parent=87 // pred_check
          %p616 = pneg %p615
        $region90: #{epd_forward.1} parent=87 // pred_check_branch
          %618 = sbr.rel (%p616) target = $region92
        $region91: #{epd_forward.1} parent=87 // pred_region
          %v619 = vld [vmem:[%s0] sm:$0xff]
          %v620 = vld [vmem:[%s0 + $0x8] sm:$0xff]
          %v621 = vld [vmem:[%s4] sm:$0xff]
          %v622 = vld [vmem:[%s4 + $0x8] sm:$0xff]
          %v623 = vld [vmem:[%s6] sm:$0x1f]
          %v624 = vlaneseq
          %v625 = vshrl.u32 %v624, 7
          %v626 = vsub.s32 0, %v625
          %v627 = vrot.slane %v623, %v626
          %vm628 = vcmask 130048
          %v630 = vsel %vm628, %v619, 0
          %v633 = vsel %vm628, %v620, 0
          %635 = vmatprep.subr.mxu0 0.0
          %636 = vmatpush1.msra.mxu0 %v621
          %637 = vmatprep.subr.mxu0 0.0
          %638 = vmatpush1.msra.mxu0 %v622
          %639 = vmatprep.subr.mxu0 0.0
          %640 = vmatpush1.msra.mxu0 0.0
          %641 = vmatprep.subr.mxu0 0.0
          %642 = vmatpush1.msra.mxu0 0.0
          %643 = vmatprep.subr.mxu0 0.0
          %644 = vmatpush1.msra.mxu0 0.0
          %645 = vmatprep.subr.mxu0 0.0
          %646 = vmatpush1.msra.mxu0 0.0
          %647 = vmatprep.subr.mxu0 0.0
          %648 = vmatpush1.msra.mxu0 0.0
          %649 = vmatprep.subr.mxu0 0.0
          %650 = vmatpush1.msra.mxu0 0.0
          %651 = vmatprep.subr.mxu0 0.0
          %652 = vmatpush1.msra.mxu0 0.0
          %653 = vmatprep.subr.mxu0 0.0
          %654 = vmatpush1.msra.mxu0 0.0
          %655 = vmatprep.subr.mxu0 0.0
          %656 = vmatpush1.msra.mxu0 0.0
          %657 = vmatprep.subr.mxu0 0.0
          %658 = vmatpush1.msra.mxu0 0.0
          %659 = vmatprep.subr.mxu0 0.0
          %660 = vmatpush1.msra.mxu0 0.0
          %661 = vmatprep.subr.mxu0 0.0
          %662 = vmatpush1.msra.mxu0 0.0
          %663 = vmatprep.subr.mxu0 0.0
          %664 = vmatpush1.msra.mxu0 0.0
          %665 = vmatprep.subr.mxu0 0.0
          %666 = vmatpush1.msra.mxu0 0.0
          %667 = vmatprep.subr.mxu0 0.0
          %668 = vmatpush1.msra.mxu0 0.0
          %669 = vmatprep.subr.mxu0 0.0
          %670 = vmatpush1.msra.mxu0 0.0
          %671 = vmatprep.subr.mxu0 0.0
          %672 = vmatpush1.msra.mxu0 0.0
          %673 = vmatprep.subr.mxu0 0.0
          %674 = vmatpush1.msra.mxu0 0.0
          %675 = vmatprep.subr.mxu0 0.0
          %676 = vmatpush1.msra.mxu0 0.0
          %677 = vmatprep.subr.mxu0 0.0
          %678 = vmatpush1.msra.mxu0 0.0
          %679 = vmatprep.subr.mxu0 0.0
          %680 = vmatpush1.msra.mxu0 0.0
          %681 = vmatprep.subr.mxu0 0.0
          %682 = vmatpush1.msra.mxu0 0.0
          %683 = vmatprep.subr.mxu0 0.0
          %684 = vmatpush1.msra.mxu0 0.0
          %685 = vmatprep.subr.mxu0 0.0
          %686 = vmatpush1.msra.mxu0 0.0
          %687 = vmatprep.subr.mxu0 0.0
          %688 = vmatpush1.msra.mxu0 0.0
          %689 = vmatprep.subr.mxu0 0.0
          %690 = vmatpush1.msra.mxu0 0.0
          %691 = vmatprep.subr.mxu0 0.0
          %692 = vmatpush1.msra.mxu0 0.0
          %693 = vmatprep.subr.mxu0 0.0
          %694 = vmatpush1.msra.mxu0 0.0
          %695 = vmatprep.subr.mxu0 0.0
          %696 = vmatpush1.msra.mxu0 0.0
          %697 = vmatprep.subr.mxu0 0.0
          %698 = vmatpush1.msra.mxu0 0.0
          %699 = vmatprep.mubr.f32.mxu0 0.0
          %700 = vmatmul.mubr.f32.gmra.mrb[0].mxu0 %v630
          %v701 = vpop.f32.mrb[0].mxu0
          %v702 = vadd.f32 %v627, %v701
          %v703 = vpop.f32.mrb[0].mxu0
          %704 = vmatprep.mubr.f32.mxu0 0.0
          %705 = vmatmul.mubr.f32.gmra.mrb[0].mxu0 %v633
          %v706 = vpop.f32.mrb[0].mxu0
          %v707 = vadd.f32 %v627, %v706
          %v708 = vpop.f32.mrb[0].mxu0
          %709 = vdwg.mxu0
          %v710 = vmax.f32 %v702, 0.0
          %v711 = vmax.f32 %v707, 0.0
          %v712 = vld [vmem:[%s5] sm:$0xff]
          %v713 = vld [vmem:[%s5 + $0x8] sm:$0xff]
          %v714 = vld [vmem:[%s5 + $0x10] sm:$0xff]
          %v715 = vld [vmem:[%s5 + $0x18] sm:$0xff]
          %v716 = vlaneseq
          %v717 = vshrl.u32 %v716, 7
          %v718 = vsub.s32 1, %v717
          %v719 = vrot.slane %v623, %v718
          %vm720 = vcmask 261120
          %v722 = vsel %vm720, %v710, 0
          %v725 = vsel %vm720, %v711, 0
          %727 = vmatprep.subr.mxu0 0.0
          %728 = vmatpush1.msra.mxu0 %v712
          %729 = vmatprep.subr.mxu0 0.0
          %730 = vmatpush1.msra.mxu0 %v713
          %731 = vmatprep.subr.mxu0 0.0
          %732 = vmatpush1.msra.mxu0 %v714
          %733 = vmatprep.subr.mxu0 0.0
          %734 = vmatpush1.msra.mxu0 %v715
          %735 = vmatprep.subr.mxu0 0.0
          %736 = vmatpush1.msra.mxu0 0.0
          %737 = vmatprep.subr.mxu0 0.0
          %738 = vmatpush1.msra.mxu0 0.0
          %739 = vmatprep.subr.mxu0 0.0
          %740 = vmatpush1.msra.mxu0 0.0
          %741 = vmatprep.subr.mxu0 0.0
          %742 = vmatpush1.msra.mxu0 0.0
          %743 = vmatprep.subr.mxu0 0.0
          %744 = vmatpush1.msra.mxu0 0.0
          %745 = vmatprep.subr.mxu0 0.0
          %746 = vmatpush1.msra.mxu0 0.0
          %747 = vmatprep.subr.mxu0 0.0
          %748 = vmatpush1.msra.mxu0 0.0
          %749 = vmatprep.subr.mxu0 0.0
          %750 = vmatpush1.msra.mxu0 0.0
          %751 = vmatprep.subr.mxu0 0.0
          %752 = vmatpush1.msra.mxu0 0.0
          %753 = vmatprep.subr.mxu0 0.0
          %754 = vmatpush1.msra.mxu0 0.0
          %755 = vmatprep.subr.mxu0 0.0
          %756 = vmatpush1.msra.mxu0 0.0
          %757 = vmatprep.subr.mxu0 0.0
          %758 = vmatpush1.msra.mxu0 0.0
          %759 = vmatprep.subr.mxu0 0.0
          %760 = vmatpush1.msra.mxu0 0.0
          %761 = vmatprep.subr.mxu0 0.0
          %762 = vmatpush1.msra.mxu0 0.0
          %763 = vmatprep.subr.mxu0 0.0
          %764 = vmatpush1.msra.mxu0 0.0
          %765 = vmatprep.subr.mxu0 0.0
          %766 = vmatpush1.msra.mxu0 0.0
          %767 = vmatprep.subr.mxu0 0.0
          %768 = vmatpush1.msra.mxu0 0.0
          %769 = vmatprep.subr.mxu0 0.0
          %770 = vmatpush1.msra.mxu0 0.0
          %771 = vmatprep.subr.mxu0 0.0
          %772 = vmatpush1.msra.mxu0 0.0
          %773 = vmatprep.subr.mxu0 0.0
          %774 = vmatpush1.msra.mxu0 0.0
          %775 = vmatprep.subr.mxu0 0.0
          %776 = vmatpush1.msra.mxu0 0.0
          %777 = vmatprep.subr.mxu0 0.0
          %778 = vmatpush1.msra.mxu0 0.0
          %779 = vmatprep.subr.mxu0 0.0
          %780 = vmatpush1.msra.mxu0 0.0
          %781 = vmatprep.subr.mxu0 0.0
          %782 = vmatpush1.msra.mxu0 0.0
          %783 = vmatprep.subr.mxu0 0.0
          %784 = vmatpush1.msra.mxu0 0.0
          %785 = vmatprep.subr.mxu0 0.0
          %786 = vmatpush1.msra.mxu0 0.0
          %787 = vmatprep.subr.mxu0 0.0
          %788 = vmatpush1.msra.mxu0 0.0
          %789 = vmatprep.subr.mxu0 0.0
          %790 = vmatpush1.msra.mxu0 0.0
          %791 = vmatprep.mubr.f32.mxu0 0.0
          %792 = vmatmul.mubr.f32.gmra.mrb[0].mxu0 %v722
          %v793 = vpop.f32.mrb[0].mxu0
          %v794 = vadd.f32 %v719, %v793
          %v795 = vpop.f32.mrb[0].mxu0
          %796 = vmatprep.mubr.f32.mxu0 0.0
          %797 = vmatmul.mubr.f32.gmra.mrb[0].mxu0 %v725
          %v798 = vpop.f32.mrb[0].mxu0
          %v799 = vadd.f32 %v719, %v798
          %v800 = vpop.f32.mrb[0].mxu0
          %801 = vdwg.mxu0
          %v802 = vmax.f32 %v794, 0.0
          %v803 = vmax.f32 %v799, 0.0
          %s804 = scalar_lea.vmem %s5, 32
          %v805 = vld [vmem:[%s804] sm:$0xff]
          %v806 = vld [vmem:[%s804 + $0x8] sm:$0xff]
          %v807 = vld [vmem:[%s804 + $0x10] sm:$0xff]
          %v808 = vld [vmem:[%s804 + $0x18] sm:$0xff]
          %v809 = vlaneseq
          %v810 = vshrl.u32 %v809, 7
          %v811 = vsub.s32 2, %v810
          %v812 = vrot.slane %v623, %v811
          %v814 = vsel %vm720, %v802, 0
          %v817 = vsel %vm720, %v803, 0
          %819 = vmatprep.subr.mxu0 0.0
          %820 = vmatpush1.msra.mxu0 %v805
          %821 = vmatprep.subr.mxu0 0.0
          %822 = vmatpush1.msra.mxu0 %v806
          %823 = vmatprep.subr.mxu0 0.0
          %824 = vmatpush1.msra.mxu0 %v807
          %825 = vmatprep.subr.mxu0 0.0
          %826 = vmatpush1.msra.mxu0 %v808
          %827 = vmatprep.subr.mxu0 0.0
          %828 = vmatpush1.msra.mxu0 0.0
          %829 = vmatprep.subr.mxu0 0.0
          %830 = vmatpush1.msra.mxu0 0.0
          %831 = vmatprep.subr.mxu0 0.0
          %832 = vmatpush1.msra.mxu0 0.0
          %833 = vmatprep.subr.mxu0 0.0
          %834 = vmatpush1.msra.mxu0 0.0
          %835 = vmatprep.subr.mxu0 0.0
          %836 = vmatpush1.msra.mxu0 0.0
          %837 = vmatprep.subr.mxu0 0.0
          %838 = vmatpush1.msra.mxu0 0.0
          %839 = vmatprep.subr.mxu0 0.0
          %840 = vmatpush1.msra.mxu0 0.0
          %841 = vmatprep.subr.mxu0 0.0
          %842 = vmatpush1.msra.mxu0 0.0
          %843 = vmatprep.subr.mxu0 0.0
          %844 = vmatpush1.msra.mxu0 0.0
          %845 = vmatprep.subr.mxu0 0.0
          %846 = vmatpush1.msra.mxu0 0.0
          %847 = vmatprep.subr.mxu0 0.0
          %848 = vmatpush1.msra.mxu0 0.0
          %849 = vmatprep.subr.mxu0 0.0
          %850 = vmatpush1.msra.mxu0 0.0
          %851 = vmatprep.subr.mxu0 0.0
          %852 = vmatpush1.msra.mxu0 0.0
          %853 = vmatprep.subr.mxu0 0.0
          %854 = vmatpush1.msra.mxu0 0.0
          %855 = vmatprep.subr.mxu0 0.0
          %856 = vmatpush1.msra.mxu0 0.0
          %857 = vmatprep.subr.mxu0 0.0
          %858 = vmatpush1.msra.mxu0 0.0
          %859 = vmatprep.subr.mxu0 0.0
          %860 = vmatpush1.msra.mxu0 0.0
          %861 = vmatprep.subr.mxu0 0.0
          %862 = vmatpush1.msra.mxu0 0.0
          %863 = vmatprep.subr.mxu0 0.0
          %864 = vmatpush1.msra.mxu0 0.0
          %865 = vmatprep.subr.mxu0 0.0
          %866 = vmatpush1.msra.mxu0 0.0
          %867 = vmatprep.subr.mxu0 0.0
          %868 = vmatpush1.msra.mxu0 0.0
          %869 = vmatprep.subr.mxu0 0.0
          %870 = vmatpush1.msra.mxu0 0.0
          %871 = vmatprep.subr.mxu0 0.0
          %872 = vmatpush1.msra.mxu0 0.0
          %873 = vmatprep.subr.mxu0 0.0
          %874 = vmatpush1.msra.mxu0 0.0
          %875 = vmatprep.subr.mxu0 0.0
          %876 = vmatpush1.msra.mxu0 0.0
          %877 = vmatprep.subr.mxu0 0.0
          %878 = vmatpush1.msra.mxu0 0.0
          %879 = vmatprep.subr.mxu0 0.0
          %880 = vmatpush1.msra.mxu0 0.0
          %881 = vmatprep.subr.mxu0 0.0
          %882 = vmatpush1.msra.mxu0 0.0
          %883 = vmatprep.mubr.f32.mxu0 0.0
          %884 = vmatmul.mubr.f32.gmra.mrb[0].mxu0 %v814
          %v885 = vpop.f32.mrb[0].mxu0
          %v886 = vadd.f32 %v812, %v885
          %v887 = vpop.f32.mrb[0].mxu0
          %888 = vmatprep.mubr.f32.mxu0 0.0
          %889 = vmatmul.mubr.f32.gmra.mrb[0].mxu0 %v817
          %v890 = vpop.f32.mrb[0].mxu0
          %v891 = vadd.f32 %v812, %v890
          %v892 = vpop.f32.mrb[0].mxu0
          %893 = vdwg.mxu0
          %v894 = vsel %vm720, %v886, 0.0
          %895 = vadd.xlane.f32.xlu0 %v894
          %v896 = vpop.xlane.xlu0 %895
          %v897 = vsel %vm720, %v891, 0.0
          %898 = vadd.xlane.f32.xlu0 %v897
          %v899 = vpop.xlane.xlu0 %898
          %v900 = vrcp.pop 32.0
          %v901 = vmul.f32 %v896, %v900
          %v902 = vmul.f32 %v899, %v900
          %v903 = vmul.f32 %v886, %v886
          %v904 = vmul.f32 %v891, %v891
          %v905 = vsel %vm720, %v903, 0.0
          %906 = vadd.xlane.f32.xlu0 %v905
          %v907 = vpop.xlane.xlu0 %906
          %v908 = vsel %vm720, %v904, 0.0
          %909 = vadd.xlane.f32.xlu0 %v908
          %v910 = vpop.xlane.xlu0 %909
          %v911 = vmul.f32 %v907, %v900
          %v912 = vmul.f32 %v910, %v900
          %v913 = vmul.f32 %v901, %v901
          %v914 = vmul.f32 %v902, %v902
          %v915 = vsub.f32 %v911, %v913
          %v916 = vsub.f32 %v912, %v914
          %v917 = vsub.f32 %v886, %v901
          %v918 = vsub.f32 %v891, %v902
          %v919 = vadd.f32 %v915, 1e-05
          %v920 = vadd.f32 %v916, 1e-05
          %v921 = vrsqrt.pop %v919
          %v922 = vrsqrt.pop %v920
          %v923 = vmul.f32 %v917, %v921
          %v924 = vmul.f32 %v918, %v922
          %v925 = vlaneseq
          %v926 = vshrl.u32 %v925, 7
          %v927 = vsub.s32 3, %v926
          %v928 = vrot.slane %v623, %v927
          %v929 = vmul.f32 %v923, %v928
          %v930 = vmul.f32 %v924, %v928
          %v931 = vlaneseq
          %v932 = vshrl.u32 %v931, 7
          %v933 = vsub.s32 4, %v932
          %v934 = vrot.slane %v623, %v933
          %v935 = vadd.f32 %v929, %v934
          %v936 = vadd.f32 %v930, %v934
          %937 = vst.msk [vmem:[#allocation2] sm:$0xff] %vm720, %v935
          %938 = vst.msk [vmem:[#allocation2 + $0x8] sm:$0xff] %vm720, %v936
          %v939 = vld [vmem:[%s1] sm:$0xff]
          %v940 = vld [vmem:[%s1 + $0x8] sm:$0xff]
          %v941 = vld [vmem:[%s1 + $0x10] sm:$0xff]
          %v942 = vld [vmem:[%s1 + $0x18] sm:$0xff]
          %v943 = vld [vmem:[%s7] sm:$0xff]
          %v944 = vld [vmem:[%s7 + $0x8] sm:$0xff]
          %v945 = vld [vmem:[%s9] sm:$0x1f]
          %v946 = vlaneseq
          %v947 = vshrl.u32 %v946, 7
          %v948 = vsub.s32 0, %v947
          %v949 = vrot.slane %v945, %v948
          %v951 = vsel %vm628, %v939, 0
          %v954 = vsel %vm628, %v940, 0
          %v957 = vsel %vm628, %v941, 0
          %v960 = vsel %vm628, %v942, 0
          %962 = vmatprep.subr.mxu0 0.0
          %963 = vmatpush1.msra.mxu0 %v943
          %964 = vmatprep.subr.mxu0 0.0
          %965 = vmatpush1.msra.mxu0 %v944
          %966 = vmatprep.subr.mxu0 0.0
          %967 = vmatpush1.msra.mxu0 0.0
          %968 = vmatprep.subr.mxu0 0.0
          %969 = vmatpush1.msra.mxu0 0.0
          %970 = vmatprep.subr.mxu0 0.0
          %971 = vmatpush1.msra.mxu0 0.0
          %972 = vmatprep.subr.mxu0 0.0
          %973 = vmatpush1.msra.mxu0 0.0
          %974 = vmatprep.subr.mxu0 0.0
          %975 = vmatpush1.msra.mxu0 0.0
          %976 = vmatprep.subr.mxu0 0.0
          %977 = vmatpush1.msra.mxu0 0.0
          %978 = vmatprep.subr.mxu0 0.0
          %979 = vmatpush1.msra.mxu0 0.0
          %980 = vmatprep.subr.mxu0 0.0
          %981 = vmatpush1.msra.mxu0 0.0
          %982 = vmatprep.subr.mxu0 0.0
          %983 = vmatpush1.msra.mxu0 0.0
          %984 = vmatprep.subr.mxu0 0.0
          %985 = vmatpush1.msra.mxu0 0.0
          %986 = vmatprep.subr.mxu0 0.0
          %987 = vmatpush1.msra.mxu0 0.0
          %988 = vmatprep.subr.mxu0 0.0
          %989 = vmatpush1.msra.mxu0 0.0
          %990 = vmatprep.subr.mxu0 0.0
          %991 = vmatpush1.msra.mxu0 0.0
          %992 = vmatprep.subr.mxu0 0.0
          %993 = vmatpush1.msra.mxu0 0.0
          %994 = vmatprep.subr.mxu0 0.0
          %995 = vmatpush1.msra.mxu0 0.0
          %996 = vmatprep.subr.mxu0 0.0
          %997 = vmatpush1.msra.mxu0 0.0
          %998 = vmatprep.subr.mxu0 0.0
          %999 = vmatpush1.msra.mxu0 0.0
          %1000 = vmatprep.subr.mxu0 0.0
          %1001 = vmatpush1.msra.mxu0 0.0
          %1002 = vmatprep.subr.mxu0 0.0
          %1003 = vmatpush1.msra.mxu0 0.0
          %1004 = vmatprep.subr.mxu0 0.0
          %1005 = vmatpush1.msra.mxu0 0.0
          %1006 = vmatprep.subr.mxu0 0.0
          %1007 = vmatpush1.msra.mxu0 0.0
          %1008 = vmatprep.subr.mxu0 0.0
          %1009 = vmatpush1.msra.mxu0 0.0
          %1010 = vmatprep.subr.mxu0 0.0
          %1011 = vmatpush1.msra.mxu0 0.0
          %1012 = vmatprep.subr.mxu0 0.0
          %1013 = vmatpush1.msra.mxu0 0.0
          %1014 = vmatprep.subr.mxu0 0.0
          %1015 = vmatpush1.msra.mxu0 0.0
          %1016 = vmatprep.subr.mxu0 0.0
          %1017 = vmatpush1.msra.mxu0 0.0
          %1018 = vmatprep.subr.mxu0 0.0
          %1019 = vmatpush1.msra.mxu0 0.0
          %1020 = vmatprep.subr.mxu0 0.0
          %1021 = vmatpush1.msra.mxu0 0.0
          %1022 = vmatprep.subr.mxu0 0.0
          %1023 = vmatpush1.msra.mxu0 0.0
          %1024 = vmatprep.subr.mxu0 0.0
          %1025 = vmatpush1.msra.mxu0 0.0
          %1026 = vmatprep.mubr.f32.mxu0 0.0
          %1027 = vmatmul.mubr.f32.gmra.mrb[0].mxu0 %v951
          %v1028 = vpop.f32.mrb[0].mxu0
          %v1029 = vadd.f32 %v949, %v1028
          %v1030 = vpop.f32.mrb[0].mxu0
          %1031 = vmatprep.mubr.f32.mxu0 0.0
          %1032 = vmatmul.mubr.f32.gmra.mrb[0].mxu0 %v954
          %v1033 = vpop.f32.mrb[0].mxu0
          %v1034 = vadd.f32 %v949, %v1033
          %v1035 = vpop.f32.mrb[0].mxu0
          %1036 = vmatprep.mubr.f32.mxu0 0.0
          %1037 = vmatmul.mubr.f32.gmra.mrb[0].mxu0 %v957
          %v1038 = vpop.f32.mrb[0].mxu0
          %v1039 = vadd.f32 %v949, %v1038
          %v1040 = vpop.f32.mrb[0].mxu0
          %1041 = vmatprep.mubr.f32.mxu0 0.0
          %1042 = vmatmul.mubr.f32.gmra.mrb[0].mxu0 %v960
          %v1043 = vpop.f32.mrb[0].mxu0
          %v1044 = vadd.f32 %v949, %v1043
          %v1045 = vpop.f32.mrb[0].mxu0
          %1046 = vdwg.mxu0
          %v1047 = vmax.f32 %v1029, 0.0
          %v1048 = vmax.f32 %v1034, 0.0
          %v1049 = vmax.f32 %v1039, 0.0
          %v1050 = vmax.f32 %v1044, 0.0
          %v1051 = vld [vmem:[%s8] sm:$0xff]
          %v1052 = vld [vmem:[%s8 + $0x8] sm:$0xff]
          %v1053 = vld [vmem:[%s8 + $0x10] sm:$0xff]
          %v1054 = vld [vmem:[%s8 + $0x18] sm:$0xff]
          %v1055 = vlaneseq
          %v1056 = vshrl.u32 %v1055, 7
          %v1057 = vsub.s32 1, %v1056
          %v1058 = vrot.slane %v945, %v1057
          %v1060 = vsel %vm720, %v1047, 0
          %v1063 = vsel %vm720, %v1048, 0
          %v1066 = vsel %vm720, %v1049, 0
          %v1069 = vsel %vm720, %v1050, 0
          %1071 = vmatprep.subr.mxu0 0.0
          %1072 = vmatpush1.msra.mxu0 %v1051
          %1073 = vmatprep.subr.mxu0 0.0
          %1074 = vmatpush1.msra.mxu0 %v1052
          %1075 = vmatprep.subr.mxu0 0.0
          %1076 = vmatpush1.msra.mxu0 %v1053
          %1077 = vmatprep.subr.mxu0 0.0
          %1078 = vmatpush1.msra.mxu0 %v1054
          %1079 = vmatprep.subr.mxu0 0.0
          %1080 = vmatpush1.msra.mxu0 0.0
          %1081 = vmatprep.subr.mxu0 0.0
          %1082 = vmatpush1.msra.mxu0 0.0
          %1083 = vmatprep.subr.mxu0 0.0
          %1084 = vmatpush1.msra.mxu0 0.0
          %1085 = vmatprep.subr.mxu0 0.0
          %1086 = vmatpush1.msra.mxu0 0.0
          %1087 = vmatprep.subr.mxu0 0.0
          %1088 = vmatpush1.msra.mxu0 0.0
          %1089 = vmatprep.subr.mxu0 0.0
          %1090 = vmatpush1.msra.mxu0 0.0
          %1091 = vmatprep.subr.mxu0 0.0
          %1092 = vmatpush1.msra.mxu0 0.0
          %1093 = vmatprep.subr.mxu0 0.0
          %1094 = vmatpush1.msra.mxu0 0.0
          %1095 = vmatprep.subr.mxu0 0.0
          %1096 = vmatpush1.msra.mxu0 0.0
          %1097 = vmatprep.subr.mxu0 0.0
          %1098 = vmatpush1.msra.mxu0 0.0
          %1099 = vmatprep.subr.mxu0 0.0
          %1100 = vmatpush1.msra.mxu0 0.0
          %1101 = vmatprep.subr.mxu0 0.0
          %1102 = vmatpush1.msra.mxu0 0.0
          %1103 = vmatprep.subr.mxu0 0.0
          %1104 = vmatpush1.msra.mxu0 0.0
          %1105 = vmatprep.subr.mxu0 0.0
          %1106 = vmatpush1.msra.mxu0 0.0
          %1107 = vmatprep.subr.mxu0 0.0
          %1108 = vmatpush1.msra.mxu0 0.0
          %1109 = vmatprep.subr.mxu0 0.0
          %1110 = vmatpush1.msra.mxu0 0.0
          %1111 = vmatprep.subr.mxu0 0.0
          %1112 = vmatpush1.msra.mxu0 0.0
          %1113 = vmatprep.subr.mxu0 0.0
          %1114 = vmatpush1.msra.mxu0 0.0
          %1115 = vmatprep.subr.mxu0 0.0
          %1116 = vmatpush1.msra.mxu0 0.0
          %1117 = vmatprep.subr.mxu0 0.0
          %1118 = vmatpush1.msra.mxu0 0.0
          %1119 = vmatprep.subr.mxu0 0.0
          %1120 = vmatpush1.msra.mxu0 0.0
          %1121 = vmatprep.subr.mxu0 0.0
          %1122 = vmatpush1.msra.mxu0 0.0
          %1123 = vmatprep.subr.mxu0 0.0
          %1124 = vmatpush1.msra.mxu0 0.0
          %1125 = vmatprep.subr.mxu0 0.0
          %1126 = vmatpush1.msra.mxu0 0.0
          %1127 = vmatprep.subr.mxu0 0.0
          %1128 = vmatpush1.msra.mxu0 0.0
          %1129 = vmatprep.subr.mxu0 0.0
          %1130 = vmatpush1.msra.mxu0 0.0
          %1131 = vmatprep.subr.mxu0 0.0
          %1132 = vmatpush1.msra.mxu0 0.0
          %1133 = vmatprep.subr.mxu0 0.0
          %1134 = vmatpush1.msra.mxu0 0.0
          %1135 = vmatprep.mubr.f32.mxu0 0.0
          %1136 = vmatmul.mubr.f32.gmra.mrb[0].mxu0 %v1060
          %v1137 = vpop.f32.mrb[0].mxu0
          %v1138 = vadd.f32 %v1058, %v1137
          %v1139 = vpop.f32.mrb[0].mxu0
          %1140 = vmatprep.mubr.f32.mxu0 0.0
          %1141 = vmatmul.mubr.f32.gmra.mrb[0].mxu0 %v1063
          %v1142 = vpop.f32.mrb[0].mxu0
          %v1143 = vadd.f32 %v1058, %v1142
          %v1144 = vpop.f32.mrb[0].mxu0
          %1145 = vmatprep.mubr.f32.mxu0 0.0
          %1146 = vmatmul.mubr.f32.gmra.mrb[0].mxu0 %v1066
          %v1147 = vpop.f32.mrb[0].mxu0
          %v1148 = vadd.f32 %v1058, %v1147
          %v1149 = vpop.f32.mrb[0].mxu0
          %1150 = vmatprep.mubr.f32.mxu0 0.0
          %1151 = vmatmul.mubr.f32.gmra.mrb[0].mxu0 %v1069
          %v1152 = vpop.f32.mrb[0].mxu0
          %v1153 = vadd.f32 %v1058, %v1152
          %v1154 = vpop.f32.mrb[0].mxu0
          %1155 = vdwg.mxu0
          %v1156 = vmax.f32 %v1138, 0.0
          %v1157 = vmax.f32 %v1143, 0.0
          %v1158 = vmax.f32 %v1148, 0.0
          %v1159 = vmax.f32 %v1153, 0.0
          %s1160 = scalar_lea.vmem %s8, 32
          %v1161 = vld [vmem:[%s1160] sm:$0xff]
          %v1162 = vld [vmem:[%s1160 + $0x8] sm:$0xff]
          %v1163 = vld [vmem:[%s1160 + $0x10] sm:$0xff]
          %v1164 = vld [vmem:[%s1160 + $0x18] sm:$0xff]
          %v1165 = vlaneseq
          %v1166 = vshrl.u32 %v1165, 7
          %v1167 = vsub.s32 2, %v1166
          %v1168 = vrot.slane %v945, %v1167
          %v1170 = vsel %vm720, %v1156, 0
          %v1173 = vsel %vm720, %v1157, 0
          %v1176 = vsel %vm720, %v1158, 0
          %v1179 = vsel %vm720, %v1159, 0
          %1181 = vmatprep.subr.mxu0 0.0
          %1182 = vmatpush1.msra.mxu0 %v1161
          %1183 = vmatprep.subr.mxu0 0.0
          %1184 = vmatpush1.msra.mxu0 %v1162
          %1185 = vmatprep.subr.mxu0 0.0
          %1186 = vmatpush1.msra.mxu0 %v1163
          %1187 = vmatprep.subr.mxu0 0.0
          %1188 = vmatpush1.msra.mxu0 %v1164
          %1189 = vmatprep.subr.mxu0 0.0
          %1190 = vmatpush1.msra.mxu0 0.0
          %1191 = vmatprep.subr.mxu0 0.0
          %1192 = vmatpush1.msra.mxu0 0.0
          %1193 = vmatprep.subr.mxu0 0.0
          %1194 = vmatpush1.msra.mxu0 0.0
          %1195 = vmatprep.subr.mxu0 0.0
          %1196 = vmatpush1.msra.mxu0 0.0
          %1197 = vmatprep.subr.mxu0 0.0
          %1198 = vmatpush1.msra.mxu0 0.0
          %1199 = vmatprep.subr.mxu0 0.0
          %1200 = vmatpush1.msra.mxu0 0.0
          %1201 = vmatprep.subr.mxu0 0.0
          %1202 = vmatpush1.msra.mxu0 0.0
          %1203 = vmatprep.subr.mxu0 0.0
          %1204 = vmatpush1.msra.mxu0 0.0
          %1205 = vmatprep.subr.mxu0 0.0
          %1206 = vmatpush1.msra.mxu0 0.0
          %1207 = vmatprep.subr.mxu0 0.0
          %1208 = vmatpush1.msra.mxu0 0.0
          %1209 = vmatprep.subr.mxu0 0.0
          %1210 = vmatpush1.msra.mxu0 0.0
          %1211 = vmatprep.subr.mxu0 0.0
          %1212 = vmatpush1.msra.mxu0 0.0
          %1213 = vmatprep.subr.mxu0 0.0
          %1214 = vmatpush1.msra.mxu0 0.0
          %1215 = vmatprep.subr.mxu0 0.0
          %1216 = vmatpush1.msra.mxu0 0.0
          %1217 = vmatprep.subr.mxu0 0.0
          %1218 = vmatpush1.msra.mxu0 0.0
          %1219 = vmatprep.subr.mxu0 0.0
          %1220 = vmatpush1.msra.mxu0 0.0
          %1221 = vmatprep.subr.mxu0 0.0
          %1222 = vmatpush1.msra.mxu0 0.0
          %1223 = vmatprep.subr.mxu0 0.0
          %1224 = vmatpush1.msra.mxu0 0.0
          %1225 = vmatprep.subr.mxu0 0.0
          %1226 = vmatpush1.msra.mxu0 0.0
          %1227 = vmatprep.subr.mxu0 0.0
          %1228 = vmatpush1.msra.mxu0 0.0
          %1229 = vmatprep.subr.mxu0 0.0
          %1230 = vmatpush1.msra.mxu0 0.0
          %1231 = vmatprep.subr.mxu0 0.0
          %1232 = vmatpush1.msra.mxu0 0.0
          %1233 = vmatprep.subr.mxu0 0.0
          %1234 = vmatpush1.msra.mxu0 0.0
          %1235 = vmatprep.subr.mxu0 0.0
          %1236 = vmatpush1.msra.mxu0 0.0
          %1237 = vmatprep.subr.mxu0 0.0
          %1238 = vmatpush1.msra.mxu0 0.0
          %1239 = vmatprep.subr.mxu0 0.0
          %1240 = vmatpush1.msra.mxu0 0.0
          %1241 = vmatprep.subr.mxu0 0.0
          %1242 = vmatpush1.msra.mxu0 0.0
          %1243 = vmatprep.subr.mxu0 0.0
          %1244 = vmatpush1.msra.mxu0 0.0
          %1245 = vmatprep.mubr.f32.mxu0 0.0
          %1246 = vmatmul.mubr.f32.gmra.mrb[0].mxu0 %v1170
          %v1247 = vpop.f32.mrb[0].mxu0
          %v1248 = vadd.f32 %v1168, %v1247
          %v1249 = vpop.f32.mrb[0].mxu0
          %1250 = vmatprep.mubr.f32.mxu0 0.0
          %1251 = vmatmul.mubr.f32.gmra.mrb[0].mxu0 %v1173
          %v1252 = vpop.f32.mrb[0].mxu0
          %v1253 = vadd.f32 %v1168, %v1252
          %v1254 = vpop.f32.mrb[0].mxu0
          %1255 = vmatprep.mubr.f32.mxu0 0.0
          %1256 = vmatmul.mubr.f32.gmra.mrb[0].mxu0 %v1176
          %v1257 = vpop.f32.mrb[0].mxu0
          %v1258 = vadd.f32 %v1168, %v1257
          %v1259 = vpop.f32.mrb[0].mxu0
          %1260 = vmatprep.mubr.f32.mxu0 0.0
          %1261 = vmatmul.mubr.f32.gmra.mrb[0].mxu0 %v1179
          %v1262 = vpop.f32.mrb[0].mxu0
          %v1263 = vadd.f32 %v1168, %v1262
          %v1264 = vpop.f32.mrb[0].mxu0
          %1265 = vdwg.mxu0
          %v1266 = vsel %vm720, %v1248, 0.0
          %1267 = vadd.xlane.f32.xlu0 %v1266
          %v1268 = vpop.xlane.xlu0 %1267
          %v1269 = vsel %vm720, %v1253, 0.0
          %1270 = vadd.xlane.f32.xlu0 %v1269
          %v1271 = vpop.xlane.xlu0 %1270
          %v1272 = vsel %vm720, %v1258, 0.0
          %1273 = vadd.xlane.f32.xlu0 %v1272
          %v1274 = vpop.xlane.xlu0 %1273
          %v1275 = vsel %vm720, %v1263, 0.0
          %1276 = vadd.xlane.f32.xlu0 %v1275
          %v1277 = vpop.xlane.xlu0 %1276
          %v1278 = vmul.f32 %v1268, %v900
          %v1279 = vmul.f32 %v1271, %v900
          %v1280 = vmul.f32 %v1274, %v900
          %v1281 = vmul.f32 %v1277, %v900
          %v1282 = vmul.f32 %v1248, %v1248
          %v1283 = vmul.f32 %v1253, %v1253
          %v1284 = vmul.f32 %v1258, %v1258
          %v1285 = vmul.f32 %v1263, %v1263
          %v1286 = vsel %vm720, %v1282, 0.0
          %1287 = vadd.xlane.f32.xlu0 %v1286
          %v1288 = vpop.xlane.xlu0 %1287
          %v1289 = vsel %vm720, %v1283, 0.0
          %1290 = vadd.xlane.f32.xlu0 %v1289
          %v1291 = vpop.xlane.xlu0 %1290
          %v1292 = vsel %vm720, %v1284, 0.0
          %1293 = vadd.xlane.f32.xlu0 %v1292
          %v1294 = vpop.xlane.xlu0 %1293
          %v1295 = vsel %vm720, %v1285, 0.0
          %1296 = vadd.xlane.f32.xlu0 %v1295
          %v1297 = vpop.xlane.xlu0 %1296
          %v1298 = vmul.f32 %v1288, %v900
          %v1299 = vmul.f32 %v1291, %v900
          %v1300 = vmul.f32 %v1294, %v900
          %v1301 = vmul.f32 %v1297, %v900
          %v1302 = vmul.f32 %v1278, %v1278
          %v1303 = vmul.f32 %v1279, %v1279
          %v1304 = vmul.f32 %v1280, %v1280
          %v1305 = vmul.f32 %v1281, %v1281
          %v1306 = vsub.f32 %v1298, %v1302
          %v1307 = vsub.f32 %v1299, %v1303
          %v1308 = vsub.f32 %v1300, %v1304
          %v1309 = vsub.f32 %v1301, %v1305
          %v1310 = vsub.f32 %v1248, %v1278
          %v1311 = vsub.f32 %v1253, %v1279
          %v1312 = vsub.f32 %v1258, %v1280
          %v1313 = vsub.f32 %v1263, %v1281
          %v1314 = vadd.f32 %v1306, 1e-05
          %v1315 = vadd.f32 %v1307, 1e-05
          %v1316 = vadd.f32 %v1308, 1e-05
          %v1317 = vadd.f32 %v1309, 1e-05
          %v1318 = vrsqrt.pop %v1314
          %v1319 = vrsqrt.pop %v1315
          %v1320 = vrsqrt.pop %v1316
          %v1321 = vrsqrt.pop %v1317
          %v1322 = vmul.f32 %v1310, %v1318
          %v1323 = vmul.f32 %v1311, %v1319
          %v1324 = vmul.f32 %v1312, %v1320
          %v1325 = vmul.f32 %v1313, %v1321
          %v1326 = vlaneseq
          %v1327 = vshrl.u32 %v1326, 7
          %v1328 = vsub.s32 3, %v1327
          %v1329 = vrot.slane %v945, %v1328
          %v1330 = vmul.f32 %v1322, %v1329
          %v1331 = vmul.f32 %v1323, %v1329
          %v1332 = vmul.f32 %v1324, %v1329
          %v1333 = vmul.f32 %v1325, %v1329
          %v1334 = vlaneseq
          %v1335 = vshrl.u32 %v1334, 7
          %v1336 = vsub.s32 4, %v1335
          %v1337 = vrot.slane %v945, %v1336
          %v1338 = vadd.f32 %v1330, %v1337
          %v1339 = vadd.f32 %v1331, %v1337
          %v1340 = vadd.f32 %v1332, %v1337
          %v1341 = vadd.f32 %v1333, %v1337
          %1342 = vst.msk [vmem:[#allocation3] sm:$0xff] %vm720, %v1338
          %1343 = vst.msk [vmem:[#allocation3 + $0x8] sm:$0xff] %vm720, %v1339
          %1344 = vst.msk [vmem:[#allocation3 + $0x10] sm:$0xff] %vm720, %v1340
          %1345 = vst.msk [vmem:[#allocation3 + $0x18] sm:$0xff] %vm720, %v1341
          %v1346 = vld [vmem:[%s2] sm:$0xff]
          %v1347 = vld [vmem:[%s2 + $0x8] sm:$0xff]
          %v1348 = vld [vmem:[%s2 + $0x10] sm:$0xff]
          %v1349 = vld [vmem:[%s2 + $0x18] sm:$0xff]
          %v1350 = vlaneseq
          %v1351 = vand.u32 %v1350, 127
          %1352 = vset.pattern.permute.xlu0 0
          %1353 = vperm.xlu0 %1352, %v1346
          %v1354 = vpop.permute.xlu0 %1353
          %1355 = vset.pattern.permute.xlu0 0
          %1356 = vperm.xlu0 %1355, %v1347
          %v1357 = vpop.permute.xlu0 %1356
          %1358 = vset.pattern.permute.xlu0 0
          %1359 = vperm.xlu0 %1358, %v1348
          %v1360 = vpop.permute.xlu0 %1359
          %1361 = vset.pattern.permute.xlu0 0
          %1362 = vperm.xlu0 %1361, %v1349
          %v1363 = vpop.permute.xlu0 %1362
          %vm1364 = vcmp.eq.s32.totalorder %v1351, %v1354
          %vm1365 = vcmp.eq.s32.totalorder %v1351, %v1357
          %vm1366 = vcmp.eq.s32.totalorder %v1351, %v1360
          %vm1367 = vcmp.eq.s32.totalorder %v1351, %v1363
          %v1368 = vsel %vm1364, 1, 0
          %v1369 = vsel %vm1365, 1, 0
          %v1370 = vsel %vm1366, 1, 0
          %v1371 = vsel %vm1367, 1, 0
          %v1372 = vcvt.s32.f32 %v1368
          %v1373 = vcvt.s32.f32 %v1369
          %v1374 = vcvt.s32.f32 %v1370
          %v1375 = vcvt.s32.f32 %v1371
          %v1376 = vpack.c.bf16 %v1373, %v1372
          %v1377 = vpack.c.bf16 %v1375, %v1374
          %1378 = vst.msk [vmem:[#allocation4] sm:$0xff] %vm628, %v1376
          %1379 = vst.msk [vmem:[#allocation4 + $0x8] sm:$0xff] %vm628, %v1377
          %1380 = vset.pattern.permute.xlu0 1
          %1381 = vperm.xlu0 %1380, %v1346
          %v1382 = vpop.permute.xlu0 %1381
          %1383 = vset.pattern.permute.xlu0 1
          %1384 = vperm.xlu0 %1383, %v1347
          %v1385 = vpop.permute.xlu0 %1384
          %1386 = vset.pattern.permute.xlu0 1
          %1387 = vperm.xlu0 %1386, %v1348
          %v1388 = vpop.permute.xlu0 %1387
          %1389 = vset.pattern.permute.xlu0 1
          %1390 = vperm.xlu0 %1389, %v1349
          %v1391 = vpop.permute.xlu0 %1390
          %vm1392 = vcmp.eq.s32.totalorder %v1351, %v1382
          %vm1393 = vcmp.eq.s32.totalorder %v1351, %v1385
          %vm1394 = vcmp.eq.s32.totalorder %v1351, %v1388
          %vm1395 = vcmp.eq.s32.totalorder %v1351, %v1391
          %v1396 = vsel %vm1392, 1, 0
          %v1397 = vsel %vm1393, 1, 0
          %v1398 = vsel %vm1394, 1, 0
          %v1399 = vsel %vm1395, 1, 0
          %v1400 = vcvt.s32.f32 %v1396
          %v1401 = vcvt.s32.f32 %v1397
          %v1402 = vcvt.s32.f32 %v1398
          %v1403 = vcvt.s32.f32 %v1399
          %v1404 = vpack.c.bf16 %v1401, %v1400
          %v1405 = vpack.c.bf16 %v1403, %v1402
          %1406 = vst.msk [vmem:[#allocation5] sm:$0xff] %vm628, %v1404
          %1407 = vst.msk [vmem:[#allocation5 + $0x8] sm:$0xff] %vm628, %v1405
          %v1408 = vlaneseq
          %v1409 = vshrl.u32 %v1408, 7
          %v1410 = vadd.s32 %v1409, 8
          %v1411 = vld [vmem:[%s3] sm:$0x1]
          %v1412 = vlaneseq
          %v1413 = vshrl.u32 %v1412, 7
          %v1414 = vsub.s32 0, %v1413
          %v1415 = vrot.slane %v1411, %v1414
          %vm1416 = vcmp.eq.s32.totalorder %v1409, %v1415
          %vm1417 = vcmp.eq.s32.totalorder %v1410, %v1415
          %v1418 = vsel %vm1416, 1, 0
          %v1419 = vsel %vm1417, 1, 0
          %v1420 = vcvt.s32.f32 %v1418
          %v1421 = vcvt.s32.f32 %v1419
          %v1422 = vpack.c.bf16 %v1421, %v1420
          %1423 = vst.msk [vmem:[#allocation6] sm:$0xff] %vm720, %v1422
        $region92: #{epd_forward.1} parent=87 // pred_fallthru
          _
        %v1424 = vld [vmem:[#allocation2] sm:$0xff]
        %v1425 = vld [vmem:[#allocation2 + $0x8] sm:$0xff]
        %v1426 = vld [vmem:[#allocation3] sm:$0xff]
        %v1427 = vld [vmem:[#allocation3 + $0x8] sm:$0xff]
        %v1428 = vld [vmem:[#allocation3 + $0x10] sm:$0xff]
        %v1429 = vld [vmem:[#allocation3 + $0x18] sm:$0xff]
        %v1430 = vld [vmem:[%s600] sm:$0xff]
        %v1431 = vld [vmem:[%s600 + $0x8] sm:$0xff]
        %v1432 = vld [vmem:[%s600 + $0x10] sm:$0xff]
        %v1433 = vld [vmem:[%s600 + $0x18] sm:$0xff]
        %vm1434 = vcmask 261120
        %v1436 = vsel %vm1434, %v1424, 0
        %v1439 = vsel %vm1434, %v1425, 0
        %1441 = vmatprep.subr.mxu0 0.0
        %1442 = vmatpush1.msra.mxu0 %v1430
        %1443 = vmatprep.subr.mxu0 0.0
        %1444 = vmatpush1.msra.mxu0 %v1431
        %1445 = vmatprep.subr.mxu0 0.0
        %1446 = vmatpush1.msra.mxu0 %v1432
        %1447 = vmatprep.subr.mxu0 0.0
        %1448 = vmatpush1.msra.mxu0 %v1433
        %1449 = vmatprep.subr.mxu0 0.0
        %1450 = vmatpush1.msra.mxu0 0.0
        %1451 = vmatprep.subr.mxu0 0.0
        %1452 = vmatpush1.msra.mxu0 0.0
        %1453 = vmatprep.subr.mxu0 0.0
        %1454 = vmatpush1.msra.mxu0 0.0
        %1455 = vmatprep.subr.mxu0 0.0
        %1456 = vmatpush1.msra.mxu0 0.0
        %1457 = vmatprep.subr.mxu0 0.0
        %1458 = vmatpush1.msra.mxu0 0.0
        %1459 = vmatprep.subr.mxu0 0.0
        %1460 = vmatpush1.msra.mxu0 0.0
        %1461 = vmatprep.subr.mxu0 0.0
        %1462 = vmatpush1.msra.mxu0 0.0
        %1463 = vmatprep.subr.mxu0 0.0
        %1464 = vmatpush1.msra.mxu0 0.0
        %1465 = vmatprep.subr.mxu0 0.0
        %1466 = vmatpush1.msra.mxu0 0.0
        %1467 = vmatprep.subr.mxu0 0.0
        %1468 = vmatpush1.msra.mxu0 0.0
        %1469 = vmatprep.subr.mxu0 0.0
        %1470 = vmatpush1.msra.mxu0 0.0
        %1471 = vmatprep.subr.mxu0 0.0
        %1472 = vmatpush1.msra.mxu0 0.0
        %1473 = vmatprep.subr.mxu0 0.0
        %1474 = vmatpush1.msra.mxu0 0.0
        %1475 = vmatprep.subr.mxu0 0.0
        %1476 = vmatpush1.msra.mxu0 0.0
        %1477 = vmatprep.subr.mxu0 0.0
        %1478 = vmatpush1.msra.mxu0 0.0
        %1479 = vmatprep.subr.mxu0 0.0
        %1480 = vmatpush1.msra.mxu0 0.0
        %1481 = vmatprep.subr.mxu0 0.0
        %1482 = vmatpush1.msra.mxu0 0.0
        %1483 = vmatprep.subr.mxu0 0.0
        %1484 = vmatpush1.msra.mxu0 0.0
        %1485 = vmatprep.subr.mxu0 0.0
        %1486 = vmatpush1.msra.mxu0 0.0
        %1487 = vmatprep.subr.mxu0 0.0
        %1488 = vmatpush1.msra.mxu0 0.0
        %1489 = vmatprep.subr.mxu0 0.0
        %1490 = vmatpush1.msra.mxu0 0.0
        %1491 = vmatprep.subr.mxu0 0.0
        %1492 = vmatpush1.msra.mxu0 0.0
        %1493 = vmatprep.subr.mxu0 0.0
        %1494 = vmatpush1.msra.mxu0 0.0
        %1495 = vmatprep.subr.mxu0 0.0
        %1496 = vmatpush1.msra.mxu0 0.0
        %1497 = vmatprep.subr.mxu0 0.0
        %1498 = vmatpush1.msra.mxu0 0.0
        %1499 = vmatprep.subr.mxu0 0.0
        %1500 = vmatpush1.msra.mxu0 0.0
        %1501 = vmatprep.subr.mxu0 0.0
        %1502 = vmatpush1.msra.mxu0 0.0
        %1503 = vmatprep.subr.mxu0 0.0
        %1504 = vmatpush1.msra.mxu0 0.0
        %1505 = vmatprep.mubr.f32.mxu0 0.0
        %1506 = vmatmul.mubr.f32.gmra.mrb[0].mxu0 %v1436
        %v1507 = vpop.f32.mrb[0].mxu0
        %v1508 = vadd.f32 0.0, %v1507
        %v1509 = vpop.f32.mrb[0].mxu0
        %1510 = vmatprep.mubr.f32.mxu0 0.0
        %1511 = vmatmul.mubr.f32.gmra.mrb[0].mxu0 %v1439
        %v1512 = vpop.f32.mrb[0].mxu0
        %v1513 = vadd.f32 0.0, %v1512
        %v1514 = vpop.f32.mrb[0].mxu0
        %1515 = vdwg.mxu0
        %v1516 = vpack.c.bf16 %v1513, %v1508
        %s1517 = scalar_lea.vmem %s600, 32
        %v1518 = vld [vmem:[%s1517] sm:$0xff]
        %v1519 = vld [vmem:[%s1517 + $0x8] sm:$0xff]
        %v1520 = vld [vmem:[%s1517 + $0x10] sm:$0xff]
        %v1521 = vld [vmem:[%s1517 + $0x18] sm:$0xff]
        %1522 = vmatprep.subr.mxu0 0.0
        %1523 = vmatpush1.msra.mxu0 %v1518
        %1524 = vmatprep.subr.mxu0 0.0
        %1525 = vmatpush1.msra.mxu0 %v1519
        %1526 = vmatprep.subr.mxu0 0.0
        %1527 = vmatpush1.msra.mxu0 %v1520
        %1528 = vmatprep.subr.mxu0 0.0
        %1529 = vmatpush1.msra.mxu0 %v1521
        %1530 = vmatprep.subr.mxu0 0.0
        %1531 = vmatpush1.msra.mxu0 0.0
        %1532 = vmatprep.subr.mxu0 0.0
        %1533 = vmatpush1.msra.mxu0 0.0
        %1534 = vmatprep.subr.mxu0 0.0
        %1535 = vmatpush1.msra.mxu0 0.0
        %1536 = vmatprep.subr.mxu0 0.0
        %1537 = vmatpush1.msra.mxu0 0.0
        %1538 = vmatprep.subr.mxu0 0.0
        %1539 = vmatpush1.msra.mxu0 0.0
        %1540 = vmatprep.subr.mxu0 0.0
        %1541 = vmatpush1.msra.mxu0 0.0
        %1542 = vmatprep.subr.mxu0 0.0
        %1543 = vmatpush1.msra.mxu0 0.0
        %1544 = vmatprep.subr.mxu0 0.0
        %1545 = vmatpush1.msra.mxu0 0.0
        %1546 = vmatprep.subr.mxu0 0.0
        %1547 = vmatpush1.msra.mxu0 0.0
        %1548 = vmatprep.subr.mxu0 0.0
        %1549 = vmatpush1.msra.mxu0 0.0
        %1550 = vmatprep.subr.mxu0 0.0
        %1551 = vmatpush1.msra.mxu0 0.0
        %1552 = vmatprep.subr.mxu0 0.0
        %1553 = vmatpush1.msra.mxu0 0.0
        %1554 = vmatprep.subr.mxu0 0.0
        %1555 = vmatpush1.msra.mxu0 0.0
        %1556 = vmatprep.subr.mxu0 0.0
        %1557 = vmatpush1.msra.mxu0 0.0
        %1558 = vmatprep.subr.mxu0 0.0
        %1559 = vmatpush1.msra.mxu0 0.0
        %1560 = vmatprep.subr.mxu0 0.0
        %1561 = vmatpush1.msra.mxu0 0.0
        %1562 = vmatprep.subr.mxu0 0.0
        %1563 = vmatpush1.msra.mxu0 0.0
        %1564 = vmatprep.subr.mxu0 0.0
        %1565 = vmatpush1.msra.mxu0 0.0
        %1566 = vmatprep.subr.mxu0 0.0
        %1567 = vmatpush1.msra.mxu0 0.0
        %1568 = vmatprep.subr.mxu0 0.0
        %1569 = vmatpush1.msra.mxu0 0.0
        %1570 = vmatprep.subr.mxu0 0.0
        %1571 = vmatpush1.msra.mxu0 0.0
        %1572 = vmatprep.subr.mxu0 0.0
        %1573 = vmatpush1.msra.mxu0 0.0
        %1574 = vmatprep.subr.mxu0 0.0
        %1575 = vmatpush1.msra.mxu0 0.0
        %1576 = vmatprep.subr.mxu0 0.0
        %1577 = vmatpush1.msra.mxu0 0.0
        %1578 = vmatprep.subr.mxu0 0.0
        %1579 = vmatpush1.msra.mxu0 0.0
        %1580 = vmatprep.subr.mxu0 0.0
        %1581 = vmatpush1.msra.mxu0 0.0
        %1582 = vmatprep.subr.mxu0 0.0
        %1583 = vmatpush1.msra.mxu0 0.0
        %1584 = vmatprep.subr.mxu0 0.0
        %1585 = vmatpush1.msra.mxu0 0.0
        %1586 = vmatprep.mubr.f32.mxu0 0.0
        %1587 = vmatmul.mubr.f32.gmra.mrb[0].mxu0 %v1436
        %v1588 = vpop.f32.mrb[0].mxu0
        %v1589 = vadd.f32 0.0, %v1588
        %v1590 = vpop.f32.mrb[0].mxu0
        %1591 = vmatprep.mubr.f32.mxu0 0.0
        %1592 = vmatmul.mubr.f32.gmra.mrb[0].mxu0 %v1439
        %v1593 = vpop.f32.mrb[0].mxu0
        %v1594 = vadd.f32 0.0, %v1593
        %v1595 = vpop.f32.mrb[0].mxu0
        %1596 = vdwg.mxu0
        %v1597 = vpack.c.bf16 %v1594, %v1589
        %v1598 = vld [vmem:[#allocation5] sm:$0xff]
        %v1599 = vld [vmem:[#allocation5 + $0x8] sm:$0xff]
        %v1600 = vld [vmem:[#allocation4] sm:$0xff]
        %v1601 = vld [vmem:[#allocation4 + $0x8] sm:$0xff]
        %vm1602 = vcmask 130048
        %v1604 = vsel %vm1602, %v1600, 0
        %v1607 = vsel %vm1602, %v1601, 0
        %1609 = vmatprep.subr.bf16.mxu0 0
        %1610 = vmatpush1.bf16.msra.mxu0 %v1597
        %1611 = vmatprep.subr.bf16.mxu0 0
        %1612 = vmatpush1.bf16.msra.mxu0 0
        %1613 = vmatprep.subr.bf16.mxu0 0
        %1614 = vmatpush1.bf16.msra.mxu0 0
        %1615 = vmatprep.subr.bf16.mxu0 0
        %1616 = vmatpush1.bf16.msra.mxu0 0
        %1617 = vmatprep.subr.bf16.mxu0 0
        %1618 = vmatpush1.bf16.msra.mxu0 0
        %1619 = vmatprep.subr.bf16.mxu0 0
        %1620 = vmatpush1.bf16.msra.mxu0 0
        %1621 = vmatprep.subr.bf16.mxu0 0
        %1622 = vmatpush1.bf16.msra.mxu0 0
        %1623 = vmatprep.subr.bf16.mxu0 0
        %1624 = vmatpush1.bf16.msra.mxu0 0
        %1625 = vmatprep.subr.bf16.mxu0 0
        %1626 = vmatpush1.bf16.msra.mxu0 0
        %1627 = vmatprep.subr.bf16.mxu0 0
        %1628 = vmatpush1.bf16.msra.mxu0 0
        %1629 = vmatprep.subr.bf16.mxu0 0
        %1630 = vmatpush1.bf16.msra.mxu0 0
        %1631 = vmatprep.subr.bf16.mxu0 0
        %1632 = vmatpush1.bf16.msra.mxu0 0
        %1633 = vmatprep.subr.bf16.mxu0 0
        %1634 = vmatpush1.bf16.msra.mxu0 0
        %1635 = vmatprep.subr.bf16.mxu0 0
        %1636 = vmatpush1.bf16.msra.mxu0 0
        %1637 = vmatprep.subr.bf16.mxu0 0
        %1638 = vmatpush1.bf16.msra.mxu0 0
        %1639 = vmatprep.subr.bf16.mxu0 0
        %1640 = vmatpush1.bf16.msra.mxu0 0
        %1641 = vmatprep.mubr.bf16.mxu0 0
        %1642 = vmatmul.mubr.bf16.gmra.mrb[0].mxu0 %v1604
        %v1643 = vpop.f32.mrb[0].mxu0
        %v1644 = vadd.f32 0.0, %v1643
        %v1645 = vpop.f32.mrb[0].mxu0
        %v1646 = vpop.f32.mrb[0].mxu0
        %v1647 = vadd.f32 0.0, %v1646
        %v1648 = vpop.f32.mrb[0].mxu0
        %1649 = vmatprep.mubr.bf16.mxu0 0
        %1650 = vmatmul.mubr.bf16.gmra.mrb[0].mxu0 %v1607
        %v1651 = vpop.f32.mrb[0].mxu0
        %v1652 = vadd.f32 0.0, %v1651
        %v1653 = vpop.f32.mrb[0].mxu0
        %v1654 = vpop.f32.mrb[0].mxu0
        %v1655 = vadd.f32 0.0, %v1654
        %v1656 = vpop.f32.mrb[0].mxu0
        %1657 = vdwg.mxu0
        %v1659 = vsel %vm1602, %v1598, 0
        %v1662 = vsel %vm1602, %v1599, 0
        %1664 = vmatprep.subr.bf16.mxu0 0
        %1665 = vmatpush1.bf16.msra.mxu0 %v1516
        %1666 = vmatprep.subr.bf16.mxu0 0
        %1667 = vmatpush1.bf16.msra.mxu0 0
        %1668 = vmatprep.subr.bf16.mxu0 0
        %1669 = vmatpush1.bf16.msra.mxu0 0
        %1670 = vmatprep.subr.bf16.mxu0 0
        %1671 = vmatpush1.bf16.msra.mxu0 0
        %1672 = vmatprep.subr.bf16.mxu0 0
        %1673 = vmatpush1.bf16.msra.mxu0 0
        %1674 = vmatprep.subr.bf16.mxu0 0
        %1675 = vmatpush1.bf16.msra.mxu0 0
        %1676 = vmatprep.subr.bf16.mxu0 0
        %1677 = vmatpush1.bf16.msra.mxu0 0
        %1678 = vmatprep.subr.bf16.mxu0 0
        %1679 = vmatpush1.bf16.msra.mxu0 0
        %1680 = vmatprep.subr.bf16.mxu0 0
        %1681 = vmatpush1.bf16.msra.mxu0 0
        %1682 = vmatprep.subr.bf16.mxu0 0
        %1683 = vmatpush1.bf16.msra.mxu0 0
        %1684 = vmatprep.subr.bf16.mxu0 0
        %1685 = vmatpush1.bf16.msra.mxu0 0
        %1686 = vmatprep.subr.bf16.mxu0 0
        %1687 = vmatpush1.bf16.msra.mxu0 0
        %1688 = vmatprep.subr.bf16.mxu0 0
        %1689 = vmatpush1.bf16.msra.mxu0 0
        %1690 = vmatprep.subr.bf16.mxu0 0
        %1691 = vmatpush1.bf16.msra.mxu0 0
        %1692 = vmatprep.subr.bf16.mxu0 0
        %1693 = vmatpush1.bf16.msra.mxu0 0
        %1694 = vmatprep.subr.bf16.mxu0 0
        %1695 = vmatpush1.bf16.msra.mxu0 0
        %1696 = vmatprep.mubr.bf16.mxu0 0
        %1697 = vmatmul.mubr.bf16.gmra.mrb[0].mxu0 %v1659
        %v1698 = vpop.f32.mrb[0].mxu0
        %v1699 = vadd.f32 %v1644, %v1698
        %v1700 = vpop.f32.mrb[0].mxu0
        %v1701 = vpop.f32.mrb[0].mxu0
        %v1702 = vadd.f32 %v1647, %v1701
        %v1703 = vpop.f32.mrb[0].mxu0
        %1704 = vmatprep.mubr.bf16.mxu0 0
        %1705 = vmatmul.mubr.bf16.gmra.mrb[0].mxu0 %v1662
        %v1706 = vpop.f32.mrb[0].mxu0
        %v1707 = vadd.f32 %v1652, %v1706
        %v1708 = vpop.f32.mrb[0].mxu0
        %v1709 = vpop.f32.mrb[0].mxu0
        %v1710 = vadd.f32 %v1655, %v1709
        %v1711 = vpop.f32.mrb[0].mxu0
        %1712 = vdwg.mxu0
        %s1713 = scalar_lea.vmem %s600, 64
        %v1714 = vld [vmem:[%s1713] sm:$0xff]
        %v1715 = vld [vmem:[%s1713 + $0x8] sm:$0xff]
        %v1716 = vld [vmem:[%s1713 + $0x10] sm:$0xff]
        %v1717 = vld [vmem:[%s1713 + $0x18] sm:$0xff]
        %v1719 = vsel %vm1434, %v1426, 0
        %v1722 = vsel %vm1434, %v1427, 0
        %v1725 = vsel %vm1434, %v1428, 0
        %v1728 = vsel %vm1434, %v1429, 0
        %1730 = vmatprep.subr.mxu0 0.0
        %1731 = vmatpush1.msra.mxu0 %v1714
        %1732 = vmatprep.subr.mxu0 0.0
        %1733 = vmatpush1.msra.mxu0 %v1715
        %1734 = vmatprep.subr.mxu0 0.0
        %1735 = vmatpush1.msra.mxu0 %v1716
        %1736 = vmatprep.subr.mxu0 0.0
        %1737 = vmatpush1.msra.mxu0 %v1717
        %1738 = vmatprep.subr.mxu0 0.0
        %1739 = vmatpush1.msra.mxu0 0.0
        %1740 = vmatprep.subr.mxu0 0.0
        %1741 = vmatpush1.msra.mxu0 0.0
        %1742 = vmatprep.subr.mxu0 0.0
        %1743 = vmatpush1.msra.mxu0 0.0
        %1744 = vmatprep.subr.mxu0 0.0
        %1745 = vmatpush1.msra.mxu0 0.0
        %1746 = vmatprep.subr.mxu0 0.0
        %1747 = vmatpush1.msra.mxu0 0.0
        %1748 = vmatprep.subr.mxu0 0.0
        %1749 = vmatpush1.msra.mxu0 0.0
        %1750 = vmatprep.subr.mxu0 0.0
        %1751 = vmatpush1.msra.mxu0 0.0
        %1752 = vmatprep.subr.mxu0 0.0
        %1753 = vmatpush1.msra.mxu0 0.0
        %1754 = vmatprep.subr.mxu0 0.0
        %1755 = vmatpush1.msra.mxu0 0.0
        %1756 = vmatprep.subr.mxu0 0.0
        %1757 = vmatpush1.msra.mxu0 0.0
        %1758 = vmatprep.subr.mxu0 0.0
        %1759 = vmatpush1.msra.mxu0 0.0
        %1760 = vmatprep.subr.mxu0 0.0
        %1761 = vmatpush1.msra.mxu0 0.0
        %1762 = vmatprep.subr.mxu0 0.0
        %1763 = vmatpush1.msra.mxu0 0.0
        %1764 = vmatprep.subr.mxu0 0.0
        %1765 = vmatpush1.msra.mxu0 0.0
        %1766 = vmatprep.subr.mxu0 0.0
        %1767 = vmatpush1.msra.mxu0 0.0
        %1768 = vmatprep.subr.mxu0 0.0
        %1769 = vmatpush1.msra.mxu0 0.0
        %1770 = vmatprep.subr.mxu0 0.0
        %1771 = vmatpush1.msra.mxu0 0.0
        %1772 = vmatprep.subr.mxu0 0.0
        %1773 = vmatpush1.msra.mxu0 0.0
        %1774 = vmatprep.subr.mxu0 0.0
        %1775 = vmatpush1.msra.mxu0 0.0
        %1776 = vmatprep.subr.mxu0 0.0
        %1777 = vmatpush1.msra.mxu0 0.0
        %1778 = vmatprep.subr.mxu0 0.0
        %1779 = vmatpush1.msra.mxu0 0.0
        %1780 = vmatprep.subr.mxu0 0.0
        %1781 = vmatpush1.msra.mxu0 0.0
        %1782 = vmatprep.subr.mxu0 0.0
        %1783 = vmatpush1.msra.mxu0 0.0
        %1784 = vmatprep.subr.mxu0 0.0
        %1785 = vmatpush1.msra.mxu0 0.0
        %1786 = vmatprep.subr.mxu0 0.0
        %1787 = vmatpush1.msra.mxu0 0.0
        %1788 = vmatprep.subr.mxu0 0.0
        %1789 = vmatpush1.msra.mxu0 0.0
        %1790 = vmatprep.subr.mxu0 0.0
        %1791 = vmatpush1.msra.mxu0 0.0
        %1792 = vmatprep.subr.mxu0 0.0
        %1793 = vmatpush1.msra.mxu0 0.0
        %1794 = vmatprep.mubr.f32.mxu0 0.0
        %1795 = vmatmul.mubr.f32.gmra.mrb[0].mxu0 %v1719
        %v1796 = vpop.f32.mrb[0].mxu0
        %v1797 = vadd.f32 0.0, %v1796
        %v1798 = vpop.f32.mrb[0].mxu0
        %1799 = vmatprep.mubr.f32.mxu0 0.0
        %1800 = vmatmul.mubr.f32.gmra.mrb[0].mxu0 %v1722
        %v1801 = vpop.f32.mrb[0].mxu0
        %v1802 = vadd.f32 0.0, %v1801
        %v1803 = vpop.f32.mrb[0].mxu0
        %1804 = vmatprep.mubr.f32.mxu0 0.0
        %1805 = vmatmul.mubr.f32.gmra.mrb[0].mxu0 %v1725
        %v1806 = vpop.f32.mrb[0].mxu0
        %v1807 = vadd.f32 0.0, %v1806
        %v1808 = vpop.f32.mrb[0].mxu0
        %1809 = vmatprep.mubr.f32.mxu0 0.0
        %1810 = vmatmul.mubr.f32.gmra.mrb[0].mxu0 %v1728
        %v1811 = vpop.f32.mrb[0].mxu0
        %v1812 = vadd.f32 0.0, %v1811
        %v1813 = vpop.f32.mrb[0].mxu0
        %1814 = vdwg.mxu0
        %v1815 = vadd.f32 %v1699, %v1797
        %v1816 = vadd.f32 %v1702, %v1802
        %v1817 = vadd.f32 %v1707, %v1807
        %v1818 = vadd.f32 %v1710, %v1812
        %v1819 = vld [vmem:[%s604] sm:$0x1f]
        %v1820 = vlaneseq
        %v1821 = vshrl.u32 %v1820, 7
        %v1822 = vsub.s32 0, %v1821
        %v1823 = vrot.slane %v1819, %v1822
        %v1824 = vadd.f32 %v1815, %v1823
        %v1825 = vadd.f32 %v1816, %v1823
        %v1826 = vadd.f32 %v1817, %v1823
        %v1827 = vadd.f32 %v1818, %v1823
        %v1828 = vmax.f32 %v1824, 0.0
        %v1829 = vmax.f32 %v1825, 0.0
        %v1830 = vmax.f32 %v1826, 0.0
        %v1831 = vmax.f32 %v1827, 0.0
        %s1832 = scalar_lea.vmem %s600, 96
        %v1833 = vld [vmem:[%s1832] sm:$0xff]
        %v1834 = vld [vmem:[%s1832 + $0x8] sm:$0xff]
        %v1835 = vld [vmem:[%s1832 + $0x10] sm:$0xff]
        %v1836 = vld [vmem:[%s1832 + $0x18] sm:$0xff]
        %v1837 = vlaneseq
        %v1838 = vshrl.u32 %v1837, 7
        %v1839 = vsub.s32 1, %v1838
        %v1840 = vrot.slane %v1819, %v1839
        %v1842 = vsel %vm1434, %v1828, 0
        %v1845 = vsel %vm1434, %v1829, 0
        %v1848 = vsel %vm1434, %v1830, 0
        %v1851 = vsel %vm1434, %v1831, 0
        %1853 = vmatprep.subr.mxu0 0.0
        %1854 = vmatpush1.msra.mxu0 %v1833
        %1855 = vmatprep.subr.mxu0 0.0
        %1856 = vmatpush1.msra.mxu0 %v1834
        %1857 = vmatprep.subr.mxu0 0.0
        %1858 = vmatpush1.msra.mxu0 %v1835
        %1859 = vmatprep.subr.mxu0 0.0
        %1860 = vmatpush1.msra.mxu0 %v1836
        %1861 = vmatprep.subr.mxu0 0.0
        %1862 = vmatpush1.msra.mxu0 0.0
        %1863 = vmatprep.subr.mxu0 0.0
        %1864 = vmatpush1.msra.mxu0 0.0
        %1865 = vmatprep.subr.mxu0 0.0
        %1866 = vmatpush1.msra.mxu0 0.0
        %1867 = vmatprep.subr.mxu0 0.0
        %1868 = vmatpush1.msra.mxu0 0.0
        %1869 = vmatprep.subr.mxu0 0.0
        %1870 = vmatpush1.msra.mxu0 0.0
        %1871 = vmatprep.subr.mxu0 0.0
        %1872 = vmatpush1.msra.mxu0 0.0
        %1873 = vmatprep.subr.mxu0 0.0
        %1874 = vmatpush1.msra.mxu0 0.0
        %1875 = vmatprep.subr.mxu0 0.0
        %1876 = vmatpush1.msra.mxu0 0.0
        %1877 = vmatprep.subr.mxu0 0.0
        %1878 = vmatpush1.msra.mxu0 0.0
        %1879 = vmatprep.subr.mxu0 0.0
        %1880 = vmatpush1.msra.mxu0 0.0
        %1881 = vmatprep.subr.mxu0 0.0
        %1882 = vmatpush1.msra.mxu0 0.0
        %1883 = vmatprep.subr.mxu0 0.0
        %1884 = vmatpush1.msra.mxu0 0.0
        %1885 = vmatprep.subr.mxu0 0.0
        %1886 = vmatpush1.msra.mxu0 0.0
        %1887 = vmatprep.subr.mxu0 0.0
        %1888 = vmatpush1.msra.mxu0 0.0
        %1889 = vmatprep.subr.mxu0 0.0
        %1890 = vmatpush1.msra.mxu0 0.0
        %1891 = vmatprep.subr.mxu0 0.0
        %1892 = vmatpush1.msra.mxu0 0.0
        %1893 = vmatprep.subr.mxu0 0.0
        %1894 = vmatpush1.msra.mxu0 0.0
        %1895 = vmatprep.subr.mxu0 0.0
        %1896 = vmatpush1.msra.mxu0 0.0
        %1897 = vmatprep.subr.mxu0 0.0
        %1898 = vmatpush1.msra.mxu0 0.0
        %1899 = vmatprep.subr.mxu0 0.0
        %1900 = vmatpush1.msra.mxu0 0.0
        %1901 = vmatprep.subr.mxu0 0.0
        %1902 = vmatpush1.msra.mxu0 0.0
        %1903 = vmatprep.subr.mxu0 0.0
        %1904 = vmatpush1.msra.mxu0 0.0
        %1905 = vmatprep.subr.mxu0 0.0
        %1906 = vmatpush1.msra.mxu0 0.0
        %1907 = vmatprep.subr.mxu0 0.0
        %1908 = vmatpush1.msra.mxu0 0.0
        %1909 = vmatprep.subr.mxu0 0.0
        %1910 = vmatpush1.msra.mxu0 0.0
        %1911 = vmatprep.subr.mxu0 0.0
        %1912 = vmatpush1.msra.mxu0 0.0
        %1913 = vmatprep.subr.mxu0 0.0
        %1914 = vmatpush1.msra.mxu0 0.0
        %1915 = vmatprep.subr.mxu0 0.0
        %1916 = vmatpush1.msra.mxu0 0.0
        %1917 = vmatprep.mubr.f32.mxu0 0.0
        %1918 = vmatmul.mubr.f32.gmra.mrb[0].mxu0 %v1842
        %v1919 = vpop.f32.mrb[0].mxu0
        %v1920 = vadd.f32 %v1840, %v1919
        %v1921 = vpop.f32.mrb[0].mxu0
        %1922 = vmatprep.mubr.f32.mxu0 0.0
        %1923 = vmatmul.mubr.f32.gmra.mrb[0].mxu0 %v1845
        %v1924 = vpop.f32.mrb[0].mxu0
        %v1925 = vadd.f32 %v1840, %v1924
        %v1926 = vpop.f32.mrb[0].mxu0
        %1927 = vmatprep.mubr.f32.mxu0 0.0
        %1928 = vmatmul.mubr.f32.gmra.mrb[0].mxu0 %v1848
        %v1929 = vpop.f32.mrb[0].mxu0
        %v1930 = vadd.f32 %v1840, %v1929
        %v1931 = vpop.f32.mrb[0].mxu0
        %1932 = vmatprep.mubr.f32.mxu0 0.0
        %1933 = vmatmul.mubr.f32.gmra.mrb[0].mxu0 %v1851
        %v1934 = vpop.f32.mrb[0].mxu0
        %v1935 = vadd.f32 %v1840, %v1934
        %v1936 = vpop.f32.mrb[0].mxu0
        %1937 = vdwg.mxu0
        %v1938 = vmax.f32 %v1920, 0.0
        %v1939 = vmax.f32 %v1925, 0.0
        %v1940 = vmax.f32 %v1930, 0.0
        %v1941 = vmax.f32 %v1935, 0.0
        %s1942 = scalar_lea.vmem %s600, 128
        %v1943 = vld [vmem:[%s1942] sm:$0xff]
        %v1944 = vld [vmem:[%s1942 + $0x8] sm:$0xff]
        %v1945 = vld [vmem:[%s1942 + $0x10] sm:$0xff]
        %v1946 = vld [vmem:[%s1942 + $0x18] sm:$0xff]
        %v1947 = vlaneseq
        %v1948 = vshrl.u32 %v1947, 7
        %v1949 = vsub.s32 2, %v1948
        %v1950 = vrot.slane %v1819, %v1949
        %v1952 = vsel %vm1434, %v1938, 0
        %v1955 = vsel %vm1434, %v1939, 0
        %v1958 = vsel %vm1434, %v1940, 0
        %v1961 = vsel %vm1434, %v1941, 0
        %1963 = vmatprep.subr.mxu0 0.0
        %1964 = vmatpush1.msra.mxu0 %v1943
        %1965 = vmatprep.subr.mxu0 0.0
        %1966 = vmatpush1.msra.mxu0 %v1944
        %1967 = vmatprep.subr.mxu0 0.0
        %1968 = vmatpush1.msra.mxu0 %v1945
        %1969 = vmatprep.subr.mxu0 0.0
        %1970 = vmatpush1.msra.mxu0 %v1946
        %1971 = vmatprep.subr.mxu0 0.0
        %1972 = vmatpush1.msra.mxu0 0.0
        %1973 = vmatprep.subr.mxu0 0.0
        %1974 = vmatpush1.msra.mxu0 0.0
        %1975 = vmatprep.subr.mxu0 0.0
        %1976 = vmatpush1.msra.mxu0 0.0
        %1977 = vmatprep.subr.mxu0 0.0
        %1978 = vmatpush1.msra.mxu0 0.0
        %1979 = vmatprep.subr.mxu0 0.0
        %1980 = vmatpush1.msra.mxu0 0.0
        %1981 = vmatprep.subr.mxu0 0.0
        %1982 = vmatpush1.msra.mxu0 0.0
        %1983 = vmatprep.subr.mxu0 0.0
        %1984 = vmatpush1.msra.mxu0 0.0
        %1985 = vmatprep.subr.mxu0 0.0
        %1986 = vmatpush1.msra.mxu0 0.0
        %1987 = vmatprep.subr.mxu0 0.0
        %1988 = vmatpush1.msra.mxu0 0.0
        %1989 = vmatprep.subr.mxu0 0.0
        %1990 = vmatpush1.msra.mxu0 0.0
        %1991 = vmatprep.subr.mxu0 0.0
        %1992 = vmatpush1.msra.mxu0 0.0
        %1993 = vmatprep.subr.mxu0 0.0
        %1994 = vmatpush1.msra.mxu0 0.0
        %1995 = vmatprep.subr.mxu0 0.0
        %1996 = vmatpush1.msra.mxu0 0.0
        %1997 = vmatprep.subr.mxu0 0.0
        %1998 = vmatpush1.msra.mxu0 0.0
        %1999 = vmatprep.subr.mxu0 0.0
        %2000 = vmatpush1.msra.mxu0 0.0
        %2001 = vmatprep.subr.mxu0 0.0
        %2002 = vmatpush1.msra.mxu0 0.0
        %2003 = vmatprep.subr.mxu0 0.0
        %2004 = vmatpush1.msra.mxu0 0.0
        %2005 = vmatprep.subr.mxu0 0.0
        %2006 = vmatpush1.msra.mxu0 0.0
        %2007 = vmatprep.subr.mxu0 0.0
        %2008 = vmatpush1.msra.mxu0 0.0
        %2009 = vmatprep.subr.mxu0 0.0
        %2010 = vmatpush1.msra.mxu0 0.0
        %2011 = vmatprep.subr.mxu0 0.0
        %2012 = vmatpush1.msra.mxu0 0.0
        %2013 = vmatprep.subr.mxu0 0.0
        %2014 = vmatpush1.msra.mxu0 0.0
        %2015 = vmatprep.subr.mxu0 0.0
        %2016 = vmatpush1.msra.mxu0 0.0
        %2017 = vmatprep.subr.mxu0 0.0
        %2018 = vmatpush1.msra.mxu0 0.0
        %2019 = vmatprep.subr.mxu0 0.0
        %2020 = vmatpush1.msra.mxu0 0.0
        %2021 = vmatprep.subr.mxu0 0.0
        %2022 = vmatpush1.msra.mxu0 0.0
        %2023 = vmatprep.subr.mxu0 0.0
        %2024 = vmatpush1.msra.mxu0 0.0
        %2025 = vmatprep.subr.mxu0 0.0
        %2026 = vmatpush1.msra.mxu0 0.0
        %2027 = vmatprep.mubr.f32.mxu0 0.0
        %2028 = vmatmul.mubr.f32.gmra.mrb[0].mxu0 %v1952
        %v2029 = vpop.f32.mrb[0].mxu0
        %v2030 = vadd.f32 %v1950, %v2029
        %v2031 = vpop.f32.mrb[0].mxu0
        %2032 = vmatprep.mubr.f32.mxu0 0.0
        %2033 = vmatmul.mubr.f32.gmra.mrb[0].mxu0 %v1955
        %v2034 = vpop.f32.mrb[0].mxu0
        %v2035 = vadd.f32 %v1950, %v2034
        %v2036 = vpop.f32.mrb[0].mxu0
        %2037 = vmatprep.mubr.f32.mxu0 0.0
        %2038 = vmatmul.mubr.f32.gmra.mrb[0].mxu0 %v1958
        %v2039 = vpop.f32.mrb[0].mxu0
        %v2040 = vadd.f32 %v1950, %v2039
        %v2041 = vpop.f32.mrb[0].mxu0
        %2042 = vmatprep.mubr.f32.mxu0 0.0
        %2043 = vmatmul.mubr.f32.gmra.mrb[0].mxu0 %v1961
        %v2044 = vpop.f32.mrb[0].mxu0
        %v2045 = vadd.f32 %v1950, %v2044
        %v2046 = vpop.f32.mrb[0].mxu0
        %2047 = vdwg.mxu0
        %v2048 = vsel %vm1434, %v2030, 0.0
        %2049 = vadd.xlane.f32.xlu0 %v2048
        %v2050 = vpop.xlane.xlu0 %2049
        %v2051 = vsel %vm1434, %v2035, 0.0
        %2052 = vadd.xlane.f32.xlu0 %v2051
        %v2053 = vpop.xlane.xlu0 %2052
        %v2054 = vsel %vm1434, %v2040, 0.0
        %2055 = vadd.xlane.f32.xlu0 %v2054
        %v2056 = vpop.xlane.xlu0 %2055
        %v2057 = vsel %vm1434, %v2045, 0.0
        %2058 = vadd.xlane.f32.xlu0 %v2057
        %v2059 = vpop.xlane.xlu0 %2058
        %v2060 = vrcp.pop 32.0
        %v2061 = vmul.f32 %v2050, %v2060
        %v2062 = vmul.f32 %v2053, %v2060
        %v2063 = vmul.f32 %v2056, %v2060
        %v2064 = vmul.f32 %v2059, %v2060
        %v2065 = vmul.f32 %v2030, %v2030
        %v2066 = vmul.f32 %v2035, %v2035
        %v2067 = vmul.f32 %v2040, %v2040
        %v2068 = vmul.f32 %v2045, %v2045
        %v2069 = vsel %vm1434, %v2065, 0.0
        %2070 = vadd.xlane.f32.xlu0 %v2069
        %v2071 = vpop.xlane.xlu0 %2070
        %v2072 = vsel %vm1434, %v2066, 0.0
        %2073 = vadd.xlane.f32.xlu0 %v2072
        %v2074 = vpop.xlane.xlu0 %2073
        %v2075 = vsel %vm1434, %v2067, 0.0
        %2076 = vadd.xlane.f32.xlu0 %v2075
        %v2077 = vpop.xlane.xlu0 %2076
        %v2078 = vsel %vm1434, %v2068, 0.0
        %2079 = vadd.xlane.f32.xlu0 %v2078
        %v2080 = vpop.xlane.xlu0 %2079
        %v2081 = vmul.f32 %v2071, %v2060
        %v2082 = vmul.f32 %v2074, %v2060
        %v2083 = vmul.f32 %v2077, %v2060
        %v2084 = vmul.f32 %v2080, %v2060
        %v2085 = vmul.f32 %v2061, %v2061
        %v2086 = vmul.f32 %v2062, %v2062
        %v2087 = vmul.f32 %v2063, %v2063
        %v2088 = vmul.f32 %v2064, %v2064
        %v2089 = vsub.f32 %v2081, %v2085
        %v2090 = vsub.f32 %v2082, %v2086
        %v2091 = vsub.f32 %v2083, %v2087
        %v2092 = vsub.f32 %v2084, %v2088
        %v2093 = vsub.f32 %v2030, %v2061
        %v2094 = vsub.f32 %v2035, %v2062
        %v2095 = vsub.f32 %v2040, %v2063
        %v2096 = vsub.f32 %v2045, %v2064
        %v2097 = vadd.f32 %v2089, 1e-05
        %v2098 = vadd.f32 %v2090, 1e-05
        %v2099 = vadd.f32 %v2091, 1e-05
        %v2100 = vadd.f32 %v2092, 1e-05
        %v2101 = vrsqrt.pop %v2097
        %v2102 = vrsqrt.pop %v2098
        %v2103 = vrsqrt.pop %v2099
        %v2104 = vrsqrt.pop %v2100
        %v2105 = vmul.f32 %v2093, %v2101
        %v2106 = vmul.f32 %v2094, %v2102
        %v2107 = vmul.f32 %v2095, %v2103
        %v2108 = vmul.f32 %v2096, %v2104
        %v2109 = vlaneseq
        %v2110 = vshrl.u32 %v2109, 7
        %v2111 = vsub.s32 3, %v2110
        %v2112 = vrot.slane %v1819, %v2111
        %v2113 = vmul.f32 %v2105, %v2112
        %v2114 = vmul.f32 %v2106, %v2112
        %v2115 = vmul.f32 %v2107, %v2112
        %v2116 = vmul.f32 %v2108, %v2112
        %v2117 = vlaneseq
        %v2118 = vshrl.u32 %v2117, 7
        %v2119 = vsub.s32 4, %v2118
        %v2120 = vrot.slane %v1819, %v2119
        %v2121 = vadd.f32 %v2113, %v2120
        %v2122 = vadd.f32 %v2114, %v2120
        %v2123 = vadd.f32 %v2115, %v2120
        %v2124 = vadd.f32 %v2116, %v2120
        %v2125 = vld [vmem:[#allocation6] sm:$0xff]
        %v2126 = vpack.c.bf16 %v2122, %v2121
        %v2127 = vpack.c.bf16 %v2124, %v2123
        %v2129 = vsel %vm1434, %v2125, 0
        %2131 = vmatprep.subr.bf16.mxu0 0
        %2132 = vmatpush1.bf16.msra.mxu0 %v2126
        %2133 = vmatprep.subr.bf16.mxu0 0
        %2134 = vmatpush1.bf16.msra.mxu0 %v2127
        %2135 = vmatprep.subr.bf16.mxu0 0
        %2136 = vmatpush1.bf16.msra.mxu0 0
        %2137 = vmatprep.subr.bf16.mxu0 0
        %2138 = vmatpush1.bf16.msra.mxu0 0
        %2139 = vmatprep.subr.bf16.mxu0 0
        %2140 = vmatpush1.bf16.msra.mxu0 0
        %2141 = vmatprep.subr.bf16.mxu0 0
        %2142 = vmatpush1.bf16.msra.mxu0 0
        %2143 = vmatprep.subr.bf16.mxu0 0
        %2144 = vmatpush1.bf16.msra.mxu0 0
        %2145 = vmatprep.subr.bf16.mxu0 0
        %2146 = vmatpush1.bf16.msra.mxu0 0
        %2147 = vmatprep.subr.bf16.mxu0 0
        %2148 = vmatpush1.bf16.msra.mxu0 0
        %2149 = vmatprep.subr.bf16.mxu0 0
        %2150 = vmatpush1.bf16.msra.mxu0 0
        %2151 = vmatprep.subr.bf16.mxu0 0
        %2152 = vmatpush1.bf16.msra.mxu0 0
        %2153 = vmatprep.subr.bf16.mxu0 0
        %2154 = vmatpush1.bf16.msra.mxu0 0
        %2155 = vmatprep.subr.bf16.mxu0 0
        %2156 = vmatpush1.bf16.msra.mxu0 0
        %2157 = vmatprep.subr.bf16.mxu0 0
        %2158 = vmatpush1.bf16.msra.mxu0 0
        %2159 = vmatprep.subr.bf16.mxu0 0
        %2160 = vmatpush1.bf16.msra.mxu0 0
        %2161 = vmatprep.subr.bf16.mxu0 0
        %2162 = vmatpush1.bf16.msra.mxu0 0
        %2163 = vmatprep.mubr.bf16.mxu0 0
        %2164 = vmatmul.mubr.bf16.gmra.mrb[0].mxu0 %v2129
        %v2165 = vpop.f32.mrb[0].mxu0
        %v2166 = vadd.f32 0.0, %v2165
        %v2167 = vpop.f32.mrb[0].mxu0
        %v2168 = vpop.f32.mrb[0].mxu0
        %v2169 = vadd.f32 0.0, %v2168
        %v2170 = vpop.f32.mrb[0].mxu0
        %2171 = vdwg.mxu0
        %v2172 = vld [vmem:[%s609] sm:$0xff]
        %v2173 = vld [vmem:[%s609 + $0x8] sm:$0xff]
        %v2174 = vld [vmem:[%s609 + $0x10] sm:$0xff]
        %v2175 = vld [vmem:[%s609 + $0x18] sm:$0xff]
        %s2176 = scalar_lea.vmem %s609, 32
        %v2177 = vld [vmem:[%s2176] sm:$0xff]
        %v2178 = vld [vmem:[%s2176 + $0x8] sm:$0xff]
        %v2179 = vld [vmem:[%s2176 + $0x10] sm:$0xff]
        %v2180 = vld [vmem:[%s2176 + $0x18] sm:$0xff]
        %v2182 = vsel %vm1434, %v2166, 0
        %v2185 = vsel %vm1434, %v2169, 0
        %2187 = vmatprep.subr.mxu0 0.0
        %2188 = vmatpush1.msra.mxu0 %v2177
        %2189 = vmatprep.subr.mxu0 0.0
        %2190 = vmatpush1.msra.mxu0 %v2178
        %2191 = vmatprep.subr.mxu0 0.0
        %2192 = vmatpush1.msra.mxu0 %v2179
        %2193 = vmatprep.subr.mxu0 0.0
        %2194 = vmatpush1.msra.mxu0 %v2180
        %2195 = vmatprep.subr.mxu0 0.0
        %2196 = vmatpush1.msra.mxu0 0.0
        %2197 = vmatprep.subr.mxu0 0.0
        %2198 = vmatpush1.msra.mxu0 0.0
        %2199 = vmatprep.subr.mxu0 0.0
        %2200 = vmatpush1.msra.mxu0 0.0
        %2201 = vmatprep.subr.mxu0 0.0
        %2202 = vmatpush1.msra.mxu0 0.0
        %2203 = vmatprep.subr.mxu0 0.0
        %2204 = vmatpush1.msra.mxu0 0.0
        %2205 = vmatprep.subr.mxu0 0.0
        %2206 = vmatpush1.msra.mxu0 0.0
        %2207 = vmatprep.subr.mxu0 0.0
        %2208 = vmatpush1.msra.mxu0 0.0
        %2209 = vmatprep.subr.mxu0 0.0
        %2210 = vmatpush1.msra.mxu0 0.0
        %2211 = vmatprep.subr.mxu0 0.0
        %2212 = vmatpush1.msra.mxu0 0.0
        %2213 = vmatprep.subr.mxu0 0.0
        %2214 = vmatpush1.msra.mxu0 0.0
        %2215 = vmatprep.subr.mxu0 0.0
        %2216 = vmatpush1.msra.mxu0 0.0
        %2217 = vmatprep.subr.mxu0 0.0
        %2218 = vmatpush1.msra.mxu0 0.0
        %2219 = vmatprep.subr.mxu0 0.0
        %2220 = vmatpush1.msra.mxu0 0.0
        %2221 = vmatprep.subr.mxu0 0.0
        %2222 = vmatpush1.msra.mxu0 0.0
        %2223 = vmatprep.subr.mxu0 0.0
        %2224 = vmatpush1.msra.mxu0 0.0
        %2225 = vmatprep.subr.mxu0 0.0
        %2226 = vmatpush1.msra.mxu0 0.0
        %2227 = vmatprep.subr.mxu0 0.0
        %2228 = vmatpush1.msra.mxu0 0.0
        %2229 = vmatprep.subr.mxu0 0.0
        %2230 = vmatpush1.msra.mxu0 0.0
        %2231 = vmatprep.subr.mxu0 0.0
        %2232 = vmatpush1.msra.mxu0 0.0
        %2233 = vmatprep.subr.mxu0 0.0
        %2234 = vmatpush1.msra.mxu0 0.0
        %2235 = vmatprep.subr.mxu0 0.0
        %2236 = vmatpush1.msra.mxu0 0.0
        %2237 = vmatprep.subr.mxu0 0.0
        %2238 = vmatpush1.msra.mxu0 0.0
        %2239 = vmatprep.subr.mxu0 0.0
        %2240 = vmatpush1.msra.mxu0 0.0
        %2241 = vmatprep.subr.mxu0 0.0
        %2242 = vmatpush1.msra.mxu0 0.0
        %2243 = vmatprep.subr.mxu0 0.0
        %2244 = vmatpush1.msra.mxu0 0.0
        %2245 = vmatprep.subr.mxu0 0.0
        %2246 = vmatpush1.msra.mxu0 0.0
        %2247 = vmatprep.subr.mxu0 0.0
        %2248 = vmatpush1.msra.mxu0 0.0
        %2249 = vmatprep.subr.mxu0 0.0
        %2250 = vmatpush1.msra.mxu0 0.0
        %2251 = vmatprep.mubr.f32.mxu0 0.0
        %2252 = vmatmul.mubr.f32.gmra.mrb[0].mxu0 %v2182
        %v2253 = vpop.f32.mrb[0].mxu0
        %v2254 = vadd.f32 0.0, %v2253
        %v2255 = vpop.f32.mrb[0].mxu0
        %2256 = vmatprep.mubr.f32.mxu0 0.0
        %2257 = vmatmul.mubr.f32.gmra.mrb[0].mxu0 %v2185
        %v2258 = vpop.f32.mrb[0].mxu0
        %v2259 = vadd.f32 0.0, %v2258
        %v2260 = vpop.f32.mrb[0].mxu0
        %2261 = vdwg.mxu0
        %2262 = vmatprep.subr.mxu0 0.0
        %2263 = vmatpush1.msra.mxu0 %v2172
        %2264 = vmatprep.subr.mxu0 0.0
        %2265 = vmatpush1.msra.mxu0 %v2173
        %2266 = vmatprep.subr.mxu0 0.0
        %2267 = vmatpush1.msra.mxu0 %v2174
        %2268 = vmatprep.subr.mxu0 0.0
        %2269 = vmatpush1.msra.mxu0 %v2175
        %2270 = vmatprep.subr.mxu0 0.0
        %2271 = vmatpush1.msra.mxu0 0.0
        %2272 = vmatprep.subr.mxu0 0.0
        %2273 = vmatpush1.msra.mxu0 0.0
        %2274 = vmatprep.subr.mxu0 0.0
        %2275 = vmatpush1.msra.mxu0 0.0
        %2276 = vmatprep.subr.mxu0 0.0
        %2277 = vmatpush1.msra.mxu0 0.0
        %2278 = vmatprep.subr.mxu0 0.0
        %2279 = vmatpush1.msra.mxu0 0.0
        %2280 = vmatprep.subr.mxu0 0.0
        %2281 = vmatpush1.msra.mxu0 0.0
        %2282 = vmatprep.subr.mxu0 0.0
        %2283 = vmatpush1.msra.mxu0 0.0
        %2284 = vmatprep.subr.mxu0 0.0
        %2285 = vmatpush1.msra.mxu0 0.0
        %2286 = vmatprep.subr.mxu0 0.0
        %2287 = vmatpush1.msra.mxu0 0.0
        %2288 = vmatprep.subr.mxu0 0.0
        %2289 = vmatpush1.msra.mxu0 0.0
        %2290 = vmatprep.subr.mxu0 0.0
        %2291 = vmatpush1.msra.mxu0 0.0
        %2292 = vmatprep.subr.mxu0 0.0
        %2293 = vmatpush1.msra.mxu0 0.0
        %2294 = vmatprep.subr.mxu0 0.0
        %2295 = vmatpush1.msra.mxu0 0.0
        %2296 = vmatprep.subr.mxu0 0.0
        %2297 = vmatpush1.msra.mxu0 0.0
        %2298 = vmatprep.subr.mxu0 0.0
        %2299 = vmatpush1.msra.mxu0 0.0
        %2300 = vmatprep.subr.mxu0 0.0
        %2301 = vmatpush1.msra.mxu0 0.0
        %2302 = vmatprep.subr.mxu0 0.0
        %2303 = vmatpush1.msra.mxu0 0.0
        %2304 = vmatprep.subr.mxu0 0.0
        %2305 = vmatpush1.msra.mxu0 0.0
        %2306 = vmatprep.subr.mxu0 0.0
        %2307 = vmatpush1.msra.mxu0 0.0
        %2308 = vmatprep.subr.mxu0 0.0
        %2309 = vmatpush1.msra.mxu0 0.0
        %2310 = vmatprep.subr.mxu0 0.0
        %2311 = vmatpush1.msra.mxu0 0.0
        %2312 = vmatprep.subr.mxu0 0.0
        %2313 = vmatpush1.msra.mxu0 0.0
        %2314 = vmatprep.subr.mxu0 0.0
        %2315 = vmatpush1.msra.mxu0 0.0
        %2316 = vmatprep.subr.mxu0 0.0
        %2317 = vmatpush1.msra.mxu0 0.0
        %2318 = vmatprep.subr.mxu0 0.0
        %2319 = vmatpush1.msra.mxu0 0.0
        %2320 = vmatprep.subr.mxu0 0.0
        %2321 = vmatpush1.msra.mxu0 0.0
        %2322 = vmatprep.subr.mxu0 0.0
        %2323 = vmatpush1.msra.mxu0 0.0
        %2324 = vmatprep.subr.mxu0 0.0
        %2325 = vmatpush1.msra.mxu0 0.0
        %2326 = vmatprep.mubr.f32.mxu0 0.0
        %2327 = vmatmul.mubr.f32.gmra.mrb[0].mxu0 %v1436
        %v2328 = vpop.f32.mrb[0].mxu0
        %v2329 = vadd.f32 %v2254, %v2328
        %v2330 = vpop.f32.mrb[0].mxu0
        %2331 = vmatprep.mubr.f32.mxu0 0.0
        %2332 = vmatmul.mubr.f32.gmra.mrb[0].mxu0 %v1439
        %v2333 = vpop.f32.mrb[0].mxu0
        %v2334 = vadd.f32 %v2259, %v2333
        %v2335 = vpop.f32.mrb[0].mxu0
        %2336 = vdwg.mxu0
        %v2337 = vld [vmem:[%s613] sm:$0x1f]
        %v2338 = vlaneseq
        %v2339 = vshrl.u32 %v2338, 7
        %v2340 = vsub.s32 0, %v2339
        %v2341 = vrot.slane %v2337, %v2340
        %v2342 = vadd.f32 %v2329, %v2341
        %v2343 = vadd.f32 %v2334, %v2341
        %v2344 = vmax.f32 %v2342, 0.0
        %v2345 = vmax.f32 %v2343, 0.0
        %s2346 = scalar_lea.vmem %s609, 64
        %v2347 = vld [vmem:[%s2346] sm:$0xff]
        %v2348 = vld [vmem:[%s2346 + $0x8] sm:$0xff]
        %v2349 = vld [vmem:[%s2346 + $0x10] sm:$0xff]
        %v2350 = vld [vmem:[%s2346 + $0x18] sm:$0xff]
        %v2351 = vlaneseq
        %v2352 = vshrl.u32 %v2351, 7
        %v2353 = vsub.s32 1, %v2352
        %v2354 = vrot.slane %v2337, %v2353
        %v2356 = vsel %vm1434, %v2344, 0
        %v2359 = vsel %vm1434, %v2345, 0
        %2361 = vmatprep.subr.mxu0 0.0
        %2362 = vmatpush1.msra.mxu0 %v2347
        %2363 = vmatprep.subr.mxu0 0.0
        %2364 = vmatpush1.msra.mxu0 %v2348
        %2365 = vmatprep.subr.mxu0 0.0
        %2366 = vmatpush1.msra.mxu0 %v2349
        %2367 = vmatprep.subr.mxu0 0.0
        %2368 = vmatpush1.msra.mxu0 %v2350
        %2369 = vmatprep.subr.mxu0 0.0
        %2370 = vmatpush1.msra.mxu0 0.0
        %2371 = vmatprep.subr.mxu0 0.0
        %2372 = vmatpush1.msra.mxu0 0.0
        %2373 = vmatprep.subr.mxu0 0.0
        %2374 = vmatpush1.msra.mxu0 0.0
        %2375 = vmatprep.subr.mxu0 0.0
        %2376 = vmatpush1.msra.mxu0 0.0
        %2377 = vmatprep.subr.mxu0 0.0
        %2378 = vmatpush1.msra.mxu0 0.0
        %2379 = vmatprep.subr.mxu0 0.0
        %2380 = vmatpush1.msra.mxu0 0.0
        %2381 = vmatprep.subr.mxu0 0.0
        %2382 = vmatpush1.msra.mxu0 0.0
        %2383 = vmatprep.subr.mxu0 0.0
        %2384 = vmatpush1.msra.mxu0 0.0
        %2385 = vmatprep.subr.mxu0 0.0
        %2386 = vmatpush1.msra.mxu0 0.0
        %2387 = vmatprep.subr.mxu0 0.0
        %2388 = vmatpush1.msra.mxu0 0.0
        %2389 = vmatprep.subr.mxu0 0.0
        %2390 = vmatpush1.msra.mxu0 0.0
        %2391 = vmatprep.subr.mxu0 0.0
        %2392 = vmatpush1.msra.mxu0 0.0
        %2393 = vmatprep.subr.mxu0 0.0
        %2394 = vmatpush1.msra.mxu0 0.0
        %2395 = vmatprep.subr.mxu0 0.0
        %2396 = vmatpush1.msra.mxu0 0.0
        %2397 = vmatprep.subr.mxu0 0.0
        %2398 = vmatpush1.msra.mxu0 0.0
        %2399 = vmatprep.subr.mxu0 0.0
        %2400 = vmatpush1.msra.mxu0 0.0
        %2401 = vmatprep.subr.mxu0 0.0
        %2402 = vmatpush1.msra.mxu0 0.0
        %2403 = vmatprep.subr.mxu0 0.0
        %2404 = vmatpush1.msra.mxu0 0.0
        %2405 = vmatprep.subr.mxu0 0.0
        %2406 = vmatpush1.msra.mxu0 0.0
        %2407 = vmatprep.subr.mxu0 0.0
        %2408 = vmatpush1.msra.mxu0 0.0
        %2409 = vmatprep.subr.mxu0 0.0
        %2410 = vmatpush1.msra.mxu0 0.0
        %2411 = vmatprep.subr.mxu0 0.0
        %2412 = vmatpush1.msra.mxu0 0.0
        %2413 = vmatprep.subr.mxu0 0.0
        %2414 = vmatpush1.msra.mxu0 0.0
        %2415 = vmatprep.subr.mxu0 0.0
        %2416 = vmatpush1.msra.mxu0 0.0
        %2417 = vmatprep.subr.mxu0 0.0
        %2418 = vmatpush1.msra.mxu0 0.0
        %2419 = vmatprep.subr.mxu0 0.0
        %2420 = vmatpush1.msra.mxu0 0.0
        %2421 = vmatprep.subr.mxu0 0.0
        %2422 = vmatpush1.msra.mxu0 0.0
        %2423 = vmatprep.subr.mxu0 0.0
        %2424 = vmatpush1.msra.mxu0 0.0
        %2425 = vmatprep.mubr.f32.mxu0 0.0
        %2426 = vmatmul.mubr.f32.gmra.mrb[0].mxu0 %v2356
        %v2427 = vpop.f32.mrb[0].mxu0
        %v2428 = vadd.f32 %v2354, %v2427
        %v2429 = vpop.f32.mrb[0].mxu0
        %2430 = vmatprep.mubr.f32.mxu0 0.0
        %2431 = vmatmul.mubr.f32.gmra.mrb[0].mxu0 %v2359
        %v2432 = vpop.f32.mrb[0].mxu0
        %v2433 = vadd.f32 %v2354, %v2432
        %v2434 = vpop.f32.mrb[0].mxu0
        %2435 = vdwg.mxu0
        %v2436 = vmax.f32 %v2428, 0.0
        %v2437 = vmax.f32 %v2433, 0.0
        %s2438 = scalar_lea.vmem %s609, 96
        %v2439 = vld [vmem:[%s2438] sm:$0xff]
        %v2440 = vld [vmem:[%s2438 + $0x8] sm:$0xff]
        %v2441 = vld [vmem:[%s2438 + $0x10] sm:$0xff]
        %v2442 = vld [vmem:[%s2438 + $0x18] sm:$0xff]
        %v2443 = vlaneseq
        %v2444 = vshrl.u32 %v2443, 7
        %v2445 = vsub.s32 2, %v2444
        %v2446 = vrot.slane %v2337, %v2445
        %v2448 = vsel %vm1434, %v2436, 0
        %v2451 = vsel %vm1434, %v2437, 0
        %2453 = vmatprep.subr.mxu0 0.0
        %2454 = vmatpush1.msra.mxu0 %v2439
        %2455 = vmatprep.subr.mxu0 0.0
        %2456 = vmatpush1.msra.mxu0 %v2440
        %2457 = vmatprep.subr.mxu0 0.0
        %2458 = vmatpush1.msra.mxu0 %v2441
        %2459 = vmatprep.subr.mxu0 0.0
        %2460 = vmatpush1.msra.mxu0 %v2442
        %2461 = vmatprep.subr.mxu0 0.0
        %2462 = vmatpush1.msra.mxu0 0.0
        %2463 = vmatprep.subr.mxu0 0.0
        %2464 = vmatpush1.msra.mxu0 0.0
        %2465 = vmatprep.subr.mxu0 0.0
        %2466 = vmatpush1.msra.mxu0 0.0
        %2467 = vmatprep.subr.mxu0 0.0
        %2468 = vmatpush1.msra.mxu0 0.0
        %2469 = vmatprep.subr.mxu0 0.0
        %2470 = vmatpush1.msra.mxu0 0.0
        %2471 = vmatprep.subr.mxu0 0.0
        %2472 = vmatpush1.msra.mxu0 0.0
        %2473 = vmatprep.subr.mxu0 0.0
        %2474 = vmatpush1.msra.mxu0 0.0
        %2475 = vmatprep.subr.mxu0 0.0
        %2476 = vmatpush1.msra.mxu0 0.0
        %2477 = vmatprep.subr.mxu0 0.0
        %2478 = vmatpush1.msra.mxu0 0.0
        %2479 = vmatprep.subr.mxu0 0.0
        %2480 = vmatpush1.msra.mxu0 0.0
        %2481 = vmatprep.subr.mxu0 0.0
        %2482 = vmatpush1.msra.mxu0 0.0
        %2483 = vmatprep.subr.mxu0 0.0
        %2484 = vmatpush1.msra.mxu0 0.0
        %2485 = vmatprep.subr.mxu0 0.0
        %2486 = vmatpush1.msra.mxu0 0.0
        %2487 = vmatprep.subr.mxu0 0.0
        %2488 = vmatpush1.msra.mxu0 0.0
        %2489 = vmatprep.subr.mxu0 0.0
        %2490 = vmatpush1.msra.mxu0 0.0
        %2491 = vmatprep.subr.mxu0 0.0
        %2492 = vmatpush1.msra.mxu0 0.0
        %2493 = vmatprep.subr.mxu0 0.0
        %2494 = vmatpush1.msra.mxu0 0.0
        %2495 = vmatprep.subr.mxu0 0.0
        %2496 = vmatpush1.msra.mxu0 0.0
        %2497 = vmatprep.subr.mxu0 0.0
        %2498 = vmatpush1.msra.mxu0 0.0
        %2499 = vmatprep.subr.mxu0 0.0
        %2500 = vmatpush1.msra.mxu0 0.0
        %2501 = vmatprep.subr.mxu0 0.0
        %2502 = vmatpush1.msra.mxu0 0.0
        %2503 = vmatprep.subr.mxu0 0.0
        %2504 = vmatpush1.msra.mxu0 0.0
        %2505 = vmatprep.subr.mxu0 0.0
        %2506 = vmatpush1.msra.mxu0 0.0
        %2507 = vmatprep.subr.mxu0 0.0
        %2508 = vmatpush1.msra.mxu0 0.0
        %2509 = vmatprep.subr.mxu0 0.0
        %2510 = vmatpush1.msra.mxu0 0.0
        %2511 = vmatprep.subr.mxu0 0.0
        %2512 = vmatpush1.msra.mxu0 0.0
        %2513 = vmatprep.subr.mxu0 0.0
        %2514 = vmatpush1.msra.mxu0 0.0
        %2515 = vmatprep.subr.mxu0 0.0
        %2516 = vmatpush1.msra.mxu0 0.0
        %2517 = vmatprep.mubr.f32.mxu0 0.0
        %2518 = vmatmul.mubr.f32.gmra.mrb[0].mxu0 %v2448
        %v2519 = vpop.f32.mrb[0].mxu0
        %v2520 = vadd.f32 %v2446, %v2519
        %v2521 = vpop.f32.mrb[0].mxu0
        %2522 = vmatprep.mubr.f32.mxu0 0.0
        %2523 = vmatmul.mubr.f32.gmra.mrb[0].mxu0 %v2451
        %v2524 = vpop.f32.mrb[0].mxu0
        %v2525 = vadd.f32 %v2446, %v2524
        %v2526 = vpop.f32.mrb[0].mxu0
        %2527 = vdwg.mxu0
        %v2528 = vsel %vm1434, %v2520, 0.0
        %2529 = vadd.xlane.f32.xlu0 %v2528
        %v2530 = vpop.xlane.xlu0 %2529
        %v2531 = vsel %vm1434, %v2525, 0.0
        %2532 = vadd.xlane.f32.xlu0 %v2531
        %v2533 = vpop.xlane.xlu0 %2532
        %v2534 = vmul.f32 %v2530, %v2060
        %v2535 = vmul.f32 %v2533, %v2060
        %v2536 = vmul.f32 %v2520, %v2520
        %v2537 = vmul.f32 %v2525, %v2525
        %v2538 = vsel %vm1434, %v2536, 0.0
        %2539 = vadd.xlane.f32.xlu0 %v2538
        %v2540 = vpop.xlane.xlu0 %2539
        %v2541 = vsel %vm1434, %v2537, 0.0
        %2542 = vadd.xlane.f32.xlu0 %v2541
        %v2543 = vpop.xlane.xlu0 %2542
        %v2544 = vmul.f32 %v2540, %v2060
        %v2545 = vmul.f32 %v2543, %v2060
        %v2546 = vmul.f32 %v2534, %v2534
        %v2547 = vmul.f32 %v2535, %v2535
        %v2548 = vsub.f32 %v2544, %v2546
        %v2549 = vsub.f32 %v2545, %v2547
        %v2550 = vsub.f32 %v2520, %v2534
        %v2551 = vsub.f32 %v2525, %v2535
        %v2552 = vadd.f32 %v2548, 1e-05
        %v2553 = vadd.f32 %v2549, 1e-05
        %v2554 = vrsqrt.pop %v2552
        %v2555 = vrsqrt.pop %v2553
        %v2556 = vmul.f32 %v2550, %v2554
        %v2557 = vmul.f32 %v2551, %v2555
        %v2558 = vlaneseq
        %v2559 = vshrl.u32 %v2558, 7
        %v2560 = vsub.s32 3, %v2559
        %v2561 = vrot.slane %v2337, %v2560
        %v2562 = vmul.f32 %v2556, %v2561
        %v2563 = vmul.f32 %v2557, %v2561
        %v2564 = vlaneseq
        %v2565 = vshrl.u32 %v2564, 7
        %v2566 = vsub.s32 4, %v2565
        %v2567 = vrot.slane %v2337, %v2566
        %v2568 = vadd.f32 %v2562, %v2567
        %v2569 = vadd.f32 %v2563, %v2567
        %v2570 = vadd.f32 %v2568, %v1424
        %v2571 = vadd.f32 %v2569, %v1425
        %2572 = vst.msk [vmem:[#allocation2] sm:$0xff] %vm1434, %v2570
        %2573 = vst.msk [vmem:[#allocation2 + $0x8] sm:$0xff] %vm1434, %v2571
        %v2574 = vadd.f32 %v2121, %v1426
        %v2575 = vadd.f32 %v2122, %v1427
        %v2576 = vadd.f32 %v2123, %v1428
        %v2577 = vadd.f32 %v2124, %v1429
        %2578 = vst.msk [vmem:[#allocation3] sm:$0xff] %vm1434, %v2574
        %2579 = vst.msk [vmem:[#allocation3 + $0x8] sm:$0xff] %vm1434, %v2575
        %2580 = vst.msk [vmem:[#allocation3 + $0x10] sm:$0xff] %vm1434, %v2576
        %2581 = vst.msk [vmem:[#allocation3 + $0x18] sm:$0xff] %vm1434, %v2577
        %p2582 = scmp.eq.s32.totalorder %s31, 1
        // Predicated region
        $region93: #{epd_forward.1} parent=87 // pred_check
          %p2583 = pneg %p2582
        $region94: #{epd_forward.1} parent=87 // pred_check_branch
          %2585 = sbr.rel (%p2583) target = $region96
        $region95: #{epd_forward.1} parent=87 // pred_region
          %v2586 = vld [vmem:[#allocation2] sm:$0xff]
          %v2587 = vld [vmem:[#allocation2 + $0x8] sm:$0xff]
          %v2588 = vld [vmem:[%s14] sm:$0xff]
          %v2589 = vld [vmem:[%s14 + $0x8] sm:$0xff]
          %v2590 = vld [vmem:[%s14 + $0x10] sm:$0xff]
          %v2591 = vld [vmem:[%s14 + $0x18] sm:$0xff]
          %v2592 = vld [vmem:[%s16] sm:$0x7]
          %v2593 = vlaneseq
          %v2594 = vshrl.u32 %v2593, 7
          %v2595 = vsub.s32 0, %v2594
          %v2596 = vrot.slane %v2592, %v2595
          %v2598 = vsel %vm1434, %v2586, 0
          %v2601 = vsel %vm1434, %v2587, 0
          %2603 = vmatprep.subr.mxu0 0.0
          %2604 = vmatpush1.msra.mxu0 %v2588
          %2605 = vmatprep.subr.mxu0 0.0
          %2606 = vmatpush1.msra.mxu0 %v2589
          %2607 = vmatprep.subr.mxu0 0.0
          %2608 = vmatpush1.msra.mxu0 %v2590
          %2609 = vmatprep.subr.mxu0 0.0
          %2610 = vmatpush1.msra.mxu0 %v2591
          %2611 = vmatprep.subr.mxu0 0.0
          %2612 = vmatpush1.msra.mxu0 0.0
          %2613 = vmatprep.subr.mxu0 0.0
          %2614 = vmatpush1.msra.mxu0 0.0
          %2615 = vmatprep.subr.mxu0 0.0
          %2616 = vmatpush1.msra.mxu0 0.0
          %2617 = vmatprep.subr.mxu0 0.0
          %2618 = vmatpush1.msra.mxu0 0.0
          %2619 = vmatprep.subr.mxu0 0.0
          %2620 = vmatpush1.msra.mxu0 0.0
          %2621 = vmatprep.subr.mxu0 0.0
          %2622 = vmatpush1.msra.mxu0 0.0
          %2623 = vmatprep.subr.mxu0 0.0
          %2624 = vmatpush1.msra.mxu0 0.0
          %2625 = vmatprep.subr.mxu0 0.0
          %2626 = vmatpush1.msra.mxu0 0.0
          %2627 = vmatprep.subr.mxu0 0.0
          %2628 = vmatpush1.msra.mxu0 0.0
          %2629 = vmatprep.subr.mxu0 0.0
          %2630 = vmatpush1.msra.mxu0 0.0
          %2631 = vmatprep.subr.mxu0 0.0
          %2632 = vmatpush1.msra.mxu0 0.0
          %2633 = vmatprep.subr.mxu0 0.0
          %2634 = vmatpush1.msra.mxu0 0.0
          %2635 = vmatprep.subr.mxu0 0.0
          %2636 = vmatpush1.msra.mxu0 0.0
          %2637 = vmatprep.subr.mxu0 0.0
          %2638 = vmatpush1.msra.mxu0 0.0
          %2639 = vmatprep.subr.mxu0 0.0
          %2640 = vmatpush1.msra.mxu0 0.0
          %2641 = vmatprep.subr.mxu0 0.0
          %2642 = vmatpush1.msra.mxu0 0.0
          %2643 = vmatprep.subr.mxu0 0.0
          %2644 = vmatpush1.msra.mxu0 0.0
          %2645 = vmatprep.subr.mxu0 0.0
          %2646 = vmatpush1.msra.mxu0 0.0
          %2647 = vmatprep.subr.mxu0 0.0
          %2648 = vmatpush1.msra.mxu0 0.0
          %2649 = vmatprep.subr.mxu0 0.0
          %2650 = vmatpush1.msra.mxu0 0.0
          %2651 = vmatprep.subr.mxu0 0.0
          %2652 = vmatpush1.msra.mxu0 0.0
          %2653 = vmatprep.subr.mxu0 0.0
          %2654 = vmatpush1.msra.mxu0 0.0
          %2655 = vmatprep.subr.mxu0 0.0
          %2656 = vmatpush1.msra.mxu0 0.0
          %2657 = vmatprep.subr.mxu0 0.0
          %2658 = vmatpush1.msra.mxu0 0.0
          %2659 = vmatprep.subr.mxu0 0.0
          %2660 = vmatpush1.msra.mxu0 0.0
          %2661 = vmatprep.subr.mxu0 0.0
          %2662 = vmatpush1.msra.mxu0 0.0
          %2663 = vmatprep.subr.mxu0 0.0
          %2664 = vmatpush1.msra.mxu0 0.0
          %2665 = vmatprep.subr.mxu0 0.0
          %2666 = vmatpush1.msra.mxu0 0.0
          %2667 = vmatprep.mubr.f32.mxu0 0.0
          %2668 = vmatmul.mubr.f32.gmra.mrb[0].mxu0 %v2598
          %v2669 = vpop.f32.mrb[0].mxu0
          %v2670 = vadd.f32 %v2596, %v2669
          %v2671 = vpop.f32.mrb[0].mxu0
          %2672 = vmatprep.mubr.f32.mxu0 0.0
          %2673 = vmatmul.mubr.f32.gmra.mrb[0].mxu0 %v2601
          %v2674 = vpop.f32.mrb[0].mxu0
          %v2675 = vadd.f32 %v2596, %v2674
          %v2676 = vpop.f32.mrb[0].mxu0
          %2677 = vdwg.mxu0
          %v2678 = vmax.f32 %v2670, 0.0
          %v2679 = vmax.f32 %v2675, 0.0
          %v2680 = vld [vmem:[%s15] sm:$0xff]
          %v2681 = vld [vmem:[%s15 + $0x8] sm:$0xff]
          %v2682 = vld [vmem:[%s15 + $0x10] sm:$0xff]
          %v2683 = vld [vmem:[%s15 + $0x18] sm:$0xff]
          %v2684 = vld [vmem:[%s15 + $0x20] sm:$0xff]
          %v2685 = vld [vmem:[%s15 + $0x28] sm:$0xff]
          %v2686 = vld [vmem:[%s15 + $0x30] sm:$0xff]
          %v2687 = vld [vmem:[%s15 + $0x38] sm:$0xff]
          %v2688 = vld [vmem:[%s15 + $0x40] sm:$0xff]
          %v2689 = vld [vmem:[%s15 + $0x48] sm:$0xff]
          %v2690 = vld [vmem:[%s15 + $0x50] sm:$0xff]
          %v2691 = vld [vmem:[%s15 + $0x58] sm:$0xff]
          %v2692 = vld [vmem:[%s15 + $0x60] sm:$0xff]
          %v2693 = vld [vmem:[%s15 + $0x68] sm:$0xff]
          %v2694 = vld [vmem:[%s15 + $0x70] sm:$0xff]
          %v2695 = vld [vmem:[%s15 + $0x78] sm:$0xff]
          %v2696 = vlaneseq
          %v2697 = vshrl.u32 %v2696, 7
          %v2698 = vsub.s32 1, %v2697
          %v2699 = vrot.slane %v2592, %v2698
          %2700 = vmatprep.subr.mxu0 0.0
          %2701 = vmatpush1.msra.mxu0 %v2680
          %2702 = vmatprep.subr.mxu0 0.0
          %2703 = vmatpush1.msra.mxu0 %v2681
          %2704 = vmatprep.subr.mxu0 0.0
          %2705 = vmatpush1.msra.mxu0 %v2682
          %2706 = vmatprep.subr.mxu0 0.0
          %2707 = vmatpush1.msra.mxu0 %v2683
          %2708 = vmatprep.subr.mxu0 0.0
          %2709 = vmatpush1.msra.mxu0 %v2684
          %2710 = vmatprep.subr.mxu0 0.0
          %2711 = vmatpush1.msra.mxu0 %v2685
          %2712 = vmatprep.subr.mxu0 0.0
          %2713 = vmatpush1.msra.mxu0 %v2686
          %2714 = vmatprep.subr.mxu0 0.0
          %2715 = vmatpush1.msra.mxu0 %v2687
          %2716 = vmatprep.subr.mxu0 0.0
          %2717 = vmatpush1.msra.mxu0 %v2688
          %2718 = vmatprep.subr.mxu0 0.0
          %2719 = vmatpush1.msra.mxu0 %v2689
          %2720 = vmatprep.subr.mxu0 0.0
          %2721 = vmatpush1.msra.mxu0 %v2690
          %2722 = vmatprep.subr.mxu0 0.0
          %2723 = vmatpush1.msra.mxu0 %v2691
          %2724 = vmatprep.subr.mxu0 0.0
          %2725 = vmatpush1.msra.mxu0 %v2692
          %2726 = vmatprep.subr.mxu0 0.0
          %2727 = vmatpush1.msra.mxu0 %v2693
          %2728 = vmatprep.subr.mxu0 0.0
          %2729 = vmatpush1.msra.mxu0 %v2694
          %2730 = vmatprep.subr.mxu0 0.0
          %2731 = vmatpush1.msra.mxu0 %v2695
          %2732 = vmatprep.subr.mxu0 0.0
          %2733 = vmatpush1.msra.mxu0 0.0
          %2734 = vmatprep.subr.mxu0 0.0
          %2735 = vmatpush1.msra.mxu0 0.0
          %2736 = vmatprep.subr.mxu0 0.0
          %2737 = vmatpush1.msra.mxu0 0.0
          %2738 = vmatprep.subr.mxu0 0.0
          %2739 = vmatpush1.msra.mxu0 0.0
          %2740 = vmatprep.subr.mxu0 0.0
          %2741 = vmatpush1.msra.mxu0 0.0
          %2742 = vmatprep.subr.mxu0 0.0
          %2743 = vmatpush1.msra.mxu0 0.0
          %2744 = vmatprep.subr.mxu0 0.0
          %2745 = vmatpush1.msra.mxu0 0.0
          %2746 = vmatprep.subr.mxu0 0.0
          %2747 = vmatpush1.msra.mxu0 0.0
          %2748 = vmatprep.subr.mxu0 0.0
          %2749 = vmatpush1.msra.mxu0 0.0
          %2750 = vmatprep.subr.mxu0 0.0
          %2751 = vmatpush1.msra.mxu0 0.0
          %2752 = vmatprep.subr.mxu0 0.0
          %2753 = vmatpush1.msra.mxu0 0.0
          %2754 = vmatprep.subr.mxu0 0.0
          %2755 = vmatpush1.msra.mxu0 0.0
          %2756 = vmatprep.subr.mxu0 0.0
          %2757 = vmatpush1.msra.mxu0 0.0
          %2758 = vmatprep.subr.mxu0 0.0
          %2759 = vmatpush1.msra.mxu0 0.0
          %2760 = vmatprep.subr.mxu0 0.0
          %2761 = vmatpush1.msra.mxu0 0.0
          %2762 = vmatprep.subr.mxu0 0.0
          %2763 = vmatpush1.msra.mxu0 0.0
          %2764 = vmatprep.mubr.f32.mxu0 0.0
          %2765 = vmatmul.mubr.f32.gmra.mrb[0].mxu0 %v2678
          %v2766 = vpop.f32.mrb[0].mxu0
          %v2767 = vadd.f32 %v2699, %v2766
          %v2768 = vpop.f32.mrb[0].mxu0
          %2769 = vmatprep.mubr.f32.mxu0 0.0
          %2770 = vmatmul.mubr.f32.gmra.mrb[0].mxu0 %v2679
          %v2771 = vpop.f32.mrb[0].mxu0
          %v2772 = vadd.f32 %v2699, %v2771
          %v2773 = vpop.f32.mrb[0].mxu0
          %2774 = vdwg.mxu0
          %v2775 = vmax.f32 %v2767, 0.0
          %v2776 = vmax.f32 %v2772, 0.0
          %s2777 = scalar_lea.vmem %s15, 128
          %v2778 = vld [vmem:[%s2777] sm:$0xff]
          %v2779 = vld [vmem:[%s2777 + $0x8] sm:$0xff]
          %v2780 = vld [vmem:[%s2777 + $0x10] sm:$0xff]
          %v2781 = vld [vmem:[%s2777 + $0x18] sm:$0xff]
          %v2782 = vld [vmem:[%s2777 + $0x20] sm:$0xff]
          %v2783 = vld [vmem:[%s2777 + $0x28] sm:$0xff]
          %v2784 = vld [vmem:[%s2777 + $0x30] sm:$0xff]
          %v2785 = vld [vmem:[%s2777 + $0x38] sm:$0xff]
          %v2786 = vld [vmem:[%s2777 + $0x40] sm:$0xff]
          %v2787 = vld [vmem:[%s2777 + $0x48] sm:$0xff]
          %v2788 = vld [vmem:[%s2777 + $0x50] sm:$0xff]
          %v2789 = vld [vmem:[%s2777 + $0x58] sm:$0xff]
          %v2790 = vld [vmem:[%s2777 + $0x60] sm:$0xff]
          %v2791 = vld [vmem:[%s2777 + $0x68] sm:$0xff]
          %v2792 = vld [vmem:[%s2777 + $0x70] sm:$0xff]
          %v2793 = vld [vmem:[%s2777 + $0x78] sm:$0xff]
          %v2794 = vlaneseq
          %v2795 = vshrl.u32 %v2794, 7
          %v2796 = vsub.s32 2, %v2795
          %v2797 = vrot.slane %v2592, %v2796
          %2798 = vmatprep.subr.mxu0 0.0
          %2799 = vmatpush1.msra.mxu0 %v2778
          %2800 = vmatprep.subr.mxu0 0.0
          %2801 = vmatpush1.msra.mxu0 %v2779
          %2802 = vmatprep.subr.mxu0 0.0
          %2803 = vmatpush1.msra.mxu0 %v2780
          %2804 = vmatprep.subr.mxu0 0.0
          %2805 = vmatpush1.msra.mxu0 %v2781
          %2806 = vmatprep.subr.mxu0 0.0
          %2807 = vmatpush1.msra.mxu0 %v2782
          %2808 = vmatprep.subr.mxu0 0.0
          %2809 = vmatpush1.msra.mxu0 %v2783
          %2810 = vmatprep.subr.mxu0 0.0
          %2811 = vmatpush1.msra.mxu0 %v2784
          %2812 = vmatprep.subr.mxu0 0.0
          %2813 = vmatpush1.msra.mxu0 %v2785
          %2814 = vmatprep.subr.mxu0 0.0
          %2815 = vmatpush1.msra.mxu0 %v2786
          %2816 = vmatprep.subr.mxu0 0.0
          %2817 = vmatpush1.msra.mxu0 %v2787
          %2818 = vmatprep.subr.mxu0 0.0
          %2819 = vmatpush1.msra.mxu0 %v2788
          %2820 = vmatprep.subr.mxu0 0.0
          %2821 = vmatpush1.msra.mxu0 %v2789
          %2822 = vmatprep.subr.mxu0 0.0
          %2823 = vmatpush1.msra.mxu0 %v2790
          %2824 = vmatprep.subr.mxu0 0.0
          %2825 = vmatpush1.msra.mxu0 %v2791
          %2826 = vmatprep.subr.mxu0 0.0
          %2827 = vmatpush1.msra.mxu0 %v2792
          %2828 = vmatprep.subr.mxu0 0.0
          %2829 = vmatpush1.msra.mxu0 %v2793
          %2830 = vmatprep.subr.mxu0 0.0
          %2831 = vmatpush1.msra.mxu0 0.0
          %2832 = vmatprep.subr.mxu0 0.0
          %2833 = vmatpush1.msra.mxu0 0.0
          %2834 = vmatprep.subr.mxu0 0.0
          %2835 = vmatpush1.msra.mxu0 0.0
          %2836 = vmatprep.subr.mxu0 0.0
          %2837 = vmatpush1.msra.mxu0 0.0
          %2838 = vmatprep.subr.mxu0 0.0
          %2839 = vmatpush1.msra.mxu0 0.0
          %2840 = vmatprep.subr.mxu0 0.0
          %2841 = vmatpush1.msra.mxu0 0.0
          %2842 = vmatprep.subr.mxu0 0.0
          %2843 = vmatpush1.msra.mxu0 0.0
          %2844 = vmatprep.subr.mxu0 0.0
          %2845 = vmatpush1.msra.mxu0 0.0
          %2846 = vmatprep.subr.mxu0 0.0
          %2847 = vmatpush1.msra.mxu0 0.0
          %2848 = vmatprep.subr.mxu0 0.0
          %2849 = vmatpush1.msra.mxu0 0.0
          %2850 = vmatprep.subr.mxu0 0.0
          %2851 = vmatpush1.msra.mxu0 0.0
          %2852 = vmatprep.subr.mxu0 0.0
          %2853 = vmatpush1.msra.mxu0 0.0
          %2854 = vmatprep.subr.mxu0 0.0
          %2855 = vmatpush1.msra.mxu0 0.0
          %2856 = vmatprep.subr.mxu0 0.0
          %2857 = vmatpush1.msra.mxu0 0.0
          %2858 = vmatprep.subr.mxu0 0.0
          %2859 = vmatpush1.msra.mxu0 0.0
          %2860 = vmatprep.subr.mxu0 0.0
          %2861 = vmatpush1.msra.mxu0 0.0
          %2862 = vmatprep.mubr.f32.mxu0 0.0
          %2863 = vmatmul.mubr.f32.gmra.mrb[0].mxu0 %v2775
          %v2864 = vpop.f32.mrb[0].mxu0
          %v2865 = vadd.f32 %v2797, %v2864
          %v2866 = vpop.f32.mrb[0].mxu0
          %2867 = vmatprep.mubr.f32.mxu0 0.0
          %2868 = vmatmul.mubr.f32.gmra.mrb[0].mxu0 %v2776
          %v2869 = vpop.f32.mrb[0].mxu0
          %v2870 = vadd.f32 %v2797, %v2869
          %v2871 = vpop.f32.mrb[0].mxu0
          %2872 = vdwg.mxu0
          %2873 = vst [vmem:[%s17] sm:$0xff] %v2865
          %2874 = vst [vmem:[%s17 + $0x8] sm:$0xff] %v2870
          %v2875 = vld [vmem:[#allocation3] sm:$0xff]
          %v2876 = vld [vmem:[#allocation3 + $0x8] sm:$0xff]
          %v2877 = vld [vmem:[#allocation3 + $0x10] sm:$0xff]
          %v2878 = vld [vmem:[#allocation3 + $0x18] sm:$0xff]
          %2879 = vst.msk [vmem:[#allocation7] sm:$0xff] %vm1434, %v2875
          %2880 = vst.msk [vmem:[#allocation7 + $0x8] sm:$0xff] %vm1434, %v2876
          %2881 = vst.msk [vmem:[#allocation7 + $0x10] sm:$0xff] %vm1434, %v2877
          %2882 = vst.msk [vmem:[#allocation7 + $0x18] sm:$0xff] %vm1434, %v2878
        $region96: #{epd_forward.1} parent=87 // pred_fallthru
          _
        // Predicated region
        $region97: #{epd_forward.1} parent=87 // pred_check
          %p2883 = pneg %p421
        $region98: #{epd_forward.1} parent=87 // pred_check_branch
          %2885 = sbr.rel (%p2883) target = $region100
        $region99: #{epd_forward.1} parent=87 // pred_region
          _
        $region100: #{epd_forward.1} parent=87 // pred_fallthru
          _
        // Predicated region
        $region101: #{epd_forward.1} parent=87 // pred_check
          %p2886 = pneg %p442
        $region102: #{epd_forward.1} parent=87 // pred_check_branch
          %2888 = sbr.rel (%p2886) target = $region104
        $region103: #{epd_forward.1} parent=87 // pred_region
          %s2890 = ssub.s32 512, 512
          %2891 = vsyncadd [#allocation8], %s2890
          %s2892 = sshll.u32 [#allocation7], 4
          %s2893 = int_to_ptr.vmem [resolvable:$true] %s2892
          %2898 = dma.vmem_to_hbm [thread:$0]  %s2893, 512, %s18, [#allocation8], 128, 128, 8
        $region104: #{epd_forward.1} parent=87 // pred_fallthru
          _
        // Predicated region
        $region105: #{epd_forward.1} parent=87 // pred_check
          %p2899 = pneg %p421
        $region106: #{epd_forward.1} parent=87 // pred_check_branch
          %2901 = sbr.rel (%p2899) target = $region108
        $region107: #{epd_forward.1} parent=87 // pred_region
          _
        $region108: #{epd_forward.1} parent=87 // pred_fallthru
          _
        // Predicated region
        $region109: #{epd_forward.1} parent=87 // pred_check
          %p2902 = pneg %p442
        $region110: #{epd_forward.1} parent=87 // pred_check_branch
          %2904 = sbr.rel (%p2902) target = $region112
        $region111: #{epd_forward.1} parent=87 // pred_region
          %2905 = dma.done [#allocation8], 512
        $region112: #{epd_forward.1} parent=87 // pred_fallthru
          _
      $region88: #{epd_forward.1} parent=5 // pred_fallthru
        _
      %p2906 = scmp.le.s32.totalorder 2, %s26
      // Predicated region
      $region113: #{epd_forward.1} parent=5 // pred_check
        %p2907 = pneg %p2906
      $region114: #{epd_forward.1} parent=5 // pred_check_branch
        %2909 = sbr.rel (%p2907) target = $region116
      $region115: #{epd_forward.1} parent=5 // pred_region
        %s2910 = ssub.s32 %s26, 2
      $region116: #{epd_forward.1} parent=5 // pred_fallthru
        _
    $region6: #{epd_forward.1} parent=1 // loop_footer
      %s30 = sadd.s32 1, %s26
    $region7: #{epd_forward.1} parent=1 // loop_footer_branch
      %25 = sbr.rel target = $region3
    $region8: #{epd_forward.1} parent=1 // loop_exit
      _
    %2911 = vsyncpa [#allocation8], 1
    %s2912 = scalar_lea.sflag [#allocation8], 1
    %2913 = vsyncpa %s2912, 1

</llo_original>
